<compile_context>
chip_gen: v5e
topology: v5e:2x2
jax: 0.10.0
libtpu: 0.0.40
codegen_flags: <defaults>
</compile_context>

<pallas_src>
import functools

import jax
import jax.numpy as jnp
from jax.experimental import pallas as pl
from jax.experimental.pallas import tpu as pltpu


def _prefer_rank1_split():
    """Rank-1 split of the K=2H cat matmul pays off on 128x128 MXUs (<= v5);
    on 256-wide MXUs (v6e / v7x) the fused K=2H form is at least as fast and avoids
    per-block small-matmul weight reloads."""
    try:
        kind = jax.devices()[0].device_kind.lower()
    except Exception:
        return True
    if any(tag in kind for tag in ("v6", "v7", "7x", "trillium")):
        return False
    return True


def _resnet_pointnet_kernel(p_ref, cond_ref,
                            fcpos_w_ref, fcpos_b_ref,
                            fc0_w_ref, fc0_b_ref,
                            fc1_w_ref, fc1_b_ref,
                            sc_w_ref,
                            fcc_w_ref, fcc_b_ref,
                            out_ref,
                            *, compute_dtype, split_rank1):
    f32 = jnp.float32
    cdt = compute_dtype
    relu = lambda v: jnp.maximum(v, 0.0)

    Bt, T, D = p_ref.shape                 # batch-tile, points, point dim
    H = fcpos_w_ref.shape[1]
    nb = fc0_w_ref.shape[0]
    M = Bt * T

    def mm(x3, w):
        # (Bt, T, K) @ (K, N) -> (Bt, T, N), flattened so the MXU sees M = Bt*T rows.
        y = jnp.dot(x3.reshape(M, x3.shape[-1]).astype(cdt), w,
                    preferred_element_type=f32)
        return y.reshape(Bt, T, w.shape[-1])

    # ---- fc_pos -------------------------------------------------------------------
    pos_b = fcpos_b_ref[...].astype(f32)                        # (1, H)
    if D <= 8:
        # K=3 contraction: broadcast-FMAs on the VPU instead of a wasted MXU weight load.
        pf = p_ref[...].astype(f32)                             # (Bt, T, D)
        net = jnp.broadcast_to(pos_b, (Bt, T, H))
        for d in range(D):
            net = net + pf[:, :, d:d + 1] * fcpos_w_ref[d:d + 1, :].astype(f32)
    else:
        net = mm(p_ref[...].astype(f32), fcpos_w_ref[...].astype(cdt)) + pos_b

    # Per-batch-element "extra" row: cond for block 0, then the max-pooled features.
    ext = cond_ref[...].reshape(Bt, H).astype(f32)              # (Bt, H)

    for i in range(nb):                                         # static unroll (LLO visibility)
        b0 = fc0_b_ref[i].astype(f32)                           # (1, H)
        b1 = fc1_b_ref[i].astype(f32)                           # (1, H)

        if split_rank1:
            # Every row of `extra` equals `ext`, so its fc_0/shortcut contribution
            # collapses to a (Bt,H)@(H,H) product broadcast over T (bias folded in):
            # 2 of the 5 big (M,H)x(H,H) matmuls disappear on 128x128 MXUs.
            r0 = jnp.dot(relu(ext).astype(cdt), fc0_w_ref[i, H:, :],
                         preferred_element_type=f32) + b0
            rs = jnp.dot(ext.astype(cdt), sc_w_ref[i, H:, :],
                         preferred_element_type=f32)
            n0 = mm(relu(net), fc0_w_ref[i, :H, :]) + r0[:, None, :]   # fc_0(relu(cat))
            xs = mm(net, sc_w_ref[i, :H, :]) + rs[:, None, :]          # shortcut(cat)
        else:
            # Fused K=2H cat form for 256-wide MXUs (v6e/v7x): same vmatmul push count,
            # no poorly-amortized rank-1 matmuls / extra MXU weight loads per block.
            x = jnp.concatenate(
                [net, jnp.broadcast_to(ext[:, None, :], (Bt, T, H))], axis=-1)
            n0 = mm(relu(x), fc0_w_ref[i]) + b0                        # fc_0(relu(cat))
            xs = mm(x, sc_w_ref[i])                                    # shortcut(cat)

        dx = mm(relu(n0), fc1_w_ref[i]) + b1                           # fc_1(relu(n0))
        net = xs + dx                                                  # (Bt, T, H)
        ext = jnp.max(net, axis=1)                                     # (Bt, H) pooled

    # After the last block `ext` is the final max-pool over points.
    c = jnp.dot(relu(ext).astype(cdt), fcc_w_ref[...],
                preferred_element_type=f32) + fcc_b_ref[...].astype(f32)   # (Bt, C)
    out_ref[:, 0, :] = c


def init_params(key, dim=3, hidden_dim=128, c_dim=128, num_blocks=5, scale=0.05):
    H = hidden_dim
    ks = jax.random.split(key, 9)
    # NOTE: the PyTorch __init__ zero-inits fc_1.weight; we use random values here so the
    # numerical check exercises the full datapath (forward semantics identical).
    return {
        "fc_pos_w": scale * jax.random.normal(ks[0], (dim, H), jnp.float32),
        "fc_pos_b": scale * jax.random.normal(ks[1], (1, H), jnp.float32),
        "fc0_w": scale * jax.random.normal(ks[2], (num_blocks, 2 * H, H), jnp.float32),
        "fc0_b": scale * jax.random.normal(ks[3], (num_blocks, 1, H), jnp.float32),
        "fc1_w": scale * jax.random.normal(ks[4], (num_blocks, H, H), jnp.float32),
        "fc1_b": scale * jax.random.normal(ks[5], (num_blocks, 1, H), jnp.float32),
        "sc_w": scale * jax.random.normal(ks[6], (num_blocks, 2 * H, H), jnp.float32),
        "fc_c_w": scale * jax.random.normal(ks[7], (H, c_dim), jnp.float32),
        "fc_c_b": scale * jax.random.normal(ks[8], (1, c_dim), jnp.float32),
    }


def resnet_pointnet_cond(p, cond, params, *, compute_dtype=jnp.bfloat16,
                         batch_tile=None, split_rank1=None):
    """ResnetPointnetCond forward.  p: (B,T,dim), cond: (B,1,H) or (B,H) -> (B,c_dim)."""
    B, T, D = p.shape
    H = params["fc_pos_w"].shape[1]
    C = params["fc_c_w"].shape[1]
    nb = params["fc0_w"].shape[0]

    if cond.ndim == 2:
        cond = cond[:, None, :]
    cond = jnp.broadcast_to(cond, (B, 1, H))

    if split_rank1 is None:
        split_rank1 = _prefer_rank1_split()

    # ---- batch-tile selection -------------------------------------------------------
    # Target M = bt*T ~ 2048 rows per grid step (<10% per-step pipeline overhead), but
    # keep grid >= 2 when that doesn't shrink M below ~512 so v7x's two TCs both work.
    if batch_tile is None:
        target_m, min_m = 2048, 512
        bt = max(1, min(B, target_m // max(T, 1)))
        if B > 1 and pl.cdiv(B, bt) < 2:
            bt_half = pl.cdiv(B, 2)
            if bt_half * T >= min_m:
                bt = bt_half
    else:
        bt = max(1, int(min(batch_tile, B)))

    # Pad the batch up to a multiple of bt (instead of shrinking bt, possibly to 1).
    # Padded rows are independent of real rows and are sliced off the output.
    grid_b = pl.cdiv(B, bt)
    B_pad = grid_b * bt
    if B_pad != B:
        p = jnp.concatenate([p, jnp.zeros((B_pad - B, T, D), p.dtype)], axis=0)
        cond = jnp.concatenate([cond, jnp.zeros((B_pad - B, 1, H), cond.dtype)], axis=0)

    cdt = compute_dtype
    f32 = jnp.float32
    # Weight matrices cast to the MXU compute dtype once, outside the kernel (halves their
    # HBM->VMEM traffic); biases and the tiny fc_pos weights stay f32.
    operands = (
        p.astype(f32), cond.astype(f32),
        params["fc_pos_w"].astype(f32), params["fc_pos_b"].astype(f32),
        params["fc0_w"].astype(cdt), params["fc0_b"].astype(f32),
        params["fc1_w"].astype(cdt), params["fc1_b"].astype(f32),
        params["sc_w"].astype(cdt),
        params["fc_c_w"].astype(cdt), params["fc_c_b"].astype(f32),
    )

    def resident_spec(a):
        # Whole array, constant index map -> fetched once, kept VMEM-resident.
        # TODO(synk): at H >= 512 single-buffer these (pipeline_mode=pl.Buffered(1)) so
        # double-buffered weights don't blow v7x's 64 MiB VMEM.
        nd = a.ndim
        return pl.BlockSpec(a.shape, lambda g, _nd=nd: (0,) * _nd)

    in_specs = [
        pl.BlockSpec((bt, T, D), lambda g: (g, 0, 0)),      # p     (batch-tiled)
        pl.BlockSpec((bt, 1, H), lambda g: (g, 0, 0)),      # cond  (batch-tiled)
    ] + [resident_spec(a) for a in operands[2:]]

    # FLOP / byte estimate for XLA's scheduler.
    if split_rank1:
        blk_flops = nb * (3 * 2 * B_pad * T * H * H + 2 * 2 * B_pad * H * H)
    else:
        blk_flops = nb * (2 * 2 * B_pad * T * (2 * H) * H + 2 * B_pad * T * H * H)
    flops = 2 * B_pad * T * D * H + blk_flops + 2 * B_pad * H * C
    bytes_accessed = (sum(int(a.size) * a.dtype.itemsize for a in operands)
                      + B_pad * C * 4)
    cost = pl.CostEstimate(flops=flops, transcendentals=0,
                           bytes_accessed=bytes_accessed)

    # Raise the scoped-VMEM limit only if our estimate exceeds the known-good default
    # (only matters at H >= 512); never request more than fits v7x's 64 MiB physical.
    weight_vmem = 2 * sum(int(a.size) * a.dtype.itemsize for a in operands[2:])
    act_vmem = 8 * bt * T * max(H, C) * 4
    io_vmem = 2 * (bt * T * D * 4 + bt * H * 4 + bt * C * 4)
    vmem_needed = weight_vmem + act_vmem + io_vmem
    compiler_kwargs = dict(dimension_semantics=("parallel",))   # batch tiles independent
    if vmem_needed > 32 * 1024 * 1024:
        compiler_kwargs["vmem_limit_bytes"] = int(min(vmem_needed, 56 * 1024 * 1024))

    kernel = functools.partial(_resnet_pointnet_kernel,
                               compute_dtype=cdt, split_rank1=bool(split_rank1))

    out = pl.pallas_call(
        kernel,
        out_shape=jax.ShapeDtypeStruct((B_pad, 1, C), jnp.float32),
        grid=(grid_b,),
        in_specs=in_specs,
        out_specs=pl.BlockSpec((bt, 1, C), lambda g: (g, 0, 0)),
        compiler_params=pltpu.CompilerParams(**compiler_kwargs),
        cost_estimate=cost,
    )(*operands)
    return out[:B, 0, :]                                       # (B, c_dim)


def reference(p, cond, params, compute_dtype=jnp.float32):
    """Pure-JAX mirror of the PyTorch forward (matmuls at `compute_dtype` precision)."""
    f32 = jnp.float32
    relu = lambda v: jnp.maximum(v, 0.0)
    dot = lambda a, b: jnp.dot(a.astype(compute_dtype), b.astype(compute_dtype),
                               preferred_element_type=f32)
    H = params["fc_pos_w"].shape[1]
    net = p @ params["fc_pos_w"] + params["fc_pos_b"]          # (B, T, H), f32
    B, T, _ = net.shape
    if cond.ndim == 2:
        cond = cond[:, None, :]
    extra = jnp.broadcast_to(cond, (B, T, H))
    nb = params["fc0_w"].shape[0]
    for i in range(nb):
        h = jnp.concatenate([net, extra], axis=-1)             # (B, T, 2H)
        n0 = dot(relu(h), params["fc0_w"][i]) + params["fc0_b"][i]
        dx = dot(relu(n0), params["fc1_w"][i]) + params["fc1_b"][i]
        xs = dot(h, params["sc_w"][i])
        net = xs + dx
        if i + 1 < nb:
            pooled = jnp.max(net, axis=1, keepdims=True)
            extra = jnp.broadcast_to(pooled, (B, T, H))
    pooled = jnp.max(net, axis=1)                              # (B, H)
    return dot(relu(pooled), params["fc_c_w"]) + params["fc_c_b"]


if __name__ == "__main__":
    key = jax.random.PRNGKey(0)
    kp, kc, kw = jax.random.split(key, 3)

    # Small shapes consistent with the module (hidden_dim/c_dim default 128, dim=3).
    B, T, D, H, C = 2, 64, 3, 128, 128
    p = jax.random.normal(kp, (B, T, D), jnp.float32)
    cond = jax.random.normal(kc, (B, 1, H), jnp.float32)       # latent conditioning code
    params = init_params(kw, dim=D, hidden_dim=H, c_dim=C)

    ref_f32 = reference(p, cond, params, compute_dtype=jnp.float32)

    # 1) exact-f32 path, both block-matmul variants (rank-1 split and fused K=2H cat).
    for split in (True, False):
        out = jax.block_until_ready(
            resnet_pointnet_cond(p, cond, params, compute_dtype=jnp.float32,
                                 split_rank1=split))
        assert out.shape == (B, C), out.shape
        assert jnp.allclose(out, ref_f32, atol=1e-3, rtol=1e-3), \
            (split, float(jnp.max(jnp.abs(out - ref_f32))))

    # 2) default fast path (bf16 MXU operands, f32 accumulation, auto-selected variant)
    #    vs a precision-matched reference of the same forward pass.
    out_bf16 = jax.block_until_ready(resnet_pointnet_cond(p, cond, params))
    ref_bf16 = reference(p, cond, params, compute_dtype=jnp.bfloat16)
    assert out_bf16.shape == (B, C), out_bf16.shape
    assert jnp.allclose(out_bf16, ref_bf16, atol=5e-2, rtol=5e-2), \
        float(jnp.max(jnp.abs(out_bf16 - ref_bf16)))

    # 3) non-divisible batch with an explicit batch_tile: exercises the pad-and-slice
    #    path and a multi-step "parallel" grid.
    B2 = 3
    p2 = jax.random.normal(jax.random.PRNGKey(1), (B2, T, D), jnp.float32)
    cond2 = jax.random.normal(jax.random.PRNGKey(2), (B2, 1, H), jnp.float32)
    out2 = jax.block_until_ready(
        resnet_pointnet_cond(p2, cond2, params, compute_dtype=jnp.float32,
                             batch_tile=2))
    ref2 = reference(p2, cond2, params, compute_dtype=jnp.float32)
    assert out2.shape == (B2, C), out2.shape
    assert jnp.allclose(out2, ref2, atol=1e-3, rtol=1e-3), \
        float(jnp.max(jnp.abs(out2 - ref2)))

    print("KERNEL_OK")
</pallas_src>

<mosaic_0001>
module attributes {stable_mosaic.version = 11 : i64} {
  func.func @_resnet_pointnet_kernel(%arg0: i32, %arg1: memref<2x64x3xf32, #tpu.memory_space<vmem>>, %arg2: memref<2x1x128xf32, #tpu.memory_space<vmem>>, %arg3: memref<3x128xf32, #tpu.memory_space<vmem>>, %arg4: memref<1x128xf32, #tpu.memory_space<vmem>>, %arg5: memref<5x256x128xf32, #tpu.memory_space<vmem>>, %arg6: memref<5x1x128xf32, #tpu.memory_space<vmem>>, %arg7: memref<5x128x128xf32, #tpu.memory_space<vmem>>, %arg8: memref<5x1x128xf32, #tpu.memory_space<vmem>>, %arg9: memref<5x256x128xf32, #tpu.memory_space<vmem>>, %arg10: memref<128x128xf32, #tpu.memory_space<vmem>>, %arg11: memref<1x128xf32, #tpu.memory_space<vmem>>, %arg12: memref<2x1x128xf32, #tpu.memory_space<vmem>>) attributes {dimension_semantics = [#tpu.dimension_semantics<parallel>], iteration_bounds = array<i64: 1>, scalar_prefetch = 0 : i64, scratch_operands = 0 : i64, tpu.core_type = #tpu.core_type<tc>, window_params = [{transform_indices = @transform_0, window_bounds = array<i64: 2, 64, 3>}, {transform_indices = @transform_1, window_bounds = array<i64: 2, 1, 128>}, {pipeline_mode = #tpu.pipeline_mode<synchronous>, transform_indices = @transform_2, window_bounds = array<i64: 3, 128>}, {pipeline_mode = #tpu.pipeline_mode<synchronous>, transform_indices = @transform_3, window_bounds = array<i64: 1, 128>}, {pipeline_mode = #tpu.pipeline_mode<synchronous>, transform_indices = @transform_4, window_bounds = array<i64: 5, 256, 128>}, {pipeline_mode = #tpu.pipeline_mode<synchronous>, transform_indices = @transform_5, window_bounds = array<i64: 5, 1, 128>}, {pipeline_mode = #tpu.pipeline_mode<synchronous>, transform_indices = @transform_6, window_bounds = array<i64: 5, 128, 128>}, {pipeline_mode = #tpu.pipeline_mode<synchronous>, transform_indices = @transform_7, window_bounds = array<i64: 5, 1, 128>}, {pipeline_mode = #tpu.pipeline_mode<synchronous>, transform_indices = @transform_8, window_bounds = array<i64: 5, 256, 128>}, {pipeline_mode = #tpu.pipeline_mode<synchronous>, transform_indices = @transform_9, window_bounds = array<i64: 128, 128>}, {pipeline_mode = #tpu.pipeline_mode<synchronous>, transform_indices = @transform_10, window_bounds = array<i64: 1, 128>}, {transform_indices = @transform_11, window_bounds = array<i64: 2, 1, 128>}]} {
    %c0 = arith.constant 0 : index
    %c0_0 = arith.constant 0 : index
    %0 = vector.load %arg4[%c0, %c0_0] : memref<1x128xf32, #tpu.memory_space<vmem>>, vector<1x128xf32>
    %c0_1 = arith.constant 0 : index
    %c0_2 = arith.constant 0 : index
    %c0_3 = arith.constant 0 : index
    %1 = vector.load %arg1[%c0_1, %c0_2, %c0_3] : memref<2x64x3xf32, #tpu.memory_space<vmem>>, vector<2x64x3xf32>
    %2 = vector.shape_cast %0 : vector<1x128xf32> to vector<1x1x128xf32>
    %3 = vector.broadcast %2 : vector<1x1x128xf32> to vector<2x64x128xf32>
    %4 = vector.extract_strided_slice %1 {offsets = [0, 0, 0], sizes = [2, 64, 1], strides = [1, 1, 1]} : vector<2x64x3xf32> to vector<2x64x1xf32>
    %c0_4 = arith.constant 0 : index
    %c0_5 = arith.constant 0 : index
    %5 = vector.load %arg3[%c0_4, %c0_5] : memref<3x128xf32, #tpu.memory_space<vmem>>, vector<1x128xf32>
    %6 = vector.shape_cast %5 : vector<1x128xf32> to vector<1x1x128xf32>
    %7 = vector.broadcast %4 : vector<2x64x1xf32> to vector<2x64x128xf32>
    %8 = vector.broadcast %6 : vector<1x1x128xf32> to vector<2x64x128xf32>
    %9 = arith.mulf %7, %8 : vector<2x64x128xf32>
    %10 = arith.addf %3, %9 : vector<2x64x128xf32>
    %11 = vector.extract_strided_slice %1 {offsets = [0, 0, 1], sizes = [2, 64, 1], strides = [1, 1, 1]} : vector<2x64x3xf32> to vector<2x64x1xf32>
    %c1 = arith.constant 1 : index
    %c0_6 = arith.constant 0 : index
    %12 = vector.load %arg3[%c1, %c0_6] : memref<3x128xf32, #tpu.memory_space<vmem>>, vector<1x128xf32>
    %13 = vector.shape_cast %12 : vector<1x128xf32> to vector<1x1x128xf32>
    %14 = vector.broadcast %11 : vector<2x64x1xf32> to vector<2x64x128xf32>
    %15 = vector.broadcast %13 : vector<1x1x128xf32> to vector<2x64x128xf32>
    %16 = arith.mulf %14, %15 : vector<2x64x128xf32>
    %17 = arith.addf %10, %16 : vector<2x64x128xf32>
    %18 = vector.extract_strided_slice %1 {offsets = [0, 0, 2], sizes = [2, 64, 1], strides = [1, 1, 1]} : vector<2x64x3xf32> to vector<2x64x1xf32>
    %c2 = arith.constant 2 : index
    %c0_7 = arith.constant 0 : index
    %19 = vector.load %arg3[%c2, %c0_7] : memref<3x128xf32, #tpu.memory_space<vmem>>, vector<1x128xf32>
    %20 = vector.shape_cast %19 : vector<1x128xf32> to vector<1x1x128xf32>
    %21 = vector.broadcast %18 : vector<2x64x1xf32> to vector<2x64x128xf32>
    %22 = vector.broadcast %20 : vector<1x1x128xf32> to vector<2x64x128xf32>
    %23 = arith.mulf %21, %22 : vector<2x64x128xf32>
    %24 = arith.addf %17, %23 : vector<2x64x128xf32>
    %c0_8 = arith.constant 0 : index
    %c0_9 = arith.constant 0 : index
    %c0_10 = arith.constant 0 : index
    %25 = vector.load %arg2[%c0_8, %c0_9, %c0_10] : memref<2x1x128xf32, #tpu.memory_space<vmem>>, vector<2x1x128xf32>
    %26 = vector.shape_cast %25 : vector<2x1x128xf32> to vector<2x128xf32>
    %c0_11 = arith.constant 0 : index
    %c0_12 = arith.constant 0 : index
    %c0_13 = arith.constant 0 : index
    %27 = vector.load %arg6[%c0_11, %c0_12, %c0_13] : memref<5x1x128xf32, #tpu.memory_space<vmem>>, vector<1x1x128xf32>
    %28 = vector.shape_cast %27 : vector<1x1x128xf32> to vector<1x128xf32>
    %c0_14 = arith.constant 0 : index
    %c0_15 = arith.constant 0 : index
    %c0_16 = arith.constant 0 : index
    %29 = vector.load %arg8[%c0_14, %c0_15, %c0_16] : memref<5x1x128xf32, #tpu.memory_space<vmem>>, vector<1x1x128xf32>
    %30 = vector.shape_cast %29 : vector<1x1x128xf32> to vector<1x128xf32>
    %cst = arith.constant 0.000000e+00 : f32
    %31 = vector.broadcast %cst : f32 to vector<2x128xf32>
    %32 = arith.maximumf %26, %31 : vector<2x128xf32>
    %c0_17 = arith.constant 0 : index
    %c128 = arith.constant 128 : index
    %c0_18 = arith.constant 0 : index
    %33 = vector.load %arg5[%c0_17, %c128, %c0_18] : memref<5x256x128xf32, #tpu.memory_space<vmem>>, vector<1x128x128xf32>
    %34 = vector.shape_cast %33 : vector<1x128x128xf32> to vector<128x128xf32>
    %cst_19 = arith.constant dense<0.000000e+00> : vector<2x128xf32>
    %35 = tpu.matmul %32, %34, %cst_19 {dimension_numbers = #tpu.dot_dimension_numbers<[1], [0], [0], [1], [0, 0, 1, 1], [], []>} : vector<2x128xf32>, vector<128x128xf32>, vector<2x128xf32> -> vector<2x128xf32>
    %36 = vector.broadcast %28 : vector<1x128xf32> to vector<2x128xf32>
    %37 = arith.addf %35, %36 : vector<2x128xf32>
    %c0_20 = arith.constant 0 : index
    %c128_21 = arith.constant 128 : index
    %c0_22 = arith.constant 0 : index
    %38 = vector.load %arg9[%c0_20, %c128_21, %c0_22] : memref<5x256x128xf32, #tpu.memory_space<vmem>>, vector<1x128x128xf32>
    %39 = vector.shape_cast %38 : vector<1x128x128xf32> to vector<128x128xf32>
    %cst_23 = arith.constant dense<0.000000e+00> : vector<2x128xf32>
    %40 = tpu.matmul %26, %39, %cst_23 {dimension_numbers = #tpu.dot_dimension_numbers<[1], [0], [0], [1], [0, 0, 1, 1], [], []>} : vector<2x128xf32>, vector<128x128xf32>, vector<2x128xf32> -> vector<2x128xf32>
    %cst_24 = arith.constant 0.000000e+00 : f32
    %41 = vector.broadcast %cst_24 : f32 to vector<2x64x128xf32>
    %42 = arith.maximumf %24, %41 : vector<2x64x128xf32>
    %c0_25 = arith.constant 0 : index
    %c0_26 = arith.constant 0 : index
    %c0_27 = arith.constant 0 : index
    %43 = vector.load %arg5[%c0_25, %c0_26, %c0_27] : memref<5x256x128xf32, #tpu.memory_space<vmem>>, vector<1x128x128xf32>
    %44 = vector.shape_cast %43 : vector<1x128x128xf32> to vector<128x128xf32>
    %45 = vector.shape_cast %42 : vector<2x64x128xf32> to vector<128x128xf32>
    %cst_28 = arith.constant dense<0.000000e+00> : vector<128x128xf32>
    %46 = tpu.matmul %45, %44, %cst_28 {dimension_numbers = #tpu.dot_dimension_numbers<[1], [0], [0], [1], [0, 0, 1, 1], [], []>} : vector<128x128xf32>, vector<128x128xf32>, vector<128x128xf32> -> vector<128x128xf32>
    %47 = vector.shape_cast %46 : vector<128x128xf32> to vector<2x64x128xf32>
    %48 = vector.shape_cast %37 : vector<2x128xf32> to vector<2x1x128xf32>
    %49 = vector.broadcast %48 : vector<2x1x128xf32> to vector<2x64x128xf32>
    %50 = arith.addf %47, %49 : vector<2x64x128xf32>
    %c0_29 = arith.constant 0 : index
    %c0_30 = arith.constant 0 : index
    %c0_31 = arith.constant 0 : index
    %51 = vector.load %arg9[%c0_29, %c0_30, %c0_31] : memref<5x256x128xf32, #tpu.memory_space<vmem>>, vector<1x128x128xf32>
    %52 = vector.shape_cast %51 : vector<1x128x128xf32> to vector<128x128xf32>
    %53 = vector.shape_cast %24 : vector<2x64x128xf32> to vector<128x128xf32>
    %cst_32 = arith.constant dense<0.000000e+00> : vector<128x128xf32>
    %54 = tpu.matmul %53, %52, %cst_32 {dimension_numbers = #tpu.dot_dimension_numbers<[1], [0], [0], [1], [0, 0, 1, 1], [], []>} : vector<128x128xf32>, vector<128x128xf32>, vector<128x128xf32> -> vector<128x128xf32>
    %55 = vector.shape_cast %54 : vector<128x128xf32> to vector<2x64x128xf32>
    %56 = vector.shape_cast %40 : vector<2x128xf32> to vector<2x1x128xf32>
    %57 = vector.broadcast %56 : vector<2x1x128xf32> to vector<2x64x128xf32>
    %58 = arith.addf %55, %57 : vector<2x64x128xf32>
    %cst_33 = arith.constant 0.000000e+00 : f32
    %59 = vector.broadcast %cst_33 : f32 to vector<2x64x128xf32>
    %60 = arith.maximumf %50, %59 : vector<2x64x128xf32>
    %c0_34 = arith.constant 0 : index
    %c0_35 = arith.constant 0 : index
    %c0_36 = arith.constant 0 : index
    %61 = vector.load %arg7[%c0_34, %c0_35, %c0_36] : memref<5x128x128xf32, #tpu.memory_space<vmem>>, vector<1x128x128xf32>
    %62 = vector.shape_cast %61 : vector<1x128x128xf32> to vector<128x128xf32>
    %63 = vector.shape_cast %60 : vector<2x64x128xf32> to vector<128x128xf32>
    %cst_37 = arith.constant dense<0.000000e+00> : vector<128x128xf32>
    %64 = tpu.matmul %63, %62, %cst_37 {dimension_numbers = #tpu.dot_dimension_numbers<[1], [0], [0], [1], [0, 0, 1, 1], [], []>} : vector<128x128xf32>, vector<128x128xf32>, vector<128x128xf32> -> vector<128x128xf32>
    %65 = vector.shape_cast %64 : vector<128x128xf32> to vector<2x64x128xf32>
    %66 = vector.shape_cast %30 : vector<1x128xf32> to vector<1x1x128xf32>
    %67 = vector.broadcast %66 : vector<1x1x128xf32> to vector<2x64x128xf32>
    %68 = arith.addf %65, %67 : vector<2x64x128xf32>
    %69 = arith.addf %58, %68 : vector<2x64x128xf32>
    %cst_38 = arith.constant dense<0xFF800000> : vector<2x128xf32>
    %70 = vector.multi_reduction <maximumf>, %69, %cst_38 [1] : vector<2x64x128xf32> to vector<2x128xf32>
    %c1_39 = arith.constant 1 : index
    %c0_40 = arith.constant 0 : index
    %c0_41 = arith.constant 0 : index
    %71 = vector.load %arg6[%c1_39, %c0_40, %c0_41] : memref<5x1x128xf32, #tpu.memory_space<vmem>>, vector<1x1x128xf32>
    %72 = vector.shape_cast %71 : vector<1x1x128xf32> to vector<1x128xf32>
    %c1_42 = arith.constant 1 : index
    %c0_43 = arith.constant 0 : index
    %c0_44 = arith.constant 0 : index
    %73 = vector.load %arg8[%c1_42, %c0_43, %c0_44] : memref<5x1x128xf32, #tpu.memory_space<vmem>>, vector<1x1x128xf32>
    %74 = vector.shape_cast %73 : vector<1x1x128xf32> to vector<1x128xf32>
    %cst_45 = arith.constant 0.000000e+00 : f32
    %75 = vector.broadcast %cst_45 : f32 to vector<2x128xf32>
    %76 = arith.maximumf %70, %75 : vector<2x128xf32>
    %c1_46 = arith.constant 1 : index
    %c128_47 = arith.constant 128 : index
    %c0_48 = arith.constant 0 : index
    %77 = vector.load %arg5[%c1_46, %c128_47, %c0_48] : memref<5x256x128xf32, #tpu.memory_space<vmem>>, vector<1x128x128xf32>
    %78 = vector.shape_cast %77 : vector<1x128x128xf32> to vector<128x128xf32>
    %cst_49 = arith.constant dense<0.000000e+00> : vector<2x128xf32>
    %79 = tpu.matmul %76, %78, %cst_49 {dimension_numbers = #tpu.dot_dimension_numbers<[1], [0], [0], [1], [0, 0, 1, 1], [], []>} : vector<2x128xf32>, vector<128x128xf32>, vector<2x128xf32> -> vector<2x128xf32>
    %80 = vector.broadcast %72 : vector<1x128xf32> to vector<2x128xf32>
    %81 = arith.addf %79, %80 : vector<2x128xf32>
    %c1_50 = arith.constant 1 : index
    %c128_51 = arith.constant 128 : index
    %c0_52 = arith.constant 0 : index
    %82 = vector.load %arg9[%c1_50, %c128_51, %c0_52] : memref<5x256x128xf32, #tpu.memory_space<vmem>>, vector<1x128x128xf32>
    %83 = vector.shape_cast %82 : vector<1x128x128xf32> to vector<128x128xf32>
    %cst_53 = arith.constant dense<0.000000e+00> : vector<2x128xf32>
    %84 = tpu.matmul %70, %83, %cst_53 {dimension_numbers = #tpu.dot_dimension_numbers<[1], [0], [0], [1], [0, 0, 1, 1], [], []>} : vector<2x128xf32>, vector<128x128xf32>, vector<2x128xf32> -> vector<2x128xf32>
    %cst_54 = arith.constant 0.000000e+00 : f32
    %85 = vector.broadcast %cst_54 : f32 to vector<2x64x128xf32>
    %86 = arith.maximumf %69, %85 : vector<2x64x128xf32>
    %c1_55 = arith.constant 1 : index
    %c0_56 = arith.constant 0 : index
    %c0_57 = arith.constant 0 : index
    %87 = vector.load %arg5[%c1_55, %c0_56, %c0_57] : memref<5x256x128xf32, #tpu.memory_space<vmem>>, vector<1x128x128xf32>
    %88 = vector.shape_cast %87 : vector<1x128x128xf32> to vector<128x128xf32>
    %89 = vector.shape_cast %86 : vector<2x64x128xf32> to vector<128x128xf32>
    %cst_58 = arith.constant dense<0.000000e+00> : vector<128x128xf32>
    %90 = tpu.matmul %89, %88, %cst_58 {dimension_numbers = #tpu.dot_dimension_numbers<[1], [0], [0], [1], [0, 0, 1, 1], [], []>} : vector<128x128xf32>, vector<128x128xf32>, vector<128x128xf32> -> vector<128x128xf32>
    %91 = vector.shape_cast %90 : vector<128x128xf32> to vector<2x64x128xf32>
    %92 = vector.shape_cast %81 : vector<2x128xf32> to vector<2x1x128xf32>
    %93 = vector.broadcast %92 : vector<2x1x128xf32> to vector<2x64x128xf32>
    %94 = arith.addf %91, %93 : vector<2x64x128xf32>
    %c1_59 = arith.constant 1 : index
    %c0_60 = arith.constant 0 : index
    %c0_61 = arith.constant 0 : index
    %95 = vector.load %arg9[%c1_59, %c0_60, %c0_61] : memref<5x256x128xf32, #tpu.memory_space<vmem>>, vector<1x128x128xf32>
    %96 = vector.shape_cast %95 : vector<1x128x128xf32> to vector<128x128xf32>
    %97 = vector.shape_cast %69 : vector<2x64x128xf32> to vector<128x128xf32>
    %cst_62 = arith.constant dense<0.000000e+00> : vector<128x128xf32>
    %98 = tpu.matmul %97, %96, %cst_62 {dimension_numbers = #tpu.dot_dimension_numbers<[1], [0], [0], [1], [0, 0, 1, 1], [], []>} : vector<128x128xf32>, vector<128x128xf32>, vector<128x128xf32> -> vector<128x128xf32>
    %99 = vector.shape_cast %98 : vector<128x128xf32> to vector<2x64x128xf32>
    %100 = vector.shape_cast %84 : vector<2x128xf32> to vector<2x1x128xf32>
    %101 = vector.broadcast %100 : vector<2x1x128xf32> to vector<2x64x128xf32>
    %102 = arith.addf %99, %101 : vector<2x64x128xf32>
    %cst_63 = arith.constant 0.000000e+00 : f32
    %103 = vector.broadcast %cst_63 : f32 to vector<2x64x128xf32>
    %104 = arith.maximumf %94, %103 : vector<2x64x128xf32>
    %c1_64 = arith.constant 1 : index
    %c0_65 = arith.constant 0 : index
    %c0_66 = arith.constant 0 : index
    %105 = vector.load %arg7[%c1_64, %c0_65, %c0_66] : memref<5x128x128xf32, #tpu.memory_space<vmem>>, vector<1x128x128xf32>
    %106 = vector.shape_cast %105 : vector<1x128x128xf32> to vector<128x128xf32>
    %107 = vector.shape_cast %104 : vector<2x64x128xf32> to vector<128x128xf32>
    %cst_67 = arith.constant dense<0.000000e+00> : vector<128x128xf32>
    %108 = tpu.matmul %107, %106, %cst_67 {dimension_numbers = #tpu.dot_dimension_numbers<[1], [0], [0], [1], [0, 0, 1, 1], [], []>} : vector<128x128xf32>, vector<128x128xf32>, vector<128x128xf32> -> vector<128x128xf32>
    %109 = vector.shape_cast %108 : vector<128x128xf32> to vector<2x64x128xf32>
    %110 = vector.shape_cast %74 : vector<1x128xf32> to vector<1x1x128xf32>
    %111 = vector.broadcast %110 : vector<1x1x128xf32> to vector<2x64x128xf32>
    %112 = arith.addf %109, %111 : vector<2x64x128xf32>
    %113 = arith.addf %102, %112 : vector<2x64x128xf32>
    %cst_68 = arith.constant dense<0xFF800000> : vector<2x128xf32>
    %114 = vector.multi_reduction <maximumf>, %113, %cst_68 [1] : vector<2x64x128xf32> to vector<2x128xf32>
    %c2_69 = arith.constant 2 : index
    %c0_70 = arith.constant 0 : index
    %c0_71 = arith.constant 0 : index
    %115 = vector.load %arg6[%c2_69, %c0_70, %c0_71] : memref<5x1x128xf32, #tpu.memory_space<vmem>>, vector<1x1x128xf32>
    %116 = vector.shape_cast %115 : vector<1x1x128xf32> to vector<1x128xf32>
    %c2_72 = arith.constant 2 : index
    %c0_73 = arith.constant 0 : index
    %c0_74 = arith.constant 0 : index
    %117 = vector.load %arg8[%c2_72, %c0_73, %c0_74] : memref<5x1x128xf32, #tpu.memory_space<vmem>>, vector<1x1x128xf32>
    %118 = vector.shape_cast %117 : vector<1x1x128xf32> to vector<1x128xf32>
    %cst_75 = arith.constant 0.000000e+00 : f32
    %119 = vector.broadcast %cst_75 : f32 to vector<2x128xf32>
    %120 = arith.maximumf %114, %119 : vector<2x128xf32>
    %c2_76 = arith.constant 2 : index
    %c128_77 = arith.constant 128 : index
    %c0_78 = arith.constant 0 : index
    %121 = vector.load %arg5[%c2_76, %c128_77, %c0_78] : memref<5x256x128xf32, #tpu.memory_space<vmem>>, vector<1x128x128xf32>
    %122 = vector.shape_cast %121 : vector<1x128x128xf32> to vector<128x128xf32>
    %cst_79 = arith.constant dense<0.000000e+00> : vector<2x128xf32>
    %123 = tpu.matmul %120, %122, %cst_79 {dimension_numbers = #tpu.dot_dimension_numbers<[1], [0], [0], [1], [0, 0, 1, 1], [], []>} : vector<2x128xf32>, vector<128x128xf32>, vector<2x128xf32> -> vector<2x128xf32>
    %124 = vector.broadcast %116 : vector<1x128xf32> to vector<2x128xf32>
    %125 = arith.addf %123, %124 : vector<2x128xf32>
    %c2_80 = arith.constant 2 : index
    %c128_81 = arith.constant 128 : index
    %c0_82 = arith.constant 0 : index
    %126 = vector.load %arg9[%c2_80, %c128_81, %c0_82] : memref<5x256x128xf32, #tpu.memory_space<vmem>>, vector<1x128x128xf32>
    %127 = vector.shape_cast %126 : vector<1x128x128xf32> to vector<128x128xf32>
    %cst_83 = arith.constant dense<0.000000e+00> : vector<2x128xf32>
    %128 = tpu.matmul %114, %127, %cst_83 {dimension_numbers = #tpu.dot_dimension_numbers<[1], [0], [0], [1], [0, 0, 1, 1], [], []>} : vector<2x128xf32>, vector<128x128xf32>, vector<2x128xf32> -> vector<2x128xf32>
    %cst_84 = arith.constant 0.000000e+00 : f32
    %129 = vector.broadcast %cst_84 : f32 to vector<2x64x128xf32>
    %130 = arith.maximumf %113, %129 : vector<2x64x128xf32>
    %c2_85 = arith.constant 2 : index
    %c0_86 = arith.constant 0 : index
    %c0_87 = arith.constant 0 : index
    %131 = vector.load %arg5[%c2_85, %c0_86, %c0_87] : memref<5x256x128xf32, #tpu.memory_space<vmem>>, vector<1x128x128xf32>
    %132 = vector.shape_cast %131 : vector<1x128x128xf32> to vector<128x128xf32>
    %133 = vector.shape_cast %130 : vector<2x64x128xf32> to vector<128x128xf32>
    %cst_88 = arith.constant dense<0.000000e+00> : vector<128x128xf32>
    %134 = tpu.matmul %133, %132, %cst_88 {dimension_numbers = #tpu.dot_dimension_numbers<[1], [0], [0], [1], [0, 0, 1, 1], [], []>} : vector<128x128xf32>, vector<128x128xf32>, vector<128x128xf32> -> vector<128x128xf32>
    %135 = vector.shape_cast %134 : vector<128x128xf32> to vector<2x64x128xf32>
    %136 = vector.shape_cast %125 : vector<2x128xf32> to vector<2x1x128xf32>
    %137 = vector.broadcast %136 : vector<2x1x128xf32> to vector<2x64x128xf32>
    %138 = arith.addf %135, %137 : vector<2x64x128xf32>
    %c2_89 = arith.constant 2 : index
    %c0_90 = arith.constant 0 : index
    %c0_91 = arith.constant 0 : index
    %139 = vector.load %arg9[%c2_89, %c0_90, %c0_91] : memref<5x256x128xf32, #tpu.memory_space<vmem>>, vector<1x128x128xf32>
    %140 = vector.shape_cast %139 : vector<1x128x128xf32> to vector<128x128xf32>
    %141 = vector.shape_cast %113 : vector<2x64x128xf32> to vector<128x128xf32>
    %cst_92 = arith.constant dense<0.000000e+00> : vector<128x128xf32>
    %142 = tpu.matmul %141, %140, %cst_92 {dimension_numbers = #tpu.dot_dimension_numbers<[1], [0], [0], [1], [0, 0, 1, 1], [], []>} : vector<128x128xf32>, vector<128x128xf32>, vector<128x128xf32> -> vector<128x128xf32>
    %143 = vector.shape_cast %142 : vector<128x128xf32> to vector<2x64x128xf32>
    %144 = vector.shape_cast %128 : vector<2x128xf32> to vector<2x1x128xf32>
    %145 = vector.broadcast %144 : vector<2x1x128xf32> to vector<2x64x128xf32>
    %146 = arith.addf %143, %145 : vector<2x64x128xf32>
    %cst_93 = arith.constant 0.000000e+00 : f32
    %147 = vector.broadcast %cst_93 : f32 to vector<2x64x128xf32>
    %148 = arith.maximumf %138, %147 : vector<2x64x128xf32>
    %c2_94 = arith.constant 2 : index
    %c0_95 = arith.constant 0 : index
    %c0_96 = arith.constant 0 : index
    %149 = vector.load %arg7[%c2_94, %c0_95, %c0_96] : memref<5x128x128xf32, #tpu.memory_space<vmem>>, vector<1x128x128xf32>
    %150 = vector.shape_cast %149 : vector<1x128x128xf32> to vector<128x128xf32>
    %151 = vector.shape_cast %148 : vector<2x64x128xf32> to vector<128x128xf32>
    %cst_97 = arith.constant dense<0.000000e+00> : vector<128x128xf32>
    %152 = tpu.matmul %151, %150, %cst_97 {dimension_numbers = #tpu.dot_dimension_numbers<[1], [0], [0], [1], [0, 0, 1, 1], [], []>} : vector<128x128xf32>, vector<128x128xf32>, vector<128x128xf32> -> vector<128x128xf32>
    %153 = vector.shape_cast %152 : vector<128x128xf32> to vector<2x64x128xf32>
    %154 = vector.shape_cast %118 : vector<1x128xf32> to vector<1x1x128xf32>
    %155 = vector.broadcast %154 : vector<1x1x128xf32> to vector<2x64x128xf32>
    %156 = arith.addf %153, %155 : vector<2x64x128xf32>
    %157 = arith.addf %146, %156 : vector<2x64x128xf32>
    %cst_98 = arith.constant dense<0xFF800000> : vector<2x128xf32>
    %158 = vector.multi_reduction <maximumf>, %157, %cst_98 [1] : vector<2x64x128xf32> to vector<2x128xf32>
    %c3 = arith.constant 3 : index
    %c0_99 = arith.constant 0 : index
    %c0_100 = arith.constant 0 : index
    %159 = vector.load %arg6[%c3, %c0_99, %c0_100] : memref<5x1x128xf32, #tpu.memory_space<vmem>>, vector<1x1x128xf32>
    %160 = vector.shape_cast %159 : vector<1x1x128xf32> to vector<1x128xf32>
    %c3_101 = arith.constant 3 : index
    %c0_102 = arith.constant 0 : index
    %c0_103 = arith.constant 0 : index
    %161 = vector.load %arg8[%c3_101, %c0_102, %c0_103] : memref<5x1x128xf32, #tpu.memory_space<vmem>>, vector<1x1x128xf32>
    %162 = vector.shape_cast %161 : vector<1x1x128xf32> to vector<1x128xf32>
    %cst_104 = arith.constant 0.000000e+00 : f32
    %163 = vector.broadcast %cst_104 : f32 to vector<2x128xf32>
    %164 = arith.maximumf %158, %163 : vector<2x128xf32>
    %c3_105 = arith.constant 3 : index
    %c128_106 = arith.constant 128 : index
    %c0_107 = arith.constant 0 : index
    %165 = vector.load %arg5[%c3_105, %c128_106, %c0_107] : memref<5x256x128xf32, #tpu.memory_space<vmem>>, vector<1x128x128xf32>
    %166 = vector.shape_cast %165 : vector<1x128x128xf32> to vector<128x128xf32>
    %cst_108 = arith.constant dense<0.000000e+00> : vector<2x128xf32>
    %167 = tpu.matmul %164, %166, %cst_108 {dimension_numbers = #tpu.dot_dimension_numbers<[1], [0], [0], [1], [0, 0, 1, 1], [], []>} : vector<2x128xf32>, vector<128x128xf32>, vector<2x128xf32> -> vector<2x128xf32>
    %168 = vector.broadcast %160 : vector<1x128xf32> to vector<2x128xf32>
    %169 = arith.addf %167, %168 : vector<2x128xf32>
    %c3_109 = arith.constant 3 : index
    %c128_110 = arith.constant 128 : index
    %c0_111 = arith.constant 0 : index
    %170 = vector.load %arg9[%c3_109, %c128_110, %c0_111] : memref<5x256x128xf32, #tpu.memory_space<vmem>>, vector<1x128x128xf32>
    %171 = vector.shape_cast %170 : vector<1x128x128xf32> to vector<128x128xf32>
    %cst_112 = arith.constant dense<0.000000e+00> : vector<2x128xf32>
    %172 = tpu.matmul %158, %171, %cst_112 {dimension_numbers = #tpu.dot_dimension_numbers<[1], [0], [0], [1], [0, 0, 1, 1], [], []>} : vector<2x128xf32>, vector<128x128xf32>, vector<2x128xf32> -> vector<2x128xf32>
    %cst_113 = arith.constant 0.000000e+00 : f32
    %173 = vector.broadcast %cst_113 : f32 to vector<2x64x128xf32>
    %174 = arith.maximumf %157, %173 : vector<2x64x128xf32>
    %c3_114 = arith.constant 3 : index
    %c0_115 = arith.constant 0 : index
    %c0_116 = arith.constant 0 : index
    %175 = vector.load %arg5[%c3_114, %c0_115, %c0_116] : memref<5x256x128xf32, #tpu.memory_space<vmem>>, vector<1x128x128xf32>
    %176 = vector.shape_cast %175 : vector<1x128x128xf32> to vector<128x128xf32>
    %177 = vector.shape_cast %174 : vector<2x64x128xf32> to vector<128x128xf32>
    %cst_117 = arith.constant dense<0.000000e+00> : vector<128x128xf32>
    %178 = tpu.matmul %177, %176, %cst_117 {dimension_numbers = #tpu.dot_dimension_numbers<[1], [0], [0], [1], [0, 0, 1, 1], [], []>} : vector<128x128xf32>, vector<128x128xf32>, vector<128x128xf32> -> vector<128x128xf32>
    %179 = vector.shape_cast %178 : vector<128x128xf32> to vector<2x64x128xf32>
    %180 = vector.shape_cast %169 : vector<2x128xf32> to vector<2x1x128xf32>
    %181 = vector.broadcast %180 : vector<2x1x128xf32> to vector<2x64x128xf32>
    %182 = arith.addf %179, %181 : vector<2x64x128xf32>
    %c3_118 = arith.constant 3 : index
    %c0_119 = arith.constant 0 : index
    %c0_120 = arith.constant 0 : index
    %183 = vector.load %arg9[%c3_118, %c0_119, %c0_120] : memref<5x256x128xf32, #tpu.memory_space<vmem>>, vector<1x128x128xf32>
    %184 = vector.shape_cast %183 : vector<1x128x128xf32> to vector<128x128xf32>
    %185 = vector.shape_cast %157 : vector<2x64x128xf32> to vector<128x128xf32>
    %cst_121 = arith.constant dense<0.000000e+00> : vector<128x128xf32>
    %186 = tpu.matmul %185, %184, %cst_121 {dimension_numbers = #tpu.dot_dimension_numbers<[1], [0], [0], [1], [0, 0, 1, 1], [], []>} : vector<128x128xf32>, vector<128x128xf32>, vector<128x128xf32> -> vector<128x128xf32>
    %187 = vector.shape_cast %186 : vector<128x128xf32> to vector<2x64x128xf32>
    %188 = vector.shape_cast %172 : vector<2x128xf32> to vector<2x1x128xf32>
    %189 = vector.broadcast %188 : vector<2x1x128xf32> to vector<2x64x128xf32>
    %190 = arith.addf %187, %189 : vector<2x64x128xf32>
    %cst_122 = arith.constant 0.000000e+00 : f32
    %191 = vector.broadcast %cst_122 : f32 to vector<2x64x128xf32>
    %192 = arith.maximumf %182, %191 : vector<2x64x128xf32>
    %c3_123 = arith.constant 3 : index
    %c0_124 = arith.constant 0 : index
    %c0_125 = arith.constant 0 : index
    %193 = vector.load %arg7[%c3_123, %c0_124, %c0_125] : memref<5x128x128xf32, #tpu.memory_space<vmem>>, vector<1x128x128xf32>
    %194 = vector.shape_cast %193 : vector<1x128x128xf32> to vector<128x128xf32>
    %195 = vector.shape_cast %192 : vector<2x64x128xf32> to vector<128x128xf32>
    %cst_126 = arith.constant dense<0.000000e+00> : vector<128x128xf32>
    %196 = tpu.matmul %195, %194, %cst_126 {dimension_numbers = #tpu.dot_dimension_numbers<[1], [0], [0], [1], [0, 0, 1, 1], [], []>} : vector<128x128xf32>, vector<128x128xf32>, vector<128x128xf32> -> vector<128x128xf32>
    %197 = vector.shape_cast %196 : vector<128x128xf32> to vector<2x64x128xf32>
    %198 = vector.shape_cast %162 : vector<1x128xf32> to vector<1x1x128xf32>
    %199 = vector.broadcast %198 : vector<1x1x128xf32> to vector<2x64x128xf32>
    %200 = arith.addf %197, %199 : vector<2x64x128xf32>
    %201 = arith.addf %190, %200 : vector<2x64x128xf32>
    %cst_127 = arith.constant dense<0xFF800000> : vector<2x128xf32>
    %202 = vector.multi_reduction <maximumf>, %201, %cst_127 [1] : vector<2x64x128xf32> to vector<2x128xf32>
    %c4 = arith.constant 4 : index
    %c0_128 = arith.constant 0 : index
    %c0_129 = arith.constant 0 : index
    %203 = vector.load %arg6[%c4, %c0_128, %c0_129] : memref<5x1x128xf32, #tpu.memory_space<vmem>>, vector<1x1x128xf32>
    %204 = vector.shape_cast %203 : vector<1x1x128xf32> to vector<1x128xf32>
    %c4_130 = arith.constant 4 : index
    %c0_131 = arith.constant 0 : index
    %c0_132 = arith.constant 0 : index
    %205 = vector.load %arg8[%c4_130, %c0_131, %c0_132] : memref<5x1x128xf32, #tpu.memory_space<vmem>>, vector<1x1x128xf32>
    %206 = vector.shape_cast %205 : vector<1x1x128xf32> to vector<1x128xf32>
    %cst_133 = arith.constant 0.000000e+00 : f32
    %207 = vector.broadcast %cst_133 : f32 to vector<2x128xf32>
    %208 = arith.maximumf %202, %207 : vector<2x128xf32>
    %c4_134 = arith.constant 4 : index
    %c128_135 = arith.constant 128 : index
    %c0_136 = arith.constant 0 : index
    %209 = vector.load %arg5[%c4_134, %c128_135, %c0_136] : memref<5x256x128xf32, #tpu.memory_space<vmem>>, vector<1x128x128xf32>
    %210 = vector.shape_cast %209 : vector<1x128x128xf32> to vector<128x128xf32>
    %cst_137 = arith.constant dense<0.000000e+00> : vector<2x128xf32>
    %211 = tpu.matmul %208, %210, %cst_137 {dimension_numbers = #tpu.dot_dimension_numbers<[1], [0], [0], [1], [0, 0, 1, 1], [], []>} : vector<2x128xf32>, vector<128x128xf32>, vector<2x128xf32> -> vector<2x128xf32>
    %212 = vector.broadcast %204 : vector<1x128xf32> to vector<2x128xf32>
    %213 = arith.addf %211, %212 : vector<2x128xf32>
    %c4_138 = arith.constant 4 : index
    %c128_139 = arith.constant 128 : index
    %c0_140 = arith.constant 0 : index
    %214 = vector.load %arg9[%c4_138, %c128_139, %c0_140] : memref<5x256x128xf32, #tpu.memory_space<vmem>>, vector<1x128x128xf32>
    %215 = vector.shape_cast %214 : vector<1x128x128xf32> to vector<128x128xf32>
    %cst_141 = arith.constant dense<0.000000e+00> : vector<2x128xf32>
    %216 = tpu.matmul %202, %215, %cst_141 {dimension_numbers = #tpu.dot_dimension_numbers<[1], [0], [0], [1], [0, 0, 1, 1], [], []>} : vector<2x128xf32>, vector<128x128xf32>, vector<2x128xf32> -> vector<2x128xf32>
    %cst_142 = arith.constant 0.000000e+00 : f32
    %217 = vector.broadcast %cst_142 : f32 to vector<2x64x128xf32>
    %218 = arith.maximumf %201, %217 : vector<2x64x128xf32>
    %c4_143 = arith.constant 4 : index
    %c0_144 = arith.constant 0 : index
    %c0_145 = arith.constant 0 : index
    %219 = vector.load %arg5[%c4_143, %c0_144, %c0_145] : memref<5x256x128xf32, #tpu.memory_space<vmem>>, vector<1x128x128xf32>
    %220 = vector.shape_cast %219 : vector<1x128x128xf32> to vector<128x128xf32>
    %221 = vector.shape_cast %218 : vector<2x64x128xf32> to vector<128x128xf32>
    %cst_146 = arith.constant dense<0.000000e+00> : vector<128x128xf32>
    %222 = tpu.matmul %221, %220, %cst_146 {dimension_numbers = #tpu.dot_dimension_numbers<[1], [0], [0], [1], [0, 0, 1, 1], [], []>} : vector<128x128xf32>, vector<128x128xf32>, vector<128x128xf32> -> vector<128x128xf32>
    %223 = vector.shape_cast %222 : vector<128x128xf32> to vector<2x64x128xf32>
    %224 = vector.shape_cast %213 : vector<2x128xf32> to vector<2x1x128xf32>
    %225 = vector.broadcast %224 : vector<2x1x128xf32> to vector<2x64x128xf32>
    %226 = arith.addf %223, %225 : vector<2x64x128xf32>
    %c4_147 = arith.constant 4 : index
    %c0_148 = arith.constant 0 : index
    %c0_149 = arith.constant 0 : index
    %227 = vector.load %arg9[%c4_147, %c0_148, %c0_149] : memref<5x256x128xf32, #tpu.memory_space<vmem>>, vector<1x128x128xf32>
    %228 = vector.shape_cast %227 : vector<1x128x128xf32> to vector<128x128xf32>
    %229 = vector.shape_cast %201 : vector<2x64x128xf32> to vector<128x128xf32>
    %cst_150 = arith.constant dense<0.000000e+00> : vector<128x128xf32>
    %230 = tpu.matmul %229, %228, %cst_150 {dimension_numbers = #tpu.dot_dimension_numbers<[1], [0], [0], [1], [0, 0, 1, 1], [], []>} : vector<128x128xf32>, vector<128x128xf32>, vector<128x128xf32> -> vector<128x128xf32>
    %231 = vector.shape_cast %230 : vector<128x128xf32> to vector<2x64x128xf32>
    %232 = vector.shape_cast %216 : vector<2x128xf32> to vector<2x1x128xf32>
    %233 = vector.broadcast %232 : vector<2x1x128xf32> to vector<2x64x128xf32>
    %234 = arith.addf %231, %233 : vector<2x64x128xf32>
    %cst_151 = arith.constant 0.000000e+00 : f32
    %235 = vector.broadcast %cst_151 : f32 to vector<2x64x128xf32>
    %236 = arith.maximumf %226, %235 : vector<2x64x128xf32>
    %c4_152 = arith.constant 4 : index
    %c0_153 = arith.constant 0 : index
    %c0_154 = arith.constant 0 : index
    %237 = vector.load %arg7[%c4_152, %c0_153, %c0_154] : memref<5x128x128xf32, #tpu.memory_space<vmem>>, vector<1x128x128xf32>
    %238 = vector.shape_cast %237 : vector<1x128x128xf32> to vector<128x128xf32>
    %239 = vector.shape_cast %236 : vector<2x64x128xf32> to vector<128x128xf32>
    %cst_155 = arith.constant dense<0.000000e+00> : vector<128x128xf32>
    %240 = tpu.matmul %239, %238, %cst_155 {dimension_numbers = #tpu.dot_dimension_numbers<[1], [0], [0], [1], [0, 0, 1, 1], [], []>} : vector<128x128xf32>, vector<128x128xf32>, vector<128x128xf32> -> vector<128x128xf32>
    %241 = vector.shape_cast %240 : vector<128x128xf32> to vector<2x64x128xf32>
    %242 = vector.shape_cast %206 : vector<1x128xf32> to vector<1x1x128xf32>
    %243 = vector.broadcast %242 : vector<1x1x128xf32> to vector<2x64x128xf32>
    %244 = arith.addf %241, %243 : vector<2x64x128xf32>
    %245 = arith.addf %234, %244 : vector<2x64x128xf32>
    %cst_156 = arith.constant dense<0xFF800000> : vector<2x128xf32>
    %246 = vector.multi_reduction <maximumf>, %245, %cst_156 [1] : vector<2x64x128xf32> to vector<2x128xf32>
    %cst_157 = arith.constant 0.000000e+00 : f32
    %247 = vector.broadcast %cst_157 : f32 to vector<2x128xf32>
    %248 = arith.maximumf %246, %247 : vector<2x128xf32>
    %c0_158 = arith.constant 0 : index
    %c0_159 = arith.constant 0 : index
    %249 = vector.load %arg10[%c0_158, %c0_159] : memref<128x128xf32, #tpu.memory_space<vmem>>, vector<128x128xf32>
    %cst_160 = arith.constant dense<0.000000e+00> : vector<2x128xf32>
    %250 = tpu.matmul %248, %249, %cst_160 {dimension_numbers = #tpu.dot_dimension_numbers<[1], [0], [0], [1], [0, 0, 1, 1], [], []>} : vector<2x128xf32>, vector<128x128xf32>, vector<2x128xf32> -> vector<2x128xf32>
    %c0_161 = arith.constant 0 : index
    %c0_162 = arith.constant 0 : index
    %251 = vector.load %arg11[%c0_161, %c0_162] : memref<1x128xf32, #tpu.memory_space<vmem>>, vector<1x128xf32>
    %252 = vector.broadcast %251 : vector<1x128xf32> to vector<2x128xf32>
    %253 = arith.addf %250, %252 : vector<2x128xf32>
    %c0_163 = arith.constant 0 : index
    %c0_164 = arith.constant 0 : index
    %c0_165 = arith.constant 0 : index
    %254 = vector.load %arg12[%c0_163, %c0_164, %c0_165] : memref<2x1x128xf32, #tpu.memory_space<vmem>>, vector<2x1x128xf32>
    %255 = vector.shape_cast %254 : vector<2x1x128xf32> to vector<2x128xf32>
    %256 = vector.shape_cast %253 : vector<2x128xf32> to vector<2x1x128xf32>
    tpu.vector_store %arg12[%c0_163, %c0_164, %c0_165], %256 {strides = array<i32>} : memref<2x1x128xf32, #tpu.memory_space<vmem>>, vector<2x1x128xf32>,
    return
  }
  func.func @transform_0(%arg0: i32) -> (i32, i32, i32) {
    %c0_i32 = arith.constant 0 : i32
    %c0_i32_0 = arith.constant 0 : i32
    %c0_i32_1 = arith.constant 0 : i32
    return %arg0, %c0_i32, %c0_i32_0 : i32, i32, i32
  }
  func.func @transform_1(%arg0: i32) -> (i32, i32, i32) {
    %c0_i32 = arith.constant 0 : i32
    %c0_i32_0 = arith.constant 0 : i32
    %c0_i32_1 = arith.constant 0 : i32
    return %arg0, %c0_i32, %c0_i32_0 : i32, i32, i32
  }
  func.func @transform_2(%arg0: i32) -> (i32, i32) {
    %c0_i32 = arith.constant 0 : i32
    %c0_i32_0 = arith.constant 0 : i32
    %c0_i32_1 = arith.constant 0 : i32
    return %c0_i32, %c0_i32_0 : i32, i32
  }
  func.func @transform_3(%arg0: i32) -> (i32, i32) {
    %c0_i32 = arith.constant 0 : i32
    %c0_i32_0 = arith.constant 0 : i32
    %c0_i32_1 = arith.constant 0 : i32
    return %c0_i32, %c0_i32_0 : i32, i32
  }
  func.func @transform_4(%arg0: i32) -> (i32, i32, i32) {
    %c0_i32 = arith.constant 0 : i32
    %c0_i32_0 = arith.constant 0 : i32
    %c0_i32_1 = arith.constant 0 : i32
    %c0_i32_2 = arith.constant 0 : i32
    return %c0_i32, %c0_i32_0, %c0_i32_1 : i32, i32, i32
  }
  func.func @transform_5(%arg0: i32) -> (i32, i32, i32) {
    %c0_i32 = arith.constant 0 : i32
    %c0_i32_0 = arith.constant 0 : i32
    %c0_i32_1 = arith.constant 0 : i32
    %c0_i32_2 = arith.constant 0 : i32
    return %c0_i32, %c0_i32_0, %c0_i32_1 : i32, i32, i32
  }
  func.func @transform_6(%arg0: i32) -> (i32, i32, i32) {
    %c0_i32 = arith.constant 0 : i32
    %c0_i32_0 = arith.constant 0 : i32
    %c0_i32_1 = arith.constant 0 : i32
    %c0_i32_2 = arith.constant 0 : i32
    return %c0_i32, %c0_i32_0, %c0_i32_1 : i32, i32, i32
  }
  func.func @transform_7(%arg0: i32) -> (i32, i32, i32) {
    %c0_i32 = arith.constant 0 : i32
    %c0_i32_0 = arith.constant 0 : i32
    %c0_i32_1 = arith.constant 0 : i32
    %c0_i32_2 = arith.constant 0 : i32
    return %c0_i32, %c0_i32_0, %c0_i32_1 : i32, i32, i32
  }
  func.func @transform_8(%arg0: i32) -> (i32, i32, i32) {
    %c0_i32 = arith.constant 0 : i32
    %c0_i32_0 = arith.constant 0 : i32
    %c0_i32_1 = arith.constant 0 : i32
    %c0_i32_2 = arith.constant 0 : i32
    return %c0_i32, %c0_i32_0, %c0_i32_1 : i32, i32, i32
  }
  func.func @transform_9(%arg0: i32) -> (i32, i32) {
    %c0_i32 = arith.constant 0 : i32
    %c0_i32_0 = arith.constant 0 : i32
    %c0_i32_1 = arith.constant 0 : i32
    return %c0_i32, %c0_i32_0 : i32, i32
  }
  func.func @transform_10(%arg0: i32) -> (i32, i32) {
    %c0_i32 = arith.constant 0 : i32
    %c0_i32_0 = arith.constant 0 : i32
    %c0_i32_1 = arith.constant 0 : i32
    return %c0_i32, %c0_i32_0 : i32, i32
  }
  func.func @transform_11(%arg0: i32) -> (i32, i32, i32) {
    %c0_i32 = arith.constant 0 : i32
    %c0_i32_0 = arith.constant 0 : i32
    %c0_i32_1 = arith.constant 0 : i32
    return %arg0, %c0_i32, %c0_i32_0 : i32, i32, i32
  }
}

</mosaic_0001>

<llo_original>
// kernel: tpu_custom_call.1
$region0: #{tpu_custom_call.1}
  #allocation0 [shape = 'u32[]', space=smem, size = 0x4, offset = 0x4, fixed_abs, tag = 'smem constant byte address 0x4 - core index']
  #allocation1 [shape = 'u32[72,128]{1,0:T(1,128)}', space=vmem, size = 0x9000, scoped, tag = 'internal scratch']
  %s0 = inlined_call_operand.vmem [shape: f32[2,64,3], index: 0, kind: input, shape index: {}]
  %s1 = inlined_call_operand.hbm [shape: f32[2,1,128], index: 1, kind: input, shape index: {}]
  %s2 = inlined_call_operand.vmem [shape: f32[3,128], index: 2, kind: input, shape index: {}]
  %s3 = inlined_call_operand.hbm [shape: f32[1,128], index: 3, kind: input, shape index: {}]
  %s4 = inlined_call_operand.hbm [shape: f32[5,256,128], index: 4, kind: input, shape index: {}]
  %s5 = inlined_call_operand.vmem [shape: f32[5,1,128], index: 5, kind: input, shape index: {}]
  %s6 = inlined_call_operand.hbm [shape: f32[5,128,128], index: 6, kind: input, shape index: {}]
  %s7 = inlined_call_operand.vmem [shape: f32[5,1,128], index: 7, kind: input, shape index: {}]
  %s8 = inlined_call_operand.hbm [shape: f32[5,256,128], index: 8, kind: input, shape index: {}]
  %s9 = inlined_call_operand.vmem [shape: f32[128,128], index: 9, kind: input, shape index: {}]
  %s10 = inlined_call_operand.vmem [shape: f32[1,128], index: 10, kind: input, shape index: {}]
  %s11 = inlined_call_operand.hbm [shape: f32[2,1,128], index: 11, kind: output, shape index: {}]
  %s12 = sld [smem:[#allocation0]]
  $region74: #{tpu_custom_call.1} parent=0
    _
  %s14 = ssub.s32 1, %s12
  %s15 = scalar_select 0, %s14, %s12
  $region1: #{tpu_custom_call.1} parent=0
    #allocation2 [shape = 'u8[1024]{0}', space=vmem, size = 0x400, scoped, tag = 'input window, operand 1, single buffered']
    #allocation3 [shape = 's32[1]{0}', space=sflag, size = 0x4, scoped, tag = 'scoped memory for tpu_custom_call.1']
    #allocation4 [shape = 's32[1]{0}', space=sflag, size = 0x4, scoped, tag = 'scoped memory for tpu_custom_call.1']
    #allocation5 [shape = 'u8[512]{0}', space=vmem, size = 0x400, scoped, tag = 'input window, operand 3, single buffered']
    #allocation6 [shape = 's32[1]{0}', space=sflag, size = 0x4, scoped, tag = 'scoped memory for tpu_custom_call.1']
    #allocation7 [shape = 'u8[655360]{0}', space=vmem, size = 0xa0000, scoped, tag = 'input window, operand 4, single buffered']
    #allocation8 [shape = 'u8[327680]{0}', space=vmem, size = 0x50000, scoped, tag = 'input window, operand 6, single buffered']
    #allocation9 [shape = 's32[1]{0}', space=sflag, size = 0x4, scoped, tag = 'scoped memory for tpu_custom_call.1']
    #allocation10 [shape = 'u8[655360]{0}', space=vmem, size = 0xa0000, scoped, tag = 'input window, operand 8, single buffered']
    #allocation11 [shape = 'u8[1024]{0}', space=vmem, size = 0x400, scoped, tag = 'output window, operand 0, single buffered']
    %16 = vsyncpa [#allocation3], 0
    %17 = vsyncpa [#allocation6], 0
    %18 = vsyncpa [#allocation9], 0
    %19 = vsyncpa [#allocation4], 0
    // Predicated region
    $region2: #{tpu_custom_call.1} parent=1 // pred_check
      _
    $region3: #{tpu_custom_call.1} parent=1 // pred_check_branch
      %21 = sbr.rel (0) target = $region5
    $region4: #{tpu_custom_call.1} parent=1 // pred_region
      _
    $region5: #{tpu_custom_call.1} parent=1 // pred_fallthru
      _
    // Predicated region
    $region6: #{tpu_custom_call.1} parent=1 // pred_check
      _
    $region7: #{tpu_custom_call.1} parent=1 // pred_check_branch
      %23 = sbr.rel (0) target = $region9
    $region8: #{tpu_custom_call.1} parent=1 // pred_region
      %25 = vsyncadd [#allocation3], 0
      %s26 = sshll.u32 %s1, 4
      %s27 = int_to_ptr.hbm [resolvable:$true] %s26
      %s28 = sshll.u32 [#allocation2], 4
      %s29 = int_to_ptr.vmem [resolvable:$true] %s28
      %34 = dma.hbm_to_vmem [thread:$0]  %s27, 32, %s29, [#allocation3], 16, 16, 1
    $region9: #{tpu_custom_call.1} parent=1 // pred_fallthru
      _
    // Predicated region
    $region10: #{tpu_custom_call.1} parent=1 // pred_check
      _
    $region11: #{tpu_custom_call.1} parent=1 // pred_check_branch
      %36 = sbr.rel (0) target = $region13
    $region12: #{tpu_custom_call.1} parent=1 // pred_region
      _
    $region13: #{tpu_custom_call.1} parent=1 // pred_fallthru
      _
    // Predicated region
    $region14: #{tpu_custom_call.1} parent=1 // pred_check
      _
    $region15: #{tpu_custom_call.1} parent=1 // pred_check_branch
      %38 = sbr.rel (0) target = $region17
    $region16: #{tpu_custom_call.1} parent=1 // pred_region
      %40 = vsyncadd [#allocation6], 0
      %s42 = sshll.u32 %s3, 4
      %s43 = int_to_ptr.hbm [resolvable:$true] %s42
      %s44 = sshll.u32 [#allocation5], 4
      %s45 = int_to_ptr.vmem [resolvable:$true] %s44
      %47 = dma.hbm_to_vmem [thread:$0]  %s43, 16, %s45, [#allocation6]
    $region17: #{tpu_custom_call.1} parent=1 // pred_fallthru
      _
    // Predicated region
    $region18: #{tpu_custom_call.1} parent=1 // pred_check
      _
    $region19: #{tpu_custom_call.1} parent=1 // pred_check_branch
      %49 = sbr.rel (0) target = $region21
    $region20: #{tpu_custom_call.1} parent=1 // pred_region
      %51 = vsyncadd [#allocation6], 0
      %s52 = sshll.u32 %s4, 4
      %s53 = int_to_ptr.hbm [resolvable:$true] %s52
      %s54 = sshll.u32 [#allocation7], 4
      %s55 = int_to_ptr.vmem [resolvable:$true] %s54
      %60 = dma.hbm_to_vmem [thread:$0]  %s53, 20480, %s55, [#allocation6], 128, 128, 8
    $region21: #{tpu_custom_call.1} parent=1 // pred_fallthru
      _
    // Predicated region
    $region22: #{tpu_custom_call.1} parent=1 // pred_check
      _
    $region23: #{tpu_custom_call.1} parent=1 // pred_check_branch
      %62 = sbr.rel (0) target = $region25
    $region24: #{tpu_custom_call.1} parent=1 // pred_region
      _
    $region25: #{tpu_custom_call.1} parent=1 // pred_fallthru
      _
    // Predicated region
    $region26: #{tpu_custom_call.1} parent=1 // pred_check
      _
    $region27: #{tpu_custom_call.1} parent=1 // pred_check_branch
      %64 = sbr.rel (0) target = $region29
    $region28: #{tpu_custom_call.1} parent=1 // pred_region
      %66 = vsyncadd [#allocation9], 0
      %s67 = sshll.u32 %s6, 4
      %s68 = int_to_ptr.hbm [resolvable:$true] %s67
      %s69 = sshll.u32 [#allocation8], 4
      %s70 = int_to_ptr.vmem [resolvable:$true] %s69
      %75 = dma.hbm_to_vmem [thread:$0]  %s68, 10240, %s70, [#allocation9], 128, 128, 8
    $region29: #{tpu_custom_call.1} parent=1 // pred_fallthru
      _
    // Predicated region
    $region30: #{tpu_custom_call.1} parent=1 // pred_check
      _
    $region31: #{tpu_custom_call.1} parent=1 // pred_check_branch
      %77 = sbr.rel (0) target = $region33
    $region32: #{tpu_custom_call.1} parent=1 // pred_region
      _
    $region33: #{tpu_custom_call.1} parent=1 // pred_fallthru
      _
    // Predicated region
    $region34: #{tpu_custom_call.1} parent=1 // pred_check
      _
    $region35: #{tpu_custom_call.1} parent=1 // pred_check_branch
      %79 = sbr.rel (0) target = $region37
    $region36: #{tpu_custom_call.1} parent=1 // pred_region
      %81 = vsyncadd [#allocation9], 0
      %s82 = sshll.u32 %s8, 4
      %s83 = int_to_ptr.hbm [resolvable:$true] %s82
      %s84 = sshll.u32 [#allocation10], 4
      %s85 = int_to_ptr.vmem [resolvable:$true] %s84
      %90 = dma.hbm_to_vmem [thread:$0]  %s83, 20480, %s85, [#allocation9], 128, 128, 8
    $region37: #{tpu_custom_call.1} parent=1 // pred_fallthru
      _
    // Predicated region
    $region38: #{tpu_custom_call.1} parent=1 // pred_check
      _
    $region39: #{tpu_custom_call.1} parent=1 // pred_check_branch
      %92 = sbr.rel (0) target = $region41
    $region40: #{tpu_custom_call.1} parent=1 // pred_region
      _
    $region41: #{tpu_custom_call.1} parent=1 // pred_fallthru
      _
    // Predicated region
    $region42: #{tpu_custom_call.1} parent=1 // pred_check
      _
    $region43: #{tpu_custom_call.1} parent=1 // pred_check_branch
      %94 = sbr.rel (0) target = $region45
    $region44: #{tpu_custom_call.1} parent=1 // pred_region
      _
    $region45: #{tpu_custom_call.1} parent=1 // pred_fallthru
      _
    // Predicated region
    $region46: #{tpu_custom_call.1} parent=1 // pred_check
      _
    $region47: #{tpu_custom_call.1} parent=1 // pred_check_branch
      %96 = sbr.rel (0) target = $region49
    $region48: #{tpu_custom_call.1} parent=1 // pred_region
      %98 = dma.done [#allocation3], 32
    $region49: #{tpu_custom_call.1} parent=1 // pred_fallthru
      _
    // Predicated region
    $region50: #{tpu_custom_call.1} parent=1 // pred_check
      _
    $region51: #{tpu_custom_call.1} parent=1 // pred_check_branch
      %100 = sbr.rel (0) target = $region53
    $region52: #{tpu_custom_call.1} parent=1 // pred_region
      %102 = dma.done [#allocation6], 16
    $region53: #{tpu_custom_call.1} parent=1 // pred_fallthru
      _
    // Predicated region
    $region54: #{tpu_custom_call.1} parent=1 // pred_check
      _
    $region55: #{tpu_custom_call.1} parent=1 // pred_check_branch
      %104 = sbr.rel (0) target = $region57
    $region56: #{tpu_custom_call.1} parent=1 // pred_region
      %106 = dma.done [#allocation6], 20480
    $region57: #{tpu_custom_call.1} parent=1 // pred_fallthru
      _
    // Predicated region
    $region58: #{tpu_custom_call.1} parent=1 // pred_check
      _
    $region59: #{tpu_custom_call.1} parent=1 // pred_check_branch
      %108 = sbr.rel (0) target = $region61
    $region60: #{tpu_custom_call.1} parent=1 // pred_region
      %110 = dma.done [#allocation9], 10240
    $region61: #{tpu_custom_call.1} parent=1 // pred_fallthru
      _
    // Predicated region
    $region62: #{tpu_custom_call.1} parent=1 // pred_check
      _
    $region63: #{tpu_custom_call.1} parent=1 // pred_check_branch
      %112 = sbr.rel (0) target = $region65
    $region64: #{tpu_custom_call.1} parent=1 // pred_region
      %114 = dma.done [#allocation9], 20480
    $region65: #{tpu_custom_call.1} parent=1 // pred_fallthru
      _
    %v115 = vld [vmem:[#allocation5] sm:$0x1]
    %v116 = vld [vmem:[%s0] sm:$0xff]
    %v117 = vld [vmem:[%s0 + $0x8] sm:$0xff]
    %v118 = vld [vmem:[%s0 + $0x10] sm:$0xff]
    %v119 = vld [vmem:[%s0 + $0x18] sm:$0xff]
    %v120 = vld [vmem:[%s0 + $0x20] sm:$0xff]
    %v121 = vld [vmem:[%s0 + $0x28] sm:$0xff]
    %v122 = vld [vmem:[%s0 + $0x30] sm:$0xff]
    %v123 = vld [vmem:[%s0 + $0x38] sm:$0xff]
    %v124 = vld [vmem:[%s0 + $0x40] sm:$0xff]
    %v125 = vld [vmem:[%s0 + $0x48] sm:$0xff]
    %v126 = vld [vmem:[%s0 + $0x50] sm:$0xff]
    %v127 = vld [vmem:[%s0 + $0x58] sm:$0xff]
    %v128 = vld [vmem:[%s0 + $0x60] sm:$0xff]
    %v129 = vld [vmem:[%s0 + $0x68] sm:$0xff]
    %v130 = vld [vmem:[%s0 + $0x70] sm:$0xff]
    %v131 = vld [vmem:[%s0 + $0x78] sm:$0xff]
    %v133 = vperm.slane %v115, 0
    %v135 = vld [vmem:[%s2] sm:$0x1]
    %137 = vset.pattern.permute.xlu0 0
    %138 = vperm.xlu0 %137, %v116
    %v139 = vpop.permute.xlu0 %138
    %142 = vset.pattern.permute.xlu0 0
    %143 = vperm.xlu0 %142, %v117
    %v144 = vpop.permute.xlu0 %143
    %147 = vset.pattern.permute.xlu0 0
    %148 = vperm.xlu0 %147, %v118
    %v149 = vpop.permute.xlu0 %148
    %152 = vset.pattern.permute.xlu0 0
    %153 = vperm.xlu0 %152, %v119
    %v154 = vpop.permute.xlu0 %153
    %157 = vset.pattern.permute.xlu0 0
    %158 = vperm.xlu0 %157, %v120
    %v159 = vpop.permute.xlu0 %158
    %162 = vset.pattern.permute.xlu0 0
    %163 = vperm.xlu0 %162, %v121
    %v164 = vpop.permute.xlu0 %163
    %167 = vset.pattern.permute.xlu0 0
    %168 = vperm.xlu0 %167, %v122
    %v169 = vpop.permute.xlu0 %168
    %172 = vset.pattern.permute.xlu0 0
    %173 = vperm.xlu0 %172, %v123
    %v174 = vpop.permute.xlu0 %173
    %177 = vset.pattern.permute.xlu0 0
    %178 = vperm.xlu0 %177, %v124
    %v179 = vpop.permute.xlu0 %178
    %182 = vset.pattern.permute.xlu0 0
    %183 = vperm.xlu0 %182, %v125
    %v184 = vpop.permute.xlu0 %183
    %187 = vset.pattern.permute.xlu0 0
    %188 = vperm.xlu0 %187, %v126
    %v189 = vpop.permute.xlu0 %188
    %192 = vset.pattern.permute.xlu0 0
    %193 = vperm.xlu0 %192, %v127
    %v194 = vpop.permute.xlu0 %193
    %197 = vset.pattern.permute.xlu0 0
    %198 = vperm.xlu0 %197, %v128
    %v199 = vpop.permute.xlu0 %198
    %202 = vset.pattern.permute.xlu0 0
    %203 = vperm.xlu0 %202, %v129
    %v204 = vpop.permute.xlu0 %203
    %207 = vset.pattern.permute.xlu0 0
    %208 = vperm.xlu0 %207, %v130
    %v209 = vpop.permute.xlu0 %208
    %212 = vset.pattern.permute.xlu0 0
    %213 = vperm.xlu0 %212, %v131
    %v214 = vpop.permute.xlu0 %213
    %v216 = vperm.slane %v135, 0
    %v217 = vmul.f32 %v139, %v216
    %v218 = vmul.f32 %v144, %v216
    %v219 = vmul.f32 %v149, %v216
    %v220 = vmul.f32 %v154, %v216
    %v221 = vmul.f32 %v159, %v216
    %v222 = vmul.f32 %v164, %v216
    %v223 = vmul.f32 %v169, %v216
    %v224 = vmul.f32 %v174, %v216
    %v225 = vmul.f32 %v179, %v216
    %v226 = vmul.f32 %v184, %v216
    %v227 = vmul.f32 %v189, %v216
    %v228 = vmul.f32 %v194, %v216
    %v229 = vmul.f32 %v199, %v216
    %v230 = vmul.f32 %v204, %v216
    %v231 = vmul.f32 %v209, %v216
    %v232 = vmul.f32 %v214, %v216
    %v233 = vadd.f32 %v133, %v217
    %v234 = vadd.f32 %v133, %v218
    %v235 = vadd.f32 %v133, %v219
    %v236 = vadd.f32 %v133, %v220
    %v237 = vadd.f32 %v133, %v221
    %v238 = vadd.f32 %v133, %v222
    %v239 = vadd.f32 %v133, %v223
    %v240 = vadd.f32 %v133, %v224
    %v241 = vadd.f32 %v133, %v225
    %v242 = vadd.f32 %v133, %v226
    %v243 = vadd.f32 %v133, %v227
    %v244 = vadd.f32 %v133, %v228
    %v245 = vadd.f32 %v133, %v229
    %v246 = vadd.f32 %v133, %v230
    %v247 = vadd.f32 %v133, %v231
    %v248 = vadd.f32 %v133, %v232
    %v249 = vld [vmem:[%s2 + $0x1] sm:$0x1]
    %250 = vset.pattern.permute.xlu0 1
    %251 = vperm.xlu0 %250, %v116
    %v252 = vpop.permute.xlu0 %251
    %254 = vset.pattern.permute.xlu0 1
    %255 = vperm.xlu0 %254, %v117
    %v256 = vpop.permute.xlu0 %255
    %258 = vset.pattern.permute.xlu0 1
    %259 = vperm.xlu0 %258, %v118
    %v260 = vpop.permute.xlu0 %259
    %262 = vset.pattern.permute.xlu0 1
    %263 = vperm.xlu0 %262, %v119
    %v264 = vpop.permute.xlu0 %263
    %266 = vset.pattern.permute.xlu0 1
    %267 = vperm.xlu0 %266, %v120
    %v268 = vpop.permute.xlu0 %267
    %270 = vset.pattern.permute.xlu0 1
    %271 = vperm.xlu0 %270, %v121
    %v272 = vpop.permute.xlu0 %271
    %274 = vset.pattern.permute.xlu0 1
    %275 = vperm.xlu0 %274, %v122
    %v276 = vpop.permute.xlu0 %275
    %278 = vset.pattern.permute.xlu0 1
    %279 = vperm.xlu0 %278, %v123
    %v280 = vpop.permute.xlu0 %279
    %282 = vset.pattern.permute.xlu0 1
    %283 = vperm.xlu0 %282, %v124
    %v284 = vpop.permute.xlu0 %283
    %286 = vset.pattern.permute.xlu0 1
    %287 = vperm.xlu0 %286, %v125
    %v288 = vpop.permute.xlu0 %287
    %290 = vset.pattern.permute.xlu0 1
    %291 = vperm.xlu0 %290, %v126
    %v292 = vpop.permute.xlu0 %291
    %294 = vset.pattern.permute.xlu0 1
    %295 = vperm.xlu0 %294, %v127
    %v296 = vpop.permute.xlu0 %295
    %298 = vset.pattern.permute.xlu0 1
    %299 = vperm.xlu0 %298, %v128
    %v300 = vpop.permute.xlu0 %299
    %302 = vset.pattern.permute.xlu0 1
    %303 = vperm.xlu0 %302, %v129
    %v304 = vpop.permute.xlu0 %303
    %306 = vset.pattern.permute.xlu0 1
    %307 = vperm.xlu0 %306, %v130
    %v308 = vpop.permute.xlu0 %307
    %310 = vset.pattern.permute.xlu0 1
    %311 = vperm.xlu0 %310, %v131
    %v312 = vpop.permute.xlu0 %311
    %v314 = vperm.slane %v249, 0
    %v315 = vmul.f32 %v252, %v314
    %v316 = vmul.f32 %v256, %v314
    %v317 = vmul.f32 %v260, %v314
    %v318 = vmul.f32 %v264, %v314
    %v319 = vmul.f32 %v268, %v314
    %v320 = vmul.f32 %v272, %v314
    %v321 = vmul.f32 %v276, %v314
    %v322 = vmul.f32 %v280, %v314
    %v323 = vmul.f32 %v284, %v314
    %v324 = vmul.f32 %v288, %v314
    %v325 = vmul.f32 %v292, %v314
    %v326 = vmul.f32 %v296, %v314
    %v327 = vmul.f32 %v300, %v314
    %v328 = vmul.f32 %v304, %v314
    %v329 = vmul.f32 %v308, %v314
    %v330 = vmul.f32 %v312, %v314
    %v331 = vadd.f32 %v233, %v315
    %v332 = vadd.f32 %v234, %v316
    %v333 = vadd.f32 %v235, %v317
    %v334 = vadd.f32 %v236, %v318
    %v335 = vadd.f32 %v237, %v319
    %v336 = vadd.f32 %v238, %v320
    %v337 = vadd.f32 %v239, %v321
    %v338 = vadd.f32 %v240, %v322
    %v339 = vadd.f32 %v241, %v323
    %v340 = vadd.f32 %v242, %v324
    %v341 = vadd.f32 %v243, %v325
    %v342 = vadd.f32 %v244, %v326
    %v343 = vadd.f32 %v245, %v327
    %v344 = vadd.f32 %v246, %v328
    %v345 = vadd.f32 %v247, %v329
    %v346 = vadd.f32 %v248, %v330
    %v347 = vld [vmem:[%s2 + $0x2] sm:$0x1]
    %348 = vset.pattern.permute.xlu0 2
    %349 = vperm.xlu0 %348, %v116
    %v350 = vpop.permute.xlu0 %349
    %352 = vset.pattern.permute.xlu0 2
    %353 = vperm.xlu0 %352, %v117
    %v354 = vpop.permute.xlu0 %353
    %356 = vset.pattern.permute.xlu0 2
    %357 = vperm.xlu0 %356, %v118
    %v358 = vpop.permute.xlu0 %357
    %360 = vset.pattern.permute.xlu0 2
    %361 = vperm.xlu0 %360, %v119
    %v362 = vpop.permute.xlu0 %361
    %364 = vset.pattern.permute.xlu0 2
    %365 = vperm.xlu0 %364, %v120
    %v366 = vpop.permute.xlu0 %365
    %368 = vset.pattern.permute.xlu0 2
    %369 = vperm.xlu0 %368, %v121
    %v370 = vpop.permute.xlu0 %369
    %372 = vset.pattern.permute.xlu0 2
    %373 = vperm.xlu0 %372, %v122
    %v374 = vpop.permute.xlu0 %373
    %376 = vset.pattern.permute.xlu0 2
    %377 = vperm.xlu0 %376, %v123
    %v378 = vpop.permute.xlu0 %377
    %380 = vset.pattern.permute.xlu0 2
    %381 = vperm.xlu0 %380, %v124
    %v382 = vpop.permute.xlu0 %381
    %384 = vset.pattern.permute.xlu0 2
    %385 = vperm.xlu0 %384, %v125
    %v386 = vpop.permute.xlu0 %385
    %388 = vset.pattern.permute.xlu0 2
    %389 = vperm.xlu0 %388, %v126
    %v390 = vpop.permute.xlu0 %389
    %392 = vset.pattern.permute.xlu0 2
    %393 = vperm.xlu0 %392, %v127
    %v394 = vpop.permute.xlu0 %393
    %396 = vset.pattern.permute.xlu0 2
    %397 = vperm.xlu0 %396, %v128
    %v398 = vpop.permute.xlu0 %397
    %400 = vset.pattern.permute.xlu0 2
    %401 = vperm.xlu0 %400, %v129
    %v402 = vpop.permute.xlu0 %401
    %404 = vset.pattern.permute.xlu0 2
    %405 = vperm.xlu0 %404, %v130
    %v406 = vpop.permute.xlu0 %405
    %408 = vset.pattern.permute.xlu0 2
    %409 = vperm.xlu0 %408, %v131
    %v410 = vpop.permute.xlu0 %409
    %v412 = vperm.slane %v347, 0
    %v413 = vmul.f32 %v350, %v412
    %v414 = vmul.f32 %v354, %v412
    %v415 = vmul.f32 %v358, %v412
    %v416 = vmul.f32 %v362, %v412
    %v417 = vmul.f32 %v366, %v412
    %v418 = vmul.f32 %v370, %v412
    %v419 = vmul.f32 %v374, %v412
    %v420 = vmul.f32 %v378, %v412
    %v421 = vmul.f32 %v382, %v412
    %v422 = vmul.f32 %v386, %v412
    %v423 = vmul.f32 %v390, %v412
    %v424 = vmul.f32 %v394, %v412
    %v425 = vmul.f32 %v398, %v412
    %v426 = vmul.f32 %v402, %v412
    %v427 = vmul.f32 %v406, %v412
    %v428 = vmul.f32 %v410, %v412
    %v429 = vadd.f32 %v331, %v413
    %v430 = vadd.f32 %v332, %v414
    %v431 = vadd.f32 %v333, %v415
    %v432 = vadd.f32 %v334, %v416
    %v433 = vadd.f32 %v335, %v417
    %v434 = vadd.f32 %v336, %v418
    %v435 = vadd.f32 %v337, %v419
    %v436 = vadd.f32 %v338, %v420
    %v437 = vadd.f32 %v339, %v421
    %v438 = vadd.f32 %v340, %v422
    %v439 = vadd.f32 %v341, %v423
    %v440 = vadd.f32 %v342, %v424
    %v441 = vadd.f32 %v343, %v425
    %v442 = vadd.f32 %v344, %v426
    %v443 = vadd.f32 %v345, %v427
    %v444 = vadd.f32 %v346, %v428
    %v445 = vld [vmem:[#allocation2] sm:$0x1]
    %v446 = vld [vmem:[#allocation2 + $0x1] sm:$0x1]
    %v447 = vld [vmem:[%s5] sm:$0x1]
    %v448 = vld [vmem:[%s7] sm:$0x1]
    %v449 = vmax.f32 %v445, 0.0
    %v450 = vmax.f32 %v446, 0.0
    %v451 = vld [vmem:[#allocation7 + $0x80] sm:$0xff]
    %v452 = vld [vmem:[#allocation7 + $0x88] sm:$0xff]
    %v453 = vld [vmem:[#allocation7 + $0x90] sm:$0xff]
    %v454 = vld [vmem:[#allocation7 + $0x98] sm:$0xff]
    %v455 = vld [vmem:[#allocation7 + $0xa0] sm:$0xff]
    %v456 = vld [vmem:[#allocation7 + $0xa8] sm:$0xff]
    %v457 = vld [vmem:[#allocation7 + $0xb0] sm:$0xff]
    %v458 = vld [vmem:[#allocation7 + $0xb8] sm:$0xff]
    %v459 = vld [vmem:[#allocation7 + $0xc0] sm:$0xff]
    %v460 = vld [vmem:[#allocation7 + $0xc8] sm:$0xff]
    %v461 = vld [vmem:[#allocation7 + $0xd0] sm:$0xff]
    %v462 = vld [vmem:[#allocation7 + $0xd8] sm:$0xff]
    %v463 = vld [vmem:[#allocation7 + $0xe0] sm:$0xff]
    %v464 = vld [vmem:[#allocation7 + $0xe8] sm:$0xff]
    %v465 = vld [vmem:[#allocation7 + $0xf0] sm:$0xff]
    %v466 = vld [vmem:[#allocation7 + $0xf8] sm:$0xff]
    %v468 = vperm.slane %v447, 0
    %472 = vst [vmem:[#allocation1] ss:$9 sm:$0xff] %v449
    %s473 = scalar_lea.vmem [#allocation1], 1
    %474 = vst [vmem:[%s473] ss:$9 sm:$0xff] %v450
    %v475 = vld [vmem:[#allocation1] sm:$0xff]
    %477 = vmatpush.msra.mxu0 %v466
    %478 = vmatpush.msra.mxu0 %v465
    %479 = vmatpush.msra.mxu0 %v464
    %480 = vmatpush.msra.mxu0 %v463
    %481 = vmatpush.msra.mxu0 %v462
    %482 = vmatpush.msra.mxu0 %v461
    %483 = vmatpush.msra.mxu0 %v460
    %484 = vmatpush.msra.mxu0 %v459
    %485 = vmatpush.msra.mxu0 %v458
    %486 = vmatpush.msra.mxu0 %v457
    %487 = vmatpush.msra.mxu0 %v456
    %488 = vmatpush.msra.mxu0 %v455
    %489 = vmatpush.msra.mxu0 %v454
    %490 = vmatpush.msra.mxu0 %v453
    %491 = vmatpush.msra.mxu0 %v452
    %492 = vmatpush.msra.mxu0 %v451
    %493 = vmatmul.f32.gmra.mxu0 %v475
    %v494 = vpop.f32.mrf.mxu0
    %v495 = vadd.f32 %v468, %v494
    %496 = vdwg.mxu0
    %v497 = vld [vmem:[#allocation10 + $0x80] sm:$0xff]
    %v498 = vld [vmem:[#allocation10 + $0x88] sm:$0xff]
    %v499 = vld [vmem:[#allocation10 + $0x90] sm:$0xff]
    %v500 = vld [vmem:[#allocation10 + $0x98] sm:$0xff]
    %v501 = vld [vmem:[#allocation10 + $0xa0] sm:$0xff]
    %v502 = vld [vmem:[#allocation10 + $0xa8] sm:$0xff]
    %v503 = vld [vmem:[#allocation10 + $0xb0] sm:$0xff]
    %v504 = vld [vmem:[#allocation10 + $0xb8] sm:$0xff]
    %v505 = vld [vmem:[#allocation10 + $0xc0] sm:$0xff]
    %v506 = vld [vmem:[#allocation10 + $0xc8] sm:$0xff]
    %v507 = vld [vmem:[#allocation10 + $0xd0] sm:$0xff]
    %v508 = vld [vmem:[#allocation10 + $0xd8] sm:$0xff]
    %v509 = vld [vmem:[#allocation10 + $0xe0] sm:$0xff]
    %v510 = vld [vmem:[#allocation10 + $0xe8] sm:$0xff]
    %v511 = vld [vmem:[#allocation10 + $0xf0] sm:$0xff]
    %v512 = vld [vmem:[#allocation10 + $0xf8] sm:$0xff]
    %515 = vst [vmem:[#allocation1] ss:$9 sm:$0xff] %v445
    %s516 = scalar_lea.vmem [#allocation1], 1
    %517 = vst [vmem:[%s516] ss:$9 sm:$0xff] %v446
    %v518 = vld [vmem:[#allocation1] sm:$0xff]
    %520 = vmatpush.msra.mxu0 %v512
    %521 = vmatpush.msra.mxu0 %v511
    %522 = vmatpush.msra.mxu0 %v510
    %523 = vmatpush.msra.mxu0 %v509
    %524 = vmatpush.msra.mxu0 %v508
    %525 = vmatpush.msra.mxu0 %v507
    %526 = vmatpush.msra.mxu0 %v506
    %527 = vmatpush.msra.mxu0 %v505
    %528 = vmatpush.msra.mxu0 %v504
    %529 = vmatpush.msra.mxu0 %v503
    %530 = vmatpush.msra.mxu0 %v502
    %531 = vmatpush.msra.mxu0 %v501
    %532 = vmatpush.msra.mxu0 %v500
    %533 = vmatpush.msra.mxu0 %v499
    %534 = vmatpush.msra.mxu0 %v498
    %535 = vmatpush.msra.mxu0 %v497
    %536 = vmatmul.f32.gmra.mxu0 %v518
    %v537 = vpop.f32.mrf.mxu0
    %v538 = vadd.f32 0.0, %v537
    %539 = vdwg.mxu0
    %v540 = vmax.f32 %v429, 0.0
    %v541 = vmax.f32 %v430, 0.0
    %v542 = vmax.f32 %v431, 0.0
    %v543 = vmax.f32 %v432, 0.0
    %v544 = vmax.f32 %v433, 0.0
    %v545 = vmax.f32 %v434, 0.0
    %v546 = vmax.f32 %v435, 0.0
    %v547 = vmax.f32 %v436, 0.0
    %v548 = vmax.f32 %v437, 0.0
    %v549 = vmax.f32 %v438, 0.0
    %v550 = vmax.f32 %v439, 0.0
    %v551 = vmax.f32 %v440, 0.0
    %v552 = vmax.f32 %v441, 0.0
    %v553 = vmax.f32 %v442, 0.0
    %v554 = vmax.f32 %v443, 0.0
    %v555 = vmax.f32 %v444, 0.0
    %v556 = vld [vmem:[#allocation7] sm:$0xff]
    %v557 = vld [vmem:[#allocation7 + $0x8] sm:$0xff]
    %v558 = vld [vmem:[#allocation7 + $0x10] sm:$0xff]
    %v559 = vld [vmem:[#allocation7 + $0x18] sm:$0xff]
    %v560 = vld [vmem:[#allocation7 + $0x20] sm:$0xff]
    %v561 = vld [vmem:[#allocation7 + $0x28] sm:$0xff]
    %v562 = vld [vmem:[#allocation7 + $0x30] sm:$0xff]
    %v563 = vld [vmem:[#allocation7 + $0x38] sm:$0xff]
    %v564 = vld [vmem:[#allocation7 + $0x40] sm:$0xff]
    %v565 = vld [vmem:[#allocation7 + $0x48] sm:$0xff]
    %v566 = vld [vmem:[#allocation7 + $0x50] sm:$0xff]
    %v567 = vld [vmem:[#allocation7 + $0x58] sm:$0xff]
    %v568 = vld [vmem:[#allocation7 + $0x60] sm:$0xff]
    %v569 = vld [vmem:[#allocation7 + $0x68] sm:$0xff]
    %v570 = vld [vmem:[#allocation7 + $0x70] sm:$0xff]
    %v571 = vld [vmem:[#allocation7 + $0x78] sm:$0xff]
    %572 = vmatpush.msra.mxu0 %v571
    %573 = vmatpush.msra.mxu0 %v570
    %574 = vmatpush.msra.mxu0 %v569
    %575 = vmatpush.msra.mxu0 %v568
    %576 = vmatpush.msra.mxu0 %v567
    %577 = vmatpush.msra.mxu0 %v566
    %578 = vmatpush.msra.mxu0 %v565
    %579 = vmatpush.msra.mxu0 %v564
    %580 = vmatpush.msra.mxu0 %v563
    %581 = vmatpush.msra.mxu0 %v562
    %582 = vmatpush.msra.mxu0 %v561
    %583 = vmatpush.msra.mxu0 %v560
    %584 = vmatpush.msra.mxu0 %v559
    %585 = vmatpush.msra.mxu0 %v558
    %586 = vmatpush.msra.mxu0 %v557
    %587 = vmatpush.msra.mxu0 %v556
    %588 = vmatmul.f32.gmra.mxu0 %v540
    %v589 = vpop.f32.mrf.mxu0
    %v590 = vadd.f32 0.0, %v589
    %591 = vmatmul.f32.gmra.mxu0 %v541
    %v592 = vpop.f32.mrf.mxu0
    %v593 = vadd.f32 0.0, %v592
    %594 = vmatmul.f32.gmra.mxu0 %v542
    %v595 = vpop.f32.mrf.mxu0
    %v596 = vadd.f32 0.0, %v595
    %597 = vmatmul.f32.gmra.mxu0 %v543
    %v598 = vpop.f32.mrf.mxu0
    %v599 = vadd.f32 0.0, %v598
    %600 = vmatmul.f32.gmra.mxu0 %v544
    %v601 = vpop.f32.mrf.mxu0
    %v602 = vadd.f32 0.0, %v601
    %603 = vmatmul.f32.gmra.mxu0 %v545
    %v604 = vpop.f32.mrf.mxu0
    %v605 = vadd.f32 0.0, %v604
    %606 = vmatmul.f32.gmra.mxu0 %v546
    %v607 = vpop.f32.mrf.mxu0
    %v608 = vadd.f32 0.0, %v607
    %609 = vmatmul.f32.gmra.mxu0 %v547
    %v610 = vpop.f32.mrf.mxu0
    %v611 = vadd.f32 0.0, %v610
    %612 = vmatmul.f32.gmra.mxu0 %v548
    %v613 = vpop.f32.mrf.mxu0
    %v614 = vadd.f32 0.0, %v613
    %615 = vmatmul.f32.gmra.mxu0 %v549
    %v616 = vpop.f32.mrf.mxu0
    %v617 = vadd.f32 0.0, %v616
    %618 = vmatmul.f32.gmra.mxu0 %v550
    %v619 = vpop.f32.mrf.mxu0
    %v620 = vadd.f32 0.0, %v619
    %621 = vmatmul.f32.gmra.mxu0 %v551
    %v622 = vpop.f32.mrf.mxu0
    %v623 = vadd.f32 0.0, %v622
    %624 = vmatmul.f32.gmra.mxu0 %v552
    %v625 = vpop.f32.mrf.mxu0
    %v626 = vadd.f32 0.0, %v625
    %627 = vmatmul.f32.gmra.mxu0 %v553
    %v628 = vpop.f32.mrf.mxu0
    %v629 = vadd.f32 0.0, %v628
    %630 = vmatmul.f32.gmra.mxu0 %v554
    %v631 = vpop.f32.mrf.mxu0
    %v632 = vadd.f32 0.0, %v631
    %633 = vmatmul.f32.gmra.mxu0 %v555
    %v634 = vpop.f32.mrf.mxu0
    %v635 = vadd.f32 0.0, %v634
    %636 = vdwg.mxu0
    %v638 = vrot.slane %v495, 1
    %v639 = vperm.slane %v495, 0
    %v640 = vperm.slane %v638, 0
    %v643 = vadd.f32 %v590, %v639
    %v644 = vadd.f32 %v593, %v639
    %v645 = vadd.f32 %v596, %v639
    %v646 = vadd.f32 %v599, %v639
    %v647 = vadd.f32 %v602, %v639
    %v648 = vadd.f32 %v605, %v639
    %v649 = vadd.f32 %v608, %v639
    %v650 = vadd.f32 %v611, %v639
    %v651 = vadd.f32 %v614, %v640
    %v652 = vadd.f32 %v617, %v640
    %v653 = vadd.f32 %v620, %v640
    %v654 = vadd.f32 %v623, %v640
    %v655 = vadd.f32 %v626, %v640
    %v656 = vadd.f32 %v629, %v640
    %v657 = vadd.f32 %v632, %v640
    %v658 = vadd.f32 %v635, %v640
    %v659 = vld [vmem:[#allocation10] sm:$0xff]
    %v660 = vld [vmem:[#allocation10 + $0x8] sm:$0xff]
    %v661 = vld [vmem:[#allocation10 + $0x10] sm:$0xff]
    %v662 = vld [vmem:[#allocation10 + $0x18] sm:$0xff]
    %v663 = vld [vmem:[#allocation10 + $0x20] sm:$0xff]
    %v664 = vld [vmem:[#allocation10 + $0x28] sm:$0xff]
    %v665 = vld [vmem:[#allocation10 + $0x30] sm:$0xff]
    %v666 = vld [vmem:[#allocation10 + $0x38] sm:$0xff]
    %v667 = vld [vmem:[#allocation10 + $0x40] sm:$0xff]
    %v668 = vld [vmem:[#allocation10 + $0x48] sm:$0xff]
    %v669 = vld [vmem:[#allocation10 + $0x50] sm:$0xff]
    %v670 = vld [vmem:[#allocation10 + $0x58] sm:$0xff]
    %v671 = vld [vmem:[#allocation10 + $0x60] sm:$0xff]
    %v672 = vld [vmem:[#allocation10 + $0x68] sm:$0xff]
    %v673 = vld [vmem:[#allocation10 + $0x70] sm:$0xff]
    %v674 = vld [vmem:[#allocation10 + $0x78] sm:$0xff]
    %675 = vmatpush.msra.mxu0 %v674
    %676 = vmatpush.msra.mxu0 %v673
    %677 = vmatpush.msra.mxu0 %v672
    %678 = vmatpush.msra.mxu0 %v671
    %679 = vmatpush.msra.mxu0 %v670
    %680 = vmatpush.msra.mxu0 %v669
    %681 = vmatpush.msra.mxu0 %v668
    %682 = vmatpush.msra.mxu0 %v667
    %683 = vmatpush.msra.mxu0 %v666
    %684 = vmatpush.msra.mxu0 %v665
    %685 = vmatpush.msra.mxu0 %v664
    %686 = vmatpush.msra.mxu0 %v663
    %687 = vmatpush.msra.mxu0 %v662
    %688 = vmatpush.msra.mxu0 %v661
    %689 = vmatpush.msra.mxu0 %v660
    %690 = vmatpush.msra.mxu0 %v659
    %691 = vmatmul.f32.gmra.mxu0 %v429
    %v692 = vpop.f32.mrf.mxu0
    %v693 = vadd.f32 0.0, %v692
    %694 = vmatmul.f32.gmra.mxu0 %v430
    %v695 = vpop.f32.mrf.mxu0
    %v696 = vadd.f32 0.0, %v695
    %697 = vmatmul.f32.gmra.mxu0 %v431
    %v698 = vpop.f32.mrf.mxu0
    %v699 = vadd.f32 0.0, %v698
    %700 = vmatmul.f32.gmra.mxu0 %v432
    %v701 = vpop.f32.mrf.mxu0
    %v702 = vadd.f32 0.0, %v701
    %703 = vmatmul.f32.gmra.mxu0 %v433
    %v704 = vpop.f32.mrf.mxu0
    %v705 = vadd.f32 0.0, %v704
    %706 = vmatmul.f32.gmra.mxu0 %v434
    %v707 = vpop.f32.mrf.mxu0
    %v708 = vadd.f32 0.0, %v707
    %709 = vmatmul.f32.gmra.mxu0 %v435
    %v710 = vpop.f32.mrf.mxu0
    %v711 = vadd.f32 0.0, %v710
    %712 = vmatmul.f32.gmra.mxu0 %v436
    %v713 = vpop.f32.mrf.mxu0
    %v714 = vadd.f32 0.0, %v713
    %715 = vmatmul.f32.gmra.mxu0 %v437
    %v716 = vpop.f32.mrf.mxu0
    %v717 = vadd.f32 0.0, %v716
    %718 = vmatmul.f32.gmra.mxu0 %v438
    %v719 = vpop.f32.mrf.mxu0
    %v720 = vadd.f32 0.0, %v719
    %721 = vmatmul.f32.gmra.mxu0 %v439
    %v722 = vpop.f32.mrf.mxu0
    %v723 = vadd.f32 0.0, %v722
    %724 = vmatmul.f32.gmra.mxu0 %v440
    %v725 = vpop.f32.mrf.mxu0
    %v726 = vadd.f32 0.0, %v725
    %727 = vmatmul.f32.gmra.mxu0 %v441
    %v728 = vpop.f32.mrf.mxu0
    %v729 = vadd.f32 0.0, %v728
    %730 = vmatmul.f32.gmra.mxu0 %v442
    %v731 = vpop.f32.mrf.mxu0
    %v732 = vadd.f32 0.0, %v731
    %733 = vmatmul.f32.gmra.mxu0 %v443
    %v734 = vpop.f32.mrf.mxu0
    %v735 = vadd.f32 0.0, %v734
    %736 = vmatmul.f32.gmra.mxu0 %v444
    %v737 = vpop.f32.mrf.mxu0
    %v738 = vadd.f32 0.0, %v737
    %739 = vdwg.mxu0
    %v741 = vrot.slane %v538, 1
    %v742 = vperm.slane %v538, 0
    %v743 = vperm.slane %v741, 0
    %v746 = vadd.f32 %v693, %v742
    %v747 = vadd.f32 %v696, %v742
    %v748 = vadd.f32 %v699, %v742
    %v749 = vadd.f32 %v702, %v742
    %v750 = vadd.f32 %v705, %v742
    %v751 = vadd.f32 %v708, %v742
    %v752 = vadd.f32 %v711, %v742
    %v753 = vadd.f32 %v714, %v742
    %v754 = vadd.f32 %v717, %v743
    %v755 = vadd.f32 %v720, %v743
    %v756 = vadd.f32 %v723, %v743
    %v757 = vadd.f32 %v726, %v743
    %v758 = vadd.f32 %v729, %v743
    %v759 = vadd.f32 %v732, %v743
    %v760 = vadd.f32 %v735, %v743
    %v761 = vadd.f32 %v738, %v743
    %v762 = vmax.f32 %v643, 0.0
    %v763 = vmax.f32 %v644, 0.0
    %v764 = vmax.f32 %v645, 0.0
    %v765 = vmax.f32 %v646, 0.0
    %v766 = vmax.f32 %v647, 0.0
    %v767 = vmax.f32 %v648, 0.0
    %v768 = vmax.f32 %v649, 0.0
    %v769 = vmax.f32 %v650, 0.0
    %v770 = vmax.f32 %v651, 0.0
    %v771 = vmax.f32 %v652, 0.0
    %v772 = vmax.f32 %v653, 0.0
    %v773 = vmax.f32 %v654, 0.0
    %v774 = vmax.f32 %v655, 0.0
    %v775 = vmax.f32 %v656, 0.0
    %v776 = vmax.f32 %v657, 0.0
    %v777 = vmax.f32 %v658, 0.0
    %v778 = vld [vmem:[#allocation8] sm:$0xff]
    %v779 = vld [vmem:[#allocation8 + $0x8] sm:$0xff]
    %v780 = vld [vmem:[#allocation8 + $0x10] sm:$0xff]
    %v781 = vld [vmem:[#allocation8 + $0x18] sm:$0xff]
    %v782 = vld [vmem:[#allocation8 + $0x20] sm:$0xff]
    %v783 = vld [vmem:[#allocation8 + $0x28] sm:$0xff]
    %v784 = vld [vmem:[#allocation8 + $0x30] sm:$0xff]
    %v785 = vld [vmem:[#allocation8 + $0x38] sm:$0xff]
    %v786 = vld [vmem:[#allocation8 + $0x40] sm:$0xff]
    %v787 = vld [vmem:[#allocation8 + $0x48] sm:$0xff]
    %v788 = vld [vmem:[#allocation8 + $0x50] sm:$0xff]
    %v789 = vld [vmem:[#allocation8 + $0x58] sm:$0xff]
    %v790 = vld [vmem:[#allocation8 + $0x60] sm:$0xff]
    %v791 = vld [vmem:[#allocation8 + $0x68] sm:$0xff]
    %v792 = vld [vmem:[#allocation8 + $0x70] sm:$0xff]
    %v793 = vld [vmem:[#allocation8 + $0x78] sm:$0xff]
    %794 = vmatpush.msra.mxu0 %v793
    %795 = vmatpush.msra.mxu0 %v792
    %796 = vmatpush.msra.mxu0 %v791
    %797 = vmatpush.msra.mxu0 %v790
    %798 = vmatpush.msra.mxu0 %v789
    %799 = vmatpush.msra.mxu0 %v788
    %800 = vmatpush.msra.mxu0 %v787
    %801 = vmatpush.msra.mxu0 %v786
    %802 = vmatpush.msra.mxu0 %v785
    %803 = vmatpush.msra.mxu0 %v784
    %804 = vmatpush.msra.mxu0 %v783
    %805 = vmatpush.msra.mxu0 %v782
    %806 = vmatpush.msra.mxu0 %v781
    %807 = vmatpush.msra.mxu0 %v780
    %808 = vmatpush.msra.mxu0 %v779
    %809 = vmatpush.msra.mxu0 %v778
    %810 = vmatmul.f32.gmra.mxu0 %v762
    %v811 = vpop.f32.mrf.mxu0
    %v812 = vadd.f32 0.0, %v811
    %813 = vmatmul.f32.gmra.mxu0 %v763
    %v814 = vpop.f32.mrf.mxu0
    %v815 = vadd.f32 0.0, %v814
    %816 = vmatmul.f32.gmra.mxu0 %v764
    %v817 = vpop.f32.mrf.mxu0
    %v818 = vadd.f32 0.0, %v817
    %819 = vmatmul.f32.gmra.mxu0 %v765
    %v820 = vpop.f32.mrf.mxu0
    %v821 = vadd.f32 0.0, %v820
    %822 = vmatmul.f32.gmra.mxu0 %v766
    %v823 = vpop.f32.mrf.mxu0
    %v824 = vadd.f32 0.0, %v823
    %825 = vmatmul.f32.gmra.mxu0 %v767
    %v826 = vpop.f32.mrf.mxu0
    %v827 = vadd.f32 0.0, %v826
    %828 = vmatmul.f32.gmra.mxu0 %v768
    %v829 = vpop.f32.mrf.mxu0
    %v830 = vadd.f32 0.0, %v829
    %831 = vmatmul.f32.gmra.mxu0 %v769
    %v832 = vpop.f32.mrf.mxu0
    %v833 = vadd.f32 0.0, %v832
    %834 = vmatmul.f32.gmra.mxu0 %v770
    %v835 = vpop.f32.mrf.mxu0
    %v836 = vadd.f32 0.0, %v835
    %837 = vmatmul.f32.gmra.mxu0 %v771
    %v838 = vpop.f32.mrf.mxu0
    %v839 = vadd.f32 0.0, %v838
    %840 = vmatmul.f32.gmra.mxu0 %v772
    %v841 = vpop.f32.mrf.mxu0
    %v842 = vadd.f32 0.0, %v841
    %843 = vmatmul.f32.gmra.mxu0 %v773
    %v844 = vpop.f32.mrf.mxu0
    %v845 = vadd.f32 0.0, %v844
    %846 = vmatmul.f32.gmra.mxu0 %v774
    %v847 = vpop.f32.mrf.mxu0
    %v848 = vadd.f32 0.0, %v847
    %849 = vmatmul.f32.gmra.mxu0 %v775
    %v850 = vpop.f32.mrf.mxu0
    %v851 = vadd.f32 0.0, %v850
    %852 = vmatmul.f32.gmra.mxu0 %v776
    %v853 = vpop.f32.mrf.mxu0
    %v854 = vadd.f32 0.0, %v853
    %855 = vmatmul.f32.gmra.mxu0 %v777
    %v856 = vpop.f32.mrf.mxu0
    %v857 = vadd.f32 0.0, %v856
    %858 = vdwg.mxu0
    %v860 = vperm.slane %v448, 0
    %v862 = vadd.f32 %v812, %v860
    %v863 = vadd.f32 %v815, %v860
    %v864 = vadd.f32 %v818, %v860
    %v865 = vadd.f32 %v821, %v860
    %v866 = vadd.f32 %v824, %v860
    %v867 = vadd.f32 %v827, %v860
    %v868 = vadd.f32 %v830, %v860
    %v869 = vadd.f32 %v833, %v860
    %v870 = vadd.f32 %v836, %v860
    %v871 = vadd.f32 %v839, %v860
    %v872 = vadd.f32 %v842, %v860
    %v873 = vadd.f32 %v845, %v860
    %v874 = vadd.f32 %v848, %v860
    %v875 = vadd.f32 %v851, %v860
    %v876 = vadd.f32 %v854, %v860
    %v877 = vadd.f32 %v857, %v860
    %v878 = vadd.f32 %v746, %v862
    %v879 = vadd.f32 %v747, %v863
    %v880 = vadd.f32 %v748, %v864
    %v881 = vadd.f32 %v749, %v865
    %v882 = vadd.f32 %v750, %v866
    %v883 = vadd.f32 %v751, %v867
    %v884 = vadd.f32 %v752, %v868
    %v885 = vadd.f32 %v753, %v869
    %v886 = vadd.f32 %v754, %v870
    %v887 = vadd.f32 %v755, %v871
    %v888 = vadd.f32 %v756, %v872
    %v889 = vadd.f32 %v757, %v873
    %v890 = vadd.f32 %v758, %v874
    %v891 = vadd.f32 %v759, %v875
    %v892 = vadd.f32 %v760, %v876
    %v893 = vadd.f32 %v761, %v877
    %v894 = vmax.f32 %v878, %v880
    %v895 = vmax.f32 %v879, %v881
    %v896 = vmax.f32 %v894, %v882
    %v897 = vmax.f32 %v895, %v883
    %v898 = vmax.f32 %v896, %v884
    %v899 = vmax.f32 %v897, %v885
    %v900 = vmax.f32 %v898, %v899
    %v901 = vrot.slane %v900, 4
    %v902 = vmax.f32 %v900, %v901
    %v903 = vrot.slane %v902, 2
    %v904 = vmax.f32 %v902, %v903
    %v905 = vrot.slane %v904, 1
    %v906 = vmax.f32 %v904, %v905
    %v907 = vmax.f32 %v886, %v888
    %v908 = vmax.f32 %v887, %v889
    %v909 = vmax.f32 %v907, %v890
    %v910 = vmax.f32 %v908, %v891
    %v911 = vmax.f32 %v909, %v892
    %v912 = vmax.f32 %v910, %v893
    %v913 = vmax.f32 %v911, %v912
    %v914 = vrot.slane %v913, 4
    %v915 = vmax.f32 %v913, %v914
    %v916 = vrot.slane %v915, 2
    %v917 = vmax.f32 %v915, %v916
    %v918 = vrot.slane %v917, 1
    %v919 = vmax.f32 %v917, %v918
    %s920 = scalar_lea.vmem %s5, 1
    %v921 = vld [vmem:[%s920] sm:$0x1]
    %s922 = scalar_lea.vmem %s7, 1
    %v923 = vld [vmem:[%s922] sm:$0x1]
    %v924 = vmax.f32 %v906, 0.0
    %v925 = vmax.f32 %v919, 0.0
    %s926 = scalar_lea.vmem [#allocation7], 256
    %v927 = vld [vmem:[%s926 + $0x80] sm:$0xff]
    %v928 = vld [vmem:[%s926 + $0x88] sm:$0xff]
    %v929 = vld [vmem:[%s926 + $0x90] sm:$0xff]
    %v930 = vld [vmem:[%s926 + $0x98] sm:$0xff]
    %v931 = vld [vmem:[%s926 + $0xa0] sm:$0xff]
    %v932 = vld [vmem:[%s926 + $0xa8] sm:$0xff]
    %v933 = vld [vmem:[%s926 + $0xb0] sm:$0xff]
    %v934 = vld [vmem:[%s926 + $0xb8] sm:$0xff]
    %v935 = vld [vmem:[%s926 + $0xc0] sm:$0xff]
    %v936 = vld [vmem:[%s926 + $0xc8] sm:$0xff]
    %v937 = vld [vmem:[%s926 + $0xd0] sm:$0xff]
    %v938 = vld [vmem:[%s926 + $0xd8] sm:$0xff]
    %v939 = vld [vmem:[%s926 + $0xe0] sm:$0xff]
    %v940 = vld [vmem:[%s926 + $0xe8] sm:$0xff]
    %v941 = vld [vmem:[%s926 + $0xf0] sm:$0xff]
    %v942 = vld [vmem:[%s926 + $0xf8] sm:$0xff]
    %v944 = vperm.slane %v921, 0
    %vm948 = vcmask 1041409
    %v949 = vsel %vm948, %v925, %v924
    %951 = vmatpush.msra.mxu0 %v942
    %952 = vmatpush.msra.mxu0 %v941
    %953 = vmatpush.msra.mxu0 %v940
    %954 = vmatpush.msra.mxu0 %v939
    %955 = vmatpush.msra.mxu0 %v938
    %956 = vmatpush.msra.mxu0 %v937
    %957 = vmatpush.msra.mxu0 %v936
    %958 = vmatpush.msra.mxu0 %v935
    %959 = vmatpush.msra.mxu0 %v934
    %960 = vmatpush.msra.mxu0 %v933
    %961 = vmatpush.msra.mxu0 %v932
    %962 = vmatpush.msra.mxu0 %v931
    %963 = vmatpush.msra.mxu0 %v930
    %964 = vmatpush.msra.mxu0 %v929
    %965 = vmatpush.msra.mxu0 %v928
    %966 = vmatpush.msra.mxu0 %v927
    %967 = vmatmul.f32.gmra.mxu0 %v949
    %v968 = vpop.f32.mrf.mxu0
    %v969 = vadd.f32 %v944, %v968
    %970 = vdwg.mxu0
    %s971 = scalar_lea.vmem [#allocation10], 256
    %v972 = vld [vmem:[%s971 + $0x80] sm:$0xff]
    %v973 = vld [vmem:[%s971 + $0x88] sm:$0xff]
    %v974 = vld [vmem:[%s971 + $0x90] sm:$0xff]
    %v975 = vld [vmem:[%s971 + $0x98] sm:$0xff]
    %v976 = vld [vmem:[%s971 + $0xa0] sm:$0xff]
    %v977 = vld [vmem:[%s971 + $0xa8] sm:$0xff]
    %v978 = vld [vmem:[%s971 + $0xb0] sm:$0xff]
    %v979 = vld [vmem:[%s971 + $0xb8] sm:$0xff]
    %v980 = vld [vmem:[%s971 + $0xc0] sm:$0xff]
    %v981 = vld [vmem:[%s971 + $0xc8] sm:$0xff]
    %v982 = vld [vmem:[%s971 + $0xd0] sm:$0xff]
    %v983 = vld [vmem:[%s971 + $0xd8] sm:$0xff]
    %v984 = vld [vmem:[%s971 + $0xe0] sm:$0xff]
    %v985 = vld [vmem:[%s971 + $0xe8] sm:$0xff]
    %v986 = vld [vmem:[%s971 + $0xf0] sm:$0xff]
    %v987 = vld [vmem:[%s971 + $0xf8] sm:$0xff]
    %v990 = vsel %vm948, %v919, %v906
    %992 = vmatpush.msra.mxu0 %v987
    %993 = vmatpush.msra.mxu0 %v986
    %994 = vmatpush.msra.mxu0 %v985
    %995 = vmatpush.msra.mxu0 %v984
    %996 = vmatpush.msra.mxu0 %v983
    %997 = vmatpush.msra.mxu0 %v982
    %998 = vmatpush.msra.mxu0 %v981
    %999 = vmatpush.msra.mxu0 %v980
    %1000 = vmatpush.msra.mxu0 %v979
    %1001 = vmatpush.msra.mxu0 %v978
    %1002 = vmatpush.msra.mxu0 %v977
    %1003 = vmatpush.msra.mxu0 %v976
    %1004 = vmatpush.msra.mxu0 %v975
    %1005 = vmatpush.msra.mxu0 %v974
    %1006 = vmatpush.msra.mxu0 %v973
    %1007 = vmatpush.msra.mxu0 %v972
    %1008 = vmatmul.f32.gmra.mxu0 %v990
    %v1009 = vpop.f32.mrf.mxu0
    %v1010 = vadd.f32 0.0, %v1009
    %1011 = vdwg.mxu0
    %v1012 = vmax.f32 %v878, 0.0
    %v1013 = vmax.f32 %v879, 0.0
    %v1014 = vmax.f32 %v880, 0.0
    %v1015 = vmax.f32 %v881, 0.0
    %v1016 = vmax.f32 %v882, 0.0
    %v1017 = vmax.f32 %v883, 0.0
    %v1018 = vmax.f32 %v884, 0.0
    %v1019 = vmax.f32 %v885, 0.0
    %v1020 = vmax.f32 %v886, 0.0
    %v1021 = vmax.f32 %v887, 0.0
    %v1022 = vmax.f32 %v888, 0.0
    %v1023 = vmax.f32 %v889, 0.0
    %v1024 = vmax.f32 %v890, 0.0
    %v1025 = vmax.f32 %v891, 0.0
    %v1026 = vmax.f32 %v892, 0.0
    %v1027 = vmax.f32 %v893, 0.0
    %v1028 = vld [vmem:[%s926] sm:$0xff]
    %v1029 = vld [vmem:[%s926 + $0x8] sm:$0xff]
    %v1030 = vld [vmem:[%s926 + $0x10] sm:$0xff]
    %v1031 = vld [vmem:[%s926 + $0x18] sm:$0xff]
    %v1032 = vld [vmem:[%s926 + $0x20] sm:$0xff]
    %v1033 = vld [vmem:[%s926 + $0x28] sm:$0xff]
    %v1034 = vld [vmem:[%s926 + $0x30] sm:$0xff]
    %v1035 = vld [vmem:[%s926 + $0x38] sm:$0xff]
    %v1036 = vld [vmem:[%s926 + $0x40] sm:$0xff]
    %v1037 = vld [vmem:[%s926 + $0x48] sm:$0xff]
    %v1038 = vld [vmem:[%s926 + $0x50] sm:$0xff]
    %v1039 = vld [vmem:[%s926 + $0x58] sm:$0xff]
    %v1040 = vld [vmem:[%s926 + $0x60] sm:$0xff]
    %v1041 = vld [vmem:[%s926 + $0x68] sm:$0xff]
    %v1042 = vld [vmem:[%s926 + $0x70] sm:$0xff]
    %v1043 = vld [vmem:[%s926 + $0x78] sm:$0xff]
    %1044 = vmatpush.msra.mxu0 %v1043
    %1045 = vmatpush.msra.mxu0 %v1042
    %1046 = vmatpush.msra.mxu0 %v1041
    %1047 = vmatpush.msra.mxu0 %v1040
    %1048 = vmatpush.msra.mxu0 %v1039
    %1049 = vmatpush.msra.mxu0 %v1038
    %1050 = vmatpush.msra.mxu0 %v1037
    %1051 = vmatpush.msra.mxu0 %v1036
    %1052 = vmatpush.msra.mxu0 %v1035
    %1053 = vmatpush.msra.mxu0 %v1034
    %1054 = vmatpush.msra.mxu0 %v1033
    %1055 = vmatpush.msra.mxu0 %v1032
    %1056 = vmatpush.msra.mxu0 %v1031
    %1057 = vmatpush.msra.mxu0 %v1030
    %1058 = vmatpush.msra.mxu0 %v1029
    %1059 = vmatpush.msra.mxu0 %v1028
    %1060 = vmatmul.f32.gmra.mxu0 %v1012
    %v1061 = vpop.f32.mrf.mxu0
    %v1062 = vadd.f32 0.0, %v1061
    %1063 = vmatmul.f32.gmra.mxu0 %v1013
    %v1064 = vpop.f32.mrf.mxu0
    %v1065 = vadd.f32 0.0, %v1064
    %1066 = vmatmul.f32.gmra.mxu0 %v1014
    %v1067 = vpop.f32.mrf.mxu0
    %v1068 = vadd.f32 0.0, %v1067
    %1069 = vmatmul.f32.gmra.mxu0 %v1015
    %v1070 = vpop.f32.mrf.mxu0
    %v1071 = vadd.f32 0.0, %v1070
    %1072 = vmatmul.f32.gmra.mxu0 %v1016
    %v1073 = vpop.f32.mrf.mxu0
    %v1074 = vadd.f32 0.0, %v1073
    %1075 = vmatmul.f32.gmra.mxu0 %v1017
    %v1076 = vpop.f32.mrf.mxu0
    %v1077 = vadd.f32 0.0, %v1076
    %1078 = vmatmul.f32.gmra.mxu0 %v1018
    %v1079 = vpop.f32.mrf.mxu0
    %v1080 = vadd.f32 0.0, %v1079
    %1081 = vmatmul.f32.gmra.mxu0 %v1019
    %v1082 = vpop.f32.mrf.mxu0
    %v1083 = vadd.f32 0.0, %v1082
    %1084 = vmatmul.f32.gmra.mxu0 %v1020
    %v1085 = vpop.f32.mrf.mxu0
    %v1086 = vadd.f32 0.0, %v1085
    %1087 = vmatmul.f32.gmra.mxu0 %v1021
    %v1088 = vpop.f32.mrf.mxu0
    %v1089 = vadd.f32 0.0, %v1088
    %1090 = vmatmul.f32.gmra.mxu0 %v1022
    %v1091 = vpop.f32.mrf.mxu0
    %v1092 = vadd.f32 0.0, %v1091
    %1093 = vmatmul.f32.gmra.mxu0 %v1023
    %v1094 = vpop.f32.mrf.mxu0
    %v1095 = vadd.f32 0.0, %v1094
    %1096 = vmatmul.f32.gmra.mxu0 %v1024
    %v1097 = vpop.f32.mrf.mxu0
    %v1098 = vadd.f32 0.0, %v1097
    %1099 = vmatmul.f32.gmra.mxu0 %v1025
    %v1100 = vpop.f32.mrf.mxu0
    %v1101 = vadd.f32 0.0, %v1100
    %1102 = vmatmul.f32.gmra.mxu0 %v1026
    %v1103 = vpop.f32.mrf.mxu0
    %v1104 = vadd.f32 0.0, %v1103
    %1105 = vmatmul.f32.gmra.mxu0 %v1027
    %v1106 = vpop.f32.mrf.mxu0
    %v1107 = vadd.f32 0.0, %v1106
    %1108 = vdwg.mxu0
    %v1110 = vrot.slane %v969, 1
    %v1111 = vperm.slane %v969, 0
    %v1112 = vperm.slane %v1110, 0
    %v1115 = vadd.f32 %v1062, %v1111
    %v1116 = vadd.f32 %v1065, %v1111
    %v1117 = vadd.f32 %v1068, %v1111
    %v1118 = vadd.f32 %v1071, %v1111
    %v1119 = vadd.f32 %v1074, %v1111
    %v1120 = vadd.f32 %v1077, %v1111
    %v1121 = vadd.f32 %v1080, %v1111
    %v1122 = vadd.f32 %v1083, %v1111
    %v1123 = vadd.f32 %v1086, %v1112
    %v1124 = vadd.f32 %v1089, %v1112
    %v1125 = vadd.f32 %v1092, %v1112
    %v1126 = vadd.f32 %v1095, %v1112
    %v1127 = vadd.f32 %v1098, %v1112
    %v1128 = vadd.f32 %v1101, %v1112
    %v1129 = vadd.f32 %v1104, %v1112
    %v1130 = vadd.f32 %v1107, %v1112
    %v1131 = vld [vmem:[%s971] sm:$0xff]
    %v1132 = vld [vmem:[%s971 + $0x8] sm:$0xff]
    %v1133 = vld [vmem:[%s971 + $0x10] sm:$0xff]
    %v1134 = vld [vmem:[%s971 + $0x18] sm:$0xff]
    %v1135 = vld [vmem:[%s971 + $0x20] sm:$0xff]
    %v1136 = vld [vmem:[%s971 + $0x28] sm:$0xff]
    %v1137 = vld [vmem:[%s971 + $0x30] sm:$0xff]
    %v1138 = vld [vmem:[%s971 + $0x38] sm:$0xff]
    %v1139 = vld [vmem:[%s971 + $0x40] sm:$0xff]
    %v1140 = vld [vmem:[%s971 + $0x48] sm:$0xff]
    %v1141 = vld [vmem:[%s971 + $0x50] sm:$0xff]
    %v1142 = vld [vmem:[%s971 + $0x58] sm:$0xff]
    %v1143 = vld [vmem:[%s971 + $0x60] sm:$0xff]
    %v1144 = vld [vmem:[%s971 + $0x68] sm:$0xff]
    %v1145 = vld [vmem:[%s971 + $0x70] sm:$0xff]
    %v1146 = vld [vmem:[%s971 + $0x78] sm:$0xff]
    %1147 = vmatpush.msra.mxu0 %v1146
    %1148 = vmatpush.msra.mxu0 %v1145
    %1149 = vmatpush.msra.mxu0 %v1144
    %1150 = vmatpush.msra.mxu0 %v1143
    %1151 = vmatpush.msra.mxu0 %v1142
    %1152 = vmatpush.msra.mxu0 %v1141
    %1153 = vmatpush.msra.mxu0 %v1140
    %1154 = vmatpush.msra.mxu0 %v1139
    %1155 = vmatpush.msra.mxu0 %v1138
    %1156 = vmatpush.msra.mxu0 %v1137
    %1157 = vmatpush.msra.mxu0 %v1136
    %1158 = vmatpush.msra.mxu0 %v1135
    %1159 = vmatpush.msra.mxu0 %v1134
    %1160 = vmatpush.msra.mxu0 %v1133
    %1161 = vmatpush.msra.mxu0 %v1132
    %1162 = vmatpush.msra.mxu0 %v1131
    %1163 = vmatmul.f32.gmra.mxu0 %v878
    %v1164 = vpop.f32.mrf.mxu0
    %v1165 = vadd.f32 0.0, %v1164
    %1166 = vmatmul.f32.gmra.mxu0 %v879
    %v1167 = vpop.f32.mrf.mxu0
    %v1168 = vadd.f32 0.0, %v1167
    %1169 = vmatmul.f32.gmra.mxu0 %v880
    %v1170 = vpop.f32.mrf.mxu0
    %v1171 = vadd.f32 0.0, %v1170
    %1172 = vmatmul.f32.gmra.mxu0 %v881
    %v1173 = vpop.f32.mrf.mxu0
    %v1174 = vadd.f32 0.0, %v1173
    %1175 = vmatmul.f32.gmra.mxu0 %v882
    %v1176 = vpop.f32.mrf.mxu0
    %v1177 = vadd.f32 0.0, %v1176
    %1178 = vmatmul.f32.gmra.mxu0 %v883
    %v1179 = vpop.f32.mrf.mxu0
    %v1180 = vadd.f32 0.0, %v1179
    %1181 = vmatmul.f32.gmra.mxu0 %v884
    %v1182 = vpop.f32.mrf.mxu0
    %v1183 = vadd.f32 0.0, %v1182
    %1184 = vmatmul.f32.gmra.mxu0 %v885
    %v1185 = vpop.f32.mrf.mxu0
    %v1186 = vadd.f32 0.0, %v1185
    %1187 = vmatmul.f32.gmra.mxu0 %v886
    %v1188 = vpop.f32.mrf.mxu0
    %v1189 = vadd.f32 0.0, %v1188
    %1190 = vmatmul.f32.gmra.mxu0 %v887
    %v1191 = vpop.f32.mrf.mxu0
    %v1192 = vadd.f32 0.0, %v1191
    %1193 = vmatmul.f32.gmra.mxu0 %v888
    %v1194 = vpop.f32.mrf.mxu0
    %v1195 = vadd.f32 0.0, %v1194
    %1196 = vmatmul.f32.gmra.mxu0 %v889
    %v1197 = vpop.f32.mrf.mxu0
    %v1198 = vadd.f32 0.0, %v1197
    %1199 = vmatmul.f32.gmra.mxu0 %v890
    %v1200 = vpop.f32.mrf.mxu0
    %v1201 = vadd.f32 0.0, %v1200
    %1202 = vmatmul.f32.gmra.mxu0 %v891
    %v1203 = vpop.f32.mrf.mxu0
    %v1204 = vadd.f32 0.0, %v1203
    %1205 = vmatmul.f32.gmra.mxu0 %v892
    %v1206 = vpop.f32.mrf.mxu0
    %v1207 = vadd.f32 0.0, %v1206
    %1208 = vmatmul.f32.gmra.mxu0 %v893
    %v1209 = vpop.f32.mrf.mxu0
    %v1210 = vadd.f32 0.0, %v1209
    %1211 = vdwg.mxu0
    %v1213 = vrot.slane %v1010, 1
    %v1214 = vperm.slane %v1010, 0
    %v1215 = vperm.slane %v1213, 0
    %v1218 = vadd.f32 %v1165, %v1214
    %v1219 = vadd.f32 %v1168, %v1214
    %v1220 = vadd.f32 %v1171, %v1214
    %v1221 = vadd.f32 %v1174, %v1214
    %v1222 = vadd.f32 %v1177, %v1214
    %v1223 = vadd.f32 %v1180, %v1214
    %v1224 = vadd.f32 %v1183, %v1214
    %v1225 = vadd.f32 %v1186, %v1214
    %v1226 = vadd.f32 %v1189, %v1215
    %v1227 = vadd.f32 %v1192, %v1215
    %v1228 = vadd.f32 %v1195, %v1215
    %v1229 = vadd.f32 %v1198, %v1215
    %v1230 = vadd.f32 %v1201, %v1215
    %v1231 = vadd.f32 %v1204, %v1215
    %v1232 = vadd.f32 %v1207, %v1215
    %v1233 = vadd.f32 %v1210, %v1215
    %v1234 = vmax.f32 %v1115, 0.0
    %v1235 = vmax.f32 %v1116, 0.0
    %v1236 = vmax.f32 %v1117, 0.0
    %v1237 = vmax.f32 %v1118, 0.0
    %v1238 = vmax.f32 %v1119, 0.0
    %v1239 = vmax.f32 %v1120, 0.0
    %v1240 = vmax.f32 %v1121, 0.0
    %v1241 = vmax.f32 %v1122, 0.0
    %v1242 = vmax.f32 %v1123, 0.0
    %v1243 = vmax.f32 %v1124, 0.0
    %v1244 = vmax.f32 %v1125, 0.0
    %v1245 = vmax.f32 %v1126, 0.0
    %v1246 = vmax.f32 %v1127, 0.0
    %v1247 = vmax.f32 %v1128, 0.0
    %v1248 = vmax.f32 %v1129, 0.0
    %v1249 = vmax.f32 %v1130, 0.0
    %s1250 = scalar_lea.vmem [#allocation8], 128
    %v1251 = vld [vmem:[%s1250] sm:$0xff]
    %v1252 = vld [vmem:[%s1250 + $0x8] sm:$0xff]
    %v1253 = vld [vmem:[%s1250 + $0x10] sm:$0xff]
    %v1254 = vld [vmem:[%s1250 + $0x18] sm:$0xff]
    %v1255 = vld [vmem:[%s1250 + $0x20] sm:$0xff]
    %v1256 = vld [vmem:[%s1250 + $0x28] sm:$0xff]
    %v1257 = vld [vmem:[%s1250 + $0x30] sm:$0xff]
    %v1258 = vld [vmem:[%s1250 + $0x38] sm:$0xff]
    %v1259 = vld [vmem:[%s1250 + $0x40] sm:$0xff]
    %v1260 = vld [vmem:[%s1250 + $0x48] sm:$0xff]
    %v1261 = vld [vmem:[%s1250 + $0x50] sm:$0xff]
    %v1262 = vld [vmem:[%s1250 + $0x58] sm:$0xff]
    %v1263 = vld [vmem:[%s1250 + $0x60] sm:$0xff]
    %v1264 = vld [vmem:[%s1250 + $0x68] sm:$0xff]
    %v1265 = vld [vmem:[%s1250 + $0x70] sm:$0xff]
    %v1266 = vld [vmem:[%s1250 + $0x78] sm:$0xff]
    %1267 = vmatpush.msra.mxu0 %v1266
    %1268 = vmatpush.msra.mxu0 %v1265
    %1269 = vmatpush.msra.mxu0 %v1264
    %1270 = vmatpush.msra.mxu0 %v1263
    %1271 = vmatpush.msra.mxu0 %v1262
    %1272 = vmatpush.msra.mxu0 %v1261
    %1273 = vmatpush.msra.mxu0 %v1260
    %1274 = vmatpush.msra.mxu0 %v1259
    %1275 = vmatpush.msra.mxu0 %v1258
    %1276 = vmatpush.msra.mxu0 %v1257
    %1277 = vmatpush.msra.mxu0 %v1256
    %1278 = vmatpush.msra.mxu0 %v1255
    %1279 = vmatpush.msra.mxu0 %v1254
    %1280 = vmatpush.msra.mxu0 %v1253
    %1281 = vmatpush.msra.mxu0 %v1252
    %1282 = vmatpush.msra.mxu0 %v1251
    %1283 = vmatmul.f32.gmra.mxu0 %v1234
    %v1284 = vpop.f32.mrf.mxu0
    %v1285 = vadd.f32 0.0, %v1284
    %1286 = vmatmul.f32.gmra.mxu0 %v1235
    %v1287 = vpop.f32.mrf.mxu0
    %v1288 = vadd.f32 0.0, %v1287
    %1289 = vmatmul.f32.gmra.mxu0 %v1236
    %v1290 = vpop.f32.mrf.mxu0
    %v1291 = vadd.f32 0.0, %v1290
    %1292 = vmatmul.f32.gmra.mxu0 %v1237
    %v1293 = vpop.f32.mrf.mxu0
    %v1294 = vadd.f32 0.0, %v1293
    %1295 = vmatmul.f32.gmra.mxu0 %v1238
    %v1296 = vpop.f32.mrf.mxu0
    %v1297 = vadd.f32 0.0, %v1296
    %1298 = vmatmul.f32.gmra.mxu0 %v1239
    %v1299 = vpop.f32.mrf.mxu0
    %v1300 = vadd.f32 0.0, %v1299
    %1301 = vmatmul.f32.gmra.mxu0 %v1240
    %v1302 = vpop.f32.mrf.mxu0
    %v1303 = vadd.f32 0.0, %v1302
    %1304 = vmatmul.f32.gmra.mxu0 %v1241
    %v1305 = vpop.f32.mrf.mxu0
    %v1306 = vadd.f32 0.0, %v1305
    %1307 = vmatmul.f32.gmra.mxu0 %v1242
    %v1308 = vpop.f32.mrf.mxu0
    %v1309 = vadd.f32 0.0, %v1308
    %1310 = vmatmul.f32.gmra.mxu0 %v1243
    %v1311 = vpop.f32.mrf.mxu0
    %v1312 = vadd.f32 0.0, %v1311
    %1313 = vmatmul.f32.gmra.mxu0 %v1244
    %v1314 = vpop.f32.mrf.mxu0
    %v1315 = vadd.f32 0.0, %v1314
    %1316 = vmatmul.f32.gmra.mxu0 %v1245
    %v1317 = vpop.f32.mrf.mxu0
    %v1318 = vadd.f32 0.0, %v1317
    %1319 = vmatmul.f32.gmra.mxu0 %v1246
    %v1320 = vpop.f32.mrf.mxu0
    %v1321 = vadd.f32 0.0, %v1320
    %1322 = vmatmul.f32.gmra.mxu0 %v1247
    %v1323 = vpop.f32.mrf.mxu0
    %v1324 = vadd.f32 0.0, %v1323
    %1325 = vmatmul.f32.gmra.mxu0 %v1248
    %v1326 = vpop.f32.mrf.mxu0
    %v1327 = vadd.f32 0.0, %v1326
    %1328 = vmatmul.f32.gmra.mxu0 %v1249
    %v1329 = vpop.f32.mrf.mxu0
    %v1330 = vadd.f32 0.0, %v1329
    %1331 = vdwg.mxu0
    %v1333 = vperm.slane %v923, 0
    %v1335 = vadd.f32 %v1285, %v1333
    %v1336 = vadd.f32 %v1288, %v1333
    %v1337 = vadd.f32 %v1291, %v1333
    %v1338 = vadd.f32 %v1294, %v1333
    %v1339 = vadd.f32 %v1297, %v1333
    %v1340 = vadd.f32 %v1300, %v1333
    %v1341 = vadd.f32 %v1303, %v1333
    %v1342 = vadd.f32 %v1306, %v1333
    %v1343 = vadd.f32 %v1309, %v1333
    %v1344 = vadd.f32 %v1312, %v1333
    %v1345 = vadd.f32 %v1315, %v1333
    %v1346 = vadd.f32 %v1318, %v1333
    %v1347 = vadd.f32 %v1321, %v1333
    %v1348 = vadd.f32 %v1324, %v1333
    %v1349 = vadd.f32 %v1327, %v1333
    %v1350 = vadd.f32 %v1330, %v1333
    %v1351 = vadd.f32 %v1218, %v1335
    %v1352 = vadd.f32 %v1219, %v1336
    %v1353 = vadd.f32 %v1220, %v1337
    %v1354 = vadd.f32 %v1221, %v1338
    %v1355 = vadd.f32 %v1222, %v1339
    %v1356 = vadd.f32 %v1223, %v1340
    %v1357 = vadd.f32 %v1224, %v1341
    %v1358 = vadd.f32 %v1225, %v1342
    %v1359 = vadd.f32 %v1226, %v1343
    %v1360 = vadd.f32 %v1227, %v1344
    %v1361 = vadd.f32 %v1228, %v1345
    %v1362 = vadd.f32 %v1229, %v1346
    %v1363 = vadd.f32 %v1230, %v1347
    %v1364 = vadd.f32 %v1231, %v1348
    %v1365 = vadd.f32 %v1232, %v1349
    %v1366 = vadd.f32 %v1233, %v1350
    %v1367 = vmax.f32 %v1351, %v1353
    %v1368 = vmax.f32 %v1352, %v1354
    %v1369 = vmax.f32 %v1367, %v1355
    %v1370 = vmax.f32 %v1368, %v1356
    %v1371 = vmax.f32 %v1369, %v1357
    %v1372 = vmax.f32 %v1370, %v1358
    %v1373 = vmax.f32 %v1371, %v1372
    %v1374 = vrot.slane %v1373, 4
    %v1375 = vmax.f32 %v1373, %v1374
    %v1376 = vrot.slane %v1375, 2
    %v1377 = vmax.f32 %v1375, %v1376
    %v1378 = vrot.slane %v1377, 1
    %v1379 = vmax.f32 %v1377, %v1378
    %v1380 = vmax.f32 %v1359, %v1361
    %v1381 = vmax.f32 %v1360, %v1362
    %v1382 = vmax.f32 %v1380, %v1363
    %v1383 = vmax.f32 %v1381, %v1364
    %v1384 = vmax.f32 %v1382, %v1365
    %v1385 = vmax.f32 %v1383, %v1366
    %v1386 = vmax.f32 %v1384, %v1385
    %v1387 = vrot.slane %v1386, 4
    %v1388 = vmax.f32 %v1386, %v1387
    %v1389 = vrot.slane %v1388, 2
    %v1390 = vmax.f32 %v1388, %v1389
    %v1391 = vrot.slane %v1390, 1
    %v1392 = vmax.f32 %v1390, %v1391
    %s1393 = scalar_lea.vmem %s5, 2
    %v1394 = vld [vmem:[%s1393] sm:$0x1]
    %s1395 = scalar_lea.vmem %s7, 2
    %v1396 = vld [vmem:[%s1395] sm:$0x1]
    %v1397 = vmax.f32 %v1379, 0.0
    %v1398 = vmax.f32 %v1392, 0.0
    %s1399 = scalar_lea.vmem [#allocation7], 512
    %v1400 = vld [vmem:[%s1399 + $0x80] sm:$0xff]
    %v1401 = vld [vmem:[%s1399 + $0x88] sm:$0xff]
    %v1402 = vld [vmem:[%s1399 + $0x90] sm:$0xff]
    %v1403 = vld [vmem:[%s1399 + $0x98] sm:$0xff]
    %v1404 = vld [vmem:[%s1399 + $0xa0] sm:$0xff]
    %v1405 = vld [vmem:[%s1399 + $0xa8] sm:$0xff]
    %v1406 = vld [vmem:[%s1399 + $0xb0] sm:$0xff]
    %v1407 = vld [vmem:[%s1399 + $0xb8] sm:$0xff]
    %v1408 = vld [vmem:[%s1399 + $0xc0] sm:$0xff]
    %v1409 = vld [vmem:[%s1399 + $0xc8] sm:$0xff]
    %v1410 = vld [vmem:[%s1399 + $0xd0] sm:$0xff]
    %v1411 = vld [vmem:[%s1399 + $0xd8] sm:$0xff]
    %v1412 = vld [vmem:[%s1399 + $0xe0] sm:$0xff]
    %v1413 = vld [vmem:[%s1399 + $0xe8] sm:$0xff]
    %v1414 = vld [vmem:[%s1399 + $0xf0] sm:$0xff]
    %v1415 = vld [vmem:[%s1399 + $0xf8] sm:$0xff]
    %v1417 = vperm.slane %v1394, 0
    %v1421 = vsel %vm948, %v1398, %v1397
    %1423 = vmatpush.msra.mxu0 %v1415
    %1424 = vmatpush.msra.mxu0 %v1414
    %1425 = vmatpush.msra.mxu0 %v1413
    %1426 = vmatpush.msra.mxu0 %v1412
    %1427 = vmatpush.msra.mxu0 %v1411
    %1428 = vmatpush.msra.mxu0 %v1410
    %1429 = vmatpush.msra.mxu0 %v1409
    %1430 = vmatpush.msra.mxu0 %v1408
    %1431 = vmatpush.msra.mxu0 %v1407
    %1432 = vmatpush.msra.mxu0 %v1406
    %1433 = vmatpush.msra.mxu0 %v1405
    %1434 = vmatpush.msra.mxu0 %v1404
    %1435 = vmatpush.msra.mxu0 %v1403
    %1436 = vmatpush.msra.mxu0 %v1402
    %1437 = vmatpush.msra.mxu0 %v1401
    %1438 = vmatpush.msra.mxu0 %v1400
    %1439 = vmatmul.f32.gmra.mxu0 %v1421
    %v1440 = vpop.f32.mrf.mxu0
    %v1441 = vadd.f32 %v1417, %v1440
    %1442 = vdwg.mxu0
    %s1443 = scalar_lea.vmem [#allocation10], 512
    %v1444 = vld [vmem:[%s1443 + $0x80] sm:$0xff]
    %v1445 = vld [vmem:[%s1443 + $0x88] sm:$0xff]
    %v1446 = vld [vmem:[%s1443 + $0x90] sm:$0xff]
    %v1447 = vld [vmem:[%s1443 + $0x98] sm:$0xff]
    %v1448 = vld [vmem:[%s1443 + $0xa0] sm:$0xff]
    %v1449 = vld [vmem:[%s1443 + $0xa8] sm:$0xff]
    %v1450 = vld [vmem:[%s1443 + $0xb0] sm:$0xff]
    %v1451 = vld [vmem:[%s1443 + $0xb8] sm:$0xff]
    %v1452 = vld [vmem:[%s1443 + $0xc0] sm:$0xff]
    %v1453 = vld [vmem:[%s1443 + $0xc8] sm:$0xff]
    %v1454 = vld [vmem:[%s1443 + $0xd0] sm:$0xff]
    %v1455 = vld [vmem:[%s1443 + $0xd8] sm:$0xff]
    %v1456 = vld [vmem:[%s1443 + $0xe0] sm:$0xff]
    %v1457 = vld [vmem:[%s1443 + $0xe8] sm:$0xff]
    %v1458 = vld [vmem:[%s1443 + $0xf0] sm:$0xff]
    %v1459 = vld [vmem:[%s1443 + $0xf8] sm:$0xff]
    %v1462 = vsel %vm948, %v1392, %v1379
    %1464 = vmatpush.msra.mxu0 %v1459
    %1465 = vmatpush.msra.mxu0 %v1458
    %1466 = vmatpush.msra.mxu0 %v1457
    %1467 = vmatpush.msra.mxu0 %v1456
    %1468 = vmatpush.msra.mxu0 %v1455
    %1469 = vmatpush.msra.mxu0 %v1454
    %1470 = vmatpush.msra.mxu0 %v1453
    %1471 = vmatpush.msra.mxu0 %v1452
    %1472 = vmatpush.msra.mxu0 %v1451
    %1473 = vmatpush.msra.mxu0 %v1450
    %1474 = vmatpush.msra.mxu0 %v1449
    %1475 = vmatpush.msra.mxu0 %v1448
    %1476 = vmatpush.msra.mxu0 %v1447
    %1477 = vmatpush.msra.mxu0 %v1446
    %1478 = vmatpush.msra.mxu0 %v1445
    %1479 = vmatpush.msra.mxu0 %v1444
    %1480 = vmatmul.f32.gmra.mxu0 %v1462
    %v1481 = vpop.f32.mrf.mxu0
    %v1482 = vadd.f32 0.0, %v1481
    %1483 = vdwg.mxu0
    %v1484 = vmax.f32 %v1351, 0.0
    %v1485 = vmax.f32 %v1352, 0.0
    %v1486 = vmax.f32 %v1353, 0.0
    %v1487 = vmax.f32 %v1354, 0.0
    %v1488 = vmax.f32 %v1355, 0.0
    %v1489 = vmax.f32 %v1356, 0.0
    %v1490 = vmax.f32 %v1357, 0.0
    %v1491 = vmax.f32 %v1358, 0.0
    %v1492 = vmax.f32 %v1359, 0.0
    %v1493 = vmax.f32 %v1360, 0.0
    %v1494 = vmax.f32 %v1361, 0.0
    %v1495 = vmax.f32 %v1362, 0.0
    %v1496 = vmax.f32 %v1363, 0.0
    %v1497 = vmax.f32 %v1364, 0.0
    %v1498 = vmax.f32 %v1365, 0.0
    %v1499 = vmax.f32 %v1366, 0.0
    %v1500 = vld [vmem:[%s1399] sm:$0xff]
    %v1501 = vld [vmem:[%s1399 + $0x8] sm:$0xff]
    %v1502 = vld [vmem:[%s1399 + $0x10] sm:$0xff]
    %v1503 = vld [vmem:[%s1399 + $0x18] sm:$0xff]
    %v1504 = vld [vmem:[%s1399 + $0x20] sm:$0xff]
    %v1505 = vld [vmem:[%s1399 + $0x28] sm:$0xff]
    %v1506 = vld [vmem:[%s1399 + $0x30] sm:$0xff]
    %v1507 = vld [vmem:[%s1399 + $0x38] sm:$0xff]
    %v1508 = vld [vmem:[%s1399 + $0x40] sm:$0xff]
    %v1509 = vld [vmem:[%s1399 + $0x48] sm:$0xff]
    %v1510 = vld [vmem:[%s1399 + $0x50] sm:$0xff]
    %v1511 = vld [vmem:[%s1399 + $0x58] sm:$0xff]
    %v1512 = vld [vmem:[%s1399 + $0x60] sm:$0xff]
    %v1513 = vld [vmem:[%s1399 + $0x68] sm:$0xff]
    %v1514 = vld [vmem:[%s1399 + $0x70] sm:$0xff]
    %v1515 = vld [vmem:[%s1399 + $0x78] sm:$0xff]
    %1516 = vmatpush.msra.mxu0 %v1515
    %1517 = vmatpush.msra.mxu0 %v1514
    %1518 = vmatpush.msra.mxu0 %v1513
    %1519 = vmatpush.msra.mxu0 %v1512
    %1520 = vmatpush.msra.mxu0 %v1511
    %1521 = vmatpush.msra.mxu0 %v1510
    %1522 = vmatpush.msra.mxu0 %v1509
    %1523 = vmatpush.msra.mxu0 %v1508
    %1524 = vmatpush.msra.mxu0 %v1507
    %1525 = vmatpush.msra.mxu0 %v1506
    %1526 = vmatpush.msra.mxu0 %v1505
    %1527 = vmatpush.msra.mxu0 %v1504
    %1528 = vmatpush.msra.mxu0 %v1503
    %1529 = vmatpush.msra.mxu0 %v1502
    %1530 = vmatpush.msra.mxu0 %v1501
    %1531 = vmatpush.msra.mxu0 %v1500
    %1532 = vmatmul.f32.gmra.mxu0 %v1484
    %v1533 = vpop.f32.mrf.mxu0
    %v1534 = vadd.f32 0.0, %v1533
    %1535 = vmatmul.f32.gmra.mxu0 %v1485
    %v1536 = vpop.f32.mrf.mxu0
    %v1537 = vadd.f32 0.0, %v1536
    %1538 = vmatmul.f32.gmra.mxu0 %v1486
    %v1539 = vpop.f32.mrf.mxu0
    %v1540 = vadd.f32 0.0, %v1539
    %1541 = vmatmul.f32.gmra.mxu0 %v1487
    %v1542 = vpop.f32.mrf.mxu0
    %v1543 = vadd.f32 0.0, %v1542
    %1544 = vmatmul.f32.gmra.mxu0 %v1488
    %v1545 = vpop.f32.mrf.mxu0
    %v1546 = vadd.f32 0.0, %v1545
    %1547 = vmatmul.f32.gmra.mxu0 %v1489
    %v1548 = vpop.f32.mrf.mxu0
    %v1549 = vadd.f32 0.0, %v1548
    %1550 = vmatmul.f32.gmra.mxu0 %v1490
    %v1551 = vpop.f32.mrf.mxu0
    %v1552 = vadd.f32 0.0, %v1551
    %1553 = vmatmul.f32.gmra.mxu0 %v1491
    %v1554 = vpop.f32.mrf.mxu0
    %v1555 = vadd.f32 0.0, %v1554
    %1556 = vmatmul.f32.gmra.mxu0 %v1492
    %v1557 = vpop.f32.mrf.mxu0
    %v1558 = vadd.f32 0.0, %v1557
    %1559 = vmatmul.f32.gmra.mxu0 %v1493
    %v1560 = vpop.f32.mrf.mxu0
    %v1561 = vadd.f32 0.0, %v1560
    %1562 = vmatmul.f32.gmra.mxu0 %v1494
    %v1563 = vpop.f32.mrf.mxu0
    %v1564 = vadd.f32 0.0, %v1563
    %1565 = vmatmul.f32.gmra.mxu0 %v1495
    %v1566 = vpop.f32.mrf.mxu0
    %v1567 = vadd.f32 0.0, %v1566
    %1568 = vmatmul.f32.gmra.mxu0 %v1496
    %v1569 = vpop.f32.mrf.mxu0
    %v1570 = vadd.f32 0.0, %v1569
    %1571 = vmatmul.f32.gmra.mxu0 %v1497
    %v1572 = vpop.f32.mrf.mxu0
    %v1573 = vadd.f32 0.0, %v1572
    %1574 = vmatmul.f32.gmra.mxu0 %v1498
    %v1575 = vpop.f32.mrf.mxu0
    %v1576 = vadd.f32 0.0, %v1575
    %1577 = vmatmul.f32.gmra.mxu0 %v1499
    %v1578 = vpop.f32.mrf.mxu0
    %v1579 = vadd.f32 0.0, %v1578
    %1580 = vdwg.mxu0
    %v1582 = vrot.slane %v1441, 1
    %v1583 = vperm.slane %v1441, 0
    %v1584 = vperm.slane %v1582, 0
    %v1587 = vadd.f32 %v1534, %v1583
    %v1588 = vadd.f32 %v1537, %v1583
    %v1589 = vadd.f32 %v1540, %v1583
    %v1590 = vadd.f32 %v1543, %v1583
    %v1591 = vadd.f32 %v1546, %v1583
    %v1592 = vadd.f32 %v1549, %v1583
    %v1593 = vadd.f32 %v1552, %v1583
    %v1594 = vadd.f32 %v1555, %v1583
    %v1595 = vadd.f32 %v1558, %v1584
    %v1596 = vadd.f32 %v1561, %v1584
    %v1597 = vadd.f32 %v1564, %v1584
    %v1598 = vadd.f32 %v1567, %v1584
    %v1599 = vadd.f32 %v1570, %v1584
    %v1600 = vadd.f32 %v1573, %v1584
    %v1601 = vadd.f32 %v1576, %v1584
    %v1602 = vadd.f32 %v1579, %v1584
    %v1603 = vld [vmem:[%s1443] sm:$0xff]
    %v1604 = vld [vmem:[%s1443 + $0x8] sm:$0xff]
    %v1605 = vld [vmem:[%s1443 + $0x10] sm:$0xff]
    %v1606 = vld [vmem:[%s1443 + $0x18] sm:$0xff]
    %v1607 = vld [vmem:[%s1443 + $0x20] sm:$0xff]
    %v1608 = vld [vmem:[%s1443 + $0x28] sm:$0xff]
    %v1609 = vld [vmem:[%s1443 + $0x30] sm:$0xff]
    %v1610 = vld [vmem:[%s1443 + $0x38] sm:$0xff]
    %v1611 = vld [vmem:[%s1443 + $0x40] sm:$0xff]
    %v1612 = vld [vmem:[%s1443 + $0x48] sm:$0xff]
    %v1613 = vld [vmem:[%s1443 + $0x50] sm:$0xff]
    %v1614 = vld [vmem:[%s1443 + $0x58] sm:$0xff]
    %v1615 = vld [vmem:[%s1443 + $0x60] sm:$0xff]
    %v1616 = vld [vmem:[%s1443 + $0x68] sm:$0xff]
    %v1617 = vld [vmem:[%s1443 + $0x70] sm:$0xff]
    %v1618 = vld [vmem:[%s1443 + $0x78] sm:$0xff]
    %1619 = vmatpush.msra.mxu0 %v1618
    %1620 = vmatpush.msra.mxu0 %v1617
    %1621 = vmatpush.msra.mxu0 %v1616
    %1622 = vmatpush.msra.mxu0 %v1615
    %1623 = vmatpush.msra.mxu0 %v1614
    %1624 = vmatpush.msra.mxu0 %v1613
    %1625 = vmatpush.msra.mxu0 %v1612
    %1626 = vmatpush.msra.mxu0 %v1611
    %1627 = vmatpush.msra.mxu0 %v1610
    %1628 = vmatpush.msra.mxu0 %v1609
    %1629 = vmatpush.msra.mxu0 %v1608
    %1630 = vmatpush.msra.mxu0 %v1607
    %1631 = vmatpush.msra.mxu0 %v1606
    %1632 = vmatpush.msra.mxu0 %v1605
    %1633 = vmatpush.msra.mxu0 %v1604
    %1634 = vmatpush.msra.mxu0 %v1603
    %1635 = vmatmul.f32.gmra.mxu0 %v1351
    %v1636 = vpop.f32.mrf.mxu0
    %v1637 = vadd.f32 0.0, %v1636
    %1638 = vmatmul.f32.gmra.mxu0 %v1352
    %v1639 = vpop.f32.mrf.mxu0
    %v1640 = vadd.f32 0.0, %v1639
    %1641 = vmatmul.f32.gmra.mxu0 %v1353
    %v1642 = vpop.f32.mrf.mxu0
    %v1643 = vadd.f32 0.0, %v1642
    %1644 = vmatmul.f32.gmra.mxu0 %v1354
    %v1645 = vpop.f32.mrf.mxu0
    %v1646 = vadd.f32 0.0, %v1645
    %1647 = vmatmul.f32.gmra.mxu0 %v1355
    %v1648 = vpop.f32.mrf.mxu0
    %v1649 = vadd.f32 0.0, %v1648
    %1650 = vmatmul.f32.gmra.mxu0 %v1356
    %v1651 = vpop.f32.mrf.mxu0
    %v1652 = vadd.f32 0.0, %v1651
    %1653 = vmatmul.f32.gmra.mxu0 %v1357
    %v1654 = vpop.f32.mrf.mxu0
    %v1655 = vadd.f32 0.0, %v1654
    %1656 = vmatmul.f32.gmra.mxu0 %v1358
    %v1657 = vpop.f32.mrf.mxu0
    %v1658 = vadd.f32 0.0, %v1657
    %1659 = vmatmul.f32.gmra.mxu0 %v1359
    %v1660 = vpop.f32.mrf.mxu0
    %v1661 = vadd.f32 0.0, %v1660
    %1662 = vmatmul.f32.gmra.mxu0 %v1360
    %v1663 = vpop.f32.mrf.mxu0
    %v1664 = vadd.f32 0.0, %v1663
    %1665 = vmatmul.f32.gmra.mxu0 %v1361
    %v1666 = vpop.f32.mrf.mxu0
    %v1667 = vadd.f32 0.0, %v1666
    %1668 = vmatmul.f32.gmra.mxu0 %v1362
    %v1669 = vpop.f32.mrf.mxu0
    %v1670 = vadd.f32 0.0, %v1669
    %1671 = vmatmul.f32.gmra.mxu0 %v1363
    %v1672 = vpop.f32.mrf.mxu0
    %v1673 = vadd.f32 0.0, %v1672
    %1674 = vmatmul.f32.gmra.mxu0 %v1364
    %v1675 = vpop.f32.mrf.mxu0
    %v1676 = vadd.f32 0.0, %v1675
    %1677 = vmatmul.f32.gmra.mxu0 %v1365
    %v1678 = vpop.f32.mrf.mxu0
    %v1679 = vadd.f32 0.0, %v1678
    %1680 = vmatmul.f32.gmra.mxu0 %v1366
    %v1681 = vpop.f32.mrf.mxu0
    %v1682 = vadd.f32 0.0, %v1681
    %1683 = vdwg.mxu0
    %v1685 = vrot.slane %v1482, 1
    %v1686 = vperm.slane %v1482, 0
    %v1687 = vperm.slane %v1685, 0
    %v1690 = vadd.f32 %v1637, %v1686
    %v1691 = vadd.f32 %v1640, %v1686
    %v1692 = vadd.f32 %v1643, %v1686
    %v1693 = vadd.f32 %v1646, %v1686
    %v1694 = vadd.f32 %v1649, %v1686
    %v1695 = vadd.f32 %v1652, %v1686
    %v1696 = vadd.f32 %v1655, %v1686
    %v1697 = vadd.f32 %v1658, %v1686
    %v1698 = vadd.f32 %v1661, %v1687
    %v1699 = vadd.f32 %v1664, %v1687
    %v1700 = vadd.f32 %v1667, %v1687
    %v1701 = vadd.f32 %v1670, %v1687
    %v1702 = vadd.f32 %v1673, %v1687
    %v1703 = vadd.f32 %v1676, %v1687
    %v1704 = vadd.f32 %v1679, %v1687
    %v1705 = vadd.f32 %v1682, %v1687
    %v1706 = vmax.f32 %v1587, 0.0
    %v1707 = vmax.f32 %v1588, 0.0
    %v1708 = vmax.f32 %v1589, 0.0
    %v1709 = vmax.f32 %v1590, 0.0
    %v1710 = vmax.f32 %v1591, 0.0
    %v1711 = vmax.f32 %v1592, 0.0
    %v1712 = vmax.f32 %v1593, 0.0
    %v1713 = vmax.f32 %v1594, 0.0
    %v1714 = vmax.f32 %v1595, 0.0
    %v1715 = vmax.f32 %v1596, 0.0
    %v1716 = vmax.f32 %v1597, 0.0
    %v1717 = vmax.f32 %v1598, 0.0
    %v1718 = vmax.f32 %v1599, 0.0
    %v1719 = vmax.f32 %v1600, 0.0
    %v1720 = vmax.f32 %v1601, 0.0
    %v1721 = vmax.f32 %v1602, 0.0
    %s1722 = scalar_lea.vmem [#allocation8], 256
    %v1723 = vld [vmem:[%s1722] sm:$0xff]
    %v1724 = vld [vmem:[%s1722 + $0x8] sm:$0xff]
    %v1725 = vld [vmem:[%s1722 + $0x10] sm:$0xff]
    %v1726 = vld [vmem:[%s1722 + $0x18] sm:$0xff]
    %v1727 = vld [vmem:[%s1722 + $0x20] sm:$0xff]
    %v1728 = vld [vmem:[%s1722 + $0x28] sm:$0xff]
    %v1729 = vld [vmem:[%s1722 + $0x30] sm:$0xff]
    %v1730 = vld [vmem:[%s1722 + $0x38] sm:$0xff]
    %v1731 = vld [vmem:[%s1722 + $0x40] sm:$0xff]
    %v1732 = vld [vmem:[%s1722 + $0x48] sm:$0xff]
    %v1733 = vld [vmem:[%s1722 + $0x50] sm:$0xff]
    %v1734 = vld [vmem:[%s1722 + $0x58] sm:$0xff]
    %v1735 = vld [vmem:[%s1722 + $0x60] sm:$0xff]
    %v1736 = vld [vmem:[%s1722 + $0x68] sm:$0xff]
    %v1737 = vld [vmem:[%s1722 + $0x70] sm:$0xff]
    %v1738 = vld [vmem:[%s1722 + $0x78] sm:$0xff]
    %1739 = vmatpush.msra.mxu0 %v1738
    %1740 = vmatpush.msra.mxu0 %v1737
    %1741 = vmatpush.msra.mxu0 %v1736
    %1742 = vmatpush.msra.mxu0 %v1735
    %1743 = vmatpush.msra.mxu0 %v1734
    %1744 = vmatpush.msra.mxu0 %v1733
    %1745 = vmatpush.msra.mxu0 %v1732
    %1746 = vmatpush.msra.mxu0 %v1731
    %1747 = vmatpush.msra.mxu0 %v1730
    %1748 = vmatpush.msra.mxu0 %v1729
    %1749 = vmatpush.msra.mxu0 %v1728
    %1750 = vmatpush.msra.mxu0 %v1727
    %1751 = vmatpush.msra.mxu0 %v1726
    %1752 = vmatpush.msra.mxu0 %v1725
    %1753 = vmatpush.msra.mxu0 %v1724
    %1754 = vmatpush.msra.mxu0 %v1723
    %1755 = vmatmul.f32.gmra.mxu0 %v1706
    %v1756 = vpop.f32.mrf.mxu0
    %v1757 = vadd.f32 0.0, %v1756
    %1758 = vmatmul.f32.gmra.mxu0 %v1707
    %v1759 = vpop.f32.mrf.mxu0
    %v1760 = vadd.f32 0.0, %v1759
    %1761 = vmatmul.f32.gmra.mxu0 %v1708
    %v1762 = vpop.f32.mrf.mxu0
    %v1763 = vadd.f32 0.0, %v1762
    %1764 = vmatmul.f32.gmra.mxu0 %v1709
    %v1765 = vpop.f32.mrf.mxu0
    %v1766 = vadd.f32 0.0, %v1765
    %1767 = vmatmul.f32.gmra.mxu0 %v1710
    %v1768 = vpop.f32.mrf.mxu0
    %v1769 = vadd.f32 0.0, %v1768
    %1770 = vmatmul.f32.gmra.mxu0 %v1711
    %v1771 = vpop.f32.mrf.mxu0
    %v1772 = vadd.f32 0.0, %v1771
    %1773 = vmatmul.f32.gmra.mxu0 %v1712
    %v1774 = vpop.f32.mrf.mxu0
    %v1775 = vadd.f32 0.0, %v1774
    %1776 = vmatmul.f32.gmra.mxu0 %v1713
    %v1777 = vpop.f32.mrf.mxu0
    %v1778 = vadd.f32 0.0, %v1777
    %1779 = vmatmul.f32.gmra.mxu0 %v1714
    %v1780 = vpop.f32.mrf.mxu0
    %v1781 = vadd.f32 0.0, %v1780
    %1782 = vmatmul.f32.gmra.mxu0 %v1715
    %v1783 = vpop.f32.mrf.mxu0
    %v1784 = vadd.f32 0.0, %v1783
    %1785 = vmatmul.f32.gmra.mxu0 %v1716
    %v1786 = vpop.f32.mrf.mxu0
    %v1787 = vadd.f32 0.0, %v1786
    %1788 = vmatmul.f32.gmra.mxu0 %v1717
    %v1789 = vpop.f32.mrf.mxu0
    %v1790 = vadd.f32 0.0, %v1789
    %1791 = vmatmul.f32.gmra.mxu0 %v1718
    %v1792 = vpop.f32.mrf.mxu0
    %v1793 = vadd.f32 0.0, %v1792
    %1794 = vmatmul.f32.gmra.mxu0 %v1719
    %v1795 = vpop.f32.mrf.mxu0
    %v1796 = vadd.f32 0.0, %v1795
    %1797 = vmatmul.f32.gmra.mxu0 %v1720
    %v1798 = vpop.f32.mrf.mxu0
    %v1799 = vadd.f32 0.0, %v1798
    %1800 = vmatmul.f32.gmra.mxu0 %v1721
    %v1801 = vpop.f32.mrf.mxu0
    %v1802 = vadd.f32 0.0, %v1801
    %1803 = vdwg.mxu0
    %v1805 = vperm.slane %v1396, 0
    %v1807 = vadd.f32 %v1757, %v1805
    %v1808 = vadd.f32 %v1760, %v1805
    %v1809 = vadd.f32 %v1763, %v1805
    %v1810 = vadd.f32 %v1766, %v1805
    %v1811 = vadd.f32 %v1769, %v1805
    %v1812 = vadd.f32 %v1772, %v1805
    %v1813 = vadd.f32 %v1775, %v1805
    %v1814 = vadd.f32 %v1778, %v1805
    %v1815 = vadd.f32 %v1781, %v1805
    %v1816 = vadd.f32 %v1784, %v1805
    %v1817 = vadd.f32 %v1787, %v1805
    %v1818 = vadd.f32 %v1790, %v1805
    %v1819 = vadd.f32 %v1793, %v1805
    %v1820 = vadd.f32 %v1796, %v1805
    %v1821 = vadd.f32 %v1799, %v1805
    %v1822 = vadd.f32 %v1802, %v1805
    %v1823 = vadd.f32 %v1690, %v1807
    %v1824 = vadd.f32 %v1691, %v1808
    %v1825 = vadd.f32 %v1692, %v1809
    %v1826 = vadd.f32 %v1693, %v1810
    %v1827 = vadd.f32 %v1694, %v1811
    %v1828 = vadd.f32 %v1695, %v1812
    %v1829 = vadd.f32 %v1696, %v1813
    %v1830 = vadd.f32 %v1697, %v1814
    %v1831 = vadd.f32 %v1698, %v1815
    %v1832 = vadd.f32 %v1699, %v1816
    %v1833 = vadd.f32 %v1700, %v1817
    %v1834 = vadd.f32 %v1701, %v1818
    %v1835 = vadd.f32 %v1702, %v1819
    %v1836 = vadd.f32 %v1703, %v1820
    %v1837 = vadd.f32 %v1704, %v1821
    %v1838 = vadd.f32 %v1705, %v1822
    %v1839 = vmax.f32 %v1823, %v1825
    %v1840 = vmax.f32 %v1824, %v1826
    %v1841 = vmax.f32 %v1839, %v1827
    %v1842 = vmax.f32 %v1840, %v1828
    %v1843 = vmax.f32 %v1841, %v1829
    %v1844 = vmax.f32 %v1842, %v1830
    %v1845 = vmax.f32 %v1843, %v1844
    %v1846 = vrot.slane %v1845, 4
    %v1847 = vmax.f32 %v1845, %v1846
    %v1848 = vrot.slane %v1847, 2
    %v1849 = vmax.f32 %v1847, %v1848
    %v1850 = vrot.slane %v1849, 1
    %v1851 = vmax.f32 %v1849, %v1850
    %v1852 = vmax.f32 %v1831, %v1833
    %v1853 = vmax.f32 %v1832, %v1834
    %v1854 = vmax.f32 %v1852, %v1835
    %v1855 = vmax.f32 %v1853, %v1836
    %v1856 = vmax.f32 %v1854, %v1837
    %v1857 = vmax.f32 %v1855, %v1838
    %v1858 = vmax.f32 %v1856, %v1857
    %v1859 = vrot.slane %v1858, 4
    %v1860 = vmax.f32 %v1858, %v1859
    %v1861 = vrot.slane %v1860, 2
    %v1862 = vmax.f32 %v1860, %v1861
    %v1863 = vrot.slane %v1862, 1
    %v1864 = vmax.f32 %v1862, %v1863
    %s1865 = scalar_lea.vmem %s5, 3
    %v1866 = vld [vmem:[%s1865] sm:$0x1]
    %s1867 = scalar_lea.vmem %s7, 3
    %v1868 = vld [vmem:[%s1867] sm:$0x1]
    %v1869 = vmax.f32 %v1851, 0.0
    %v1870 = vmax.f32 %v1864, 0.0
    %s1871 = scalar_lea.vmem [#allocation7], 768
    %v1872 = vld [vmem:[%s1871 + $0x80] sm:$0xff]
    %v1873 = vld [vmem:[%s1871 + $0x88] sm:$0xff]
    %v1874 = vld [vmem:[%s1871 + $0x90] sm:$0xff]
    %v1875 = vld [vmem:[%s1871 + $0x98] sm:$0xff]
    %v1876 = vld [vmem:[%s1871 + $0xa0] sm:$0xff]
    %v1877 = vld [vmem:[%s1871 + $0xa8] sm:$0xff]
    %v1878 = vld [vmem:[%s1871 + $0xb0] sm:$0xff]
    %v1879 = vld [vmem:[%s1871 + $0xb8] sm:$0xff]
    %v1880 = vld [vmem:[%s1871 + $0xc0] sm:$0xff]
    %v1881 = vld [vmem:[%s1871 + $0xc8] sm:$0xff]
    %v1882 = vld [vmem:[%s1871 + $0xd0] sm:$0xff]
    %v1883 = vld [vmem:[%s1871 + $0xd8] sm:$0xff]
    %v1884 = vld [vmem:[%s1871 + $0xe0] sm:$0xff]
    %v1885 = vld [vmem:[%s1871 + $0xe8] sm:$0xff]
    %v1886 = vld [vmem:[%s1871 + $0xf0] sm:$0xff]
    %v1887 = vld [vmem:[%s1871 + $0xf8] sm:$0xff]
    %v1889 = vperm.slane %v1866, 0
    %v1893 = vsel %vm948, %v1870, %v1869
    %1895 = vmatpush.msra.mxu0 %v1887
    %1896 = vmatpush.msra.mxu0 %v1886
    %1897 = vmatpush.msra.mxu0 %v1885
    %1898 = vmatpush.msra.mxu0 %v1884
    %1899 = vmatpush.msra.mxu0 %v1883
    %1900 = vmatpush.msra.mxu0 %v1882
    %1901 = vmatpush.msra.mxu0 %v1881
    %1902 = vmatpush.msra.mxu0 %v1880
    %1903 = vmatpush.msra.mxu0 %v1879
    %1904 = vmatpush.msra.mxu0 %v1878
    %1905 = vmatpush.msra.mxu0 %v1877
    %1906 = vmatpush.msra.mxu0 %v1876
    %1907 = vmatpush.msra.mxu0 %v1875
    %1908 = vmatpush.msra.mxu0 %v1874
    %1909 = vmatpush.msra.mxu0 %v1873
    %1910 = vmatpush.msra.mxu0 %v1872
    %1911 = vmatmul.f32.gmra.mxu0 %v1893
    %v1912 = vpop.f32.mrf.mxu0
    %v1913 = vadd.f32 %v1889, %v1912
    %1914 = vdwg.mxu0
    %s1915 = scalar_lea.vmem [#allocation10], 768
    %v1916 = vld [vmem:[%s1915 + $0x80] sm:$0xff]
    %v1917 = vld [vmem:[%s1915 + $0x88] sm:$0xff]
    %v1918 = vld [vmem:[%s1915 + $0x90] sm:$0xff]
    %v1919 = vld [vmem:[%s1915 + $0x98] sm:$0xff]
    %v1920 = vld [vmem:[%s1915 + $0xa0] sm:$0xff]
    %v1921 = vld [vmem:[%s1915 + $0xa8] sm:$0xff]
    %v1922 = vld [vmem:[%s1915 + $0xb0] sm:$0xff]
    %v1923 = vld [vmem:[%s1915 + $0xb8] sm:$0xff]
    %v1924 = vld [vmem:[%s1915 + $0xc0] sm:$0xff]
    %v1925 = vld [vmem:[%s1915 + $0xc8] sm:$0xff]
    %v1926 = vld [vmem:[%s1915 + $0xd0] sm:$0xff]
    %v1927 = vld [vmem:[%s1915 + $0xd8] sm:$0xff]
    %v1928 = vld [vmem:[%s1915 + $0xe0] sm:$0xff]
    %v1929 = vld [vmem:[%s1915 + $0xe8] sm:$0xff]
    %v1930 = vld [vmem:[%s1915 + $0xf0] sm:$0xff]
    %v1931 = vld [vmem:[%s1915 + $0xf8] sm:$0xff]
    %v1934 = vsel %vm948, %v1864, %v1851
    %1936 = vmatpush.msra.mxu0 %v1931
    %1937 = vmatpush.msra.mxu0 %v1930
    %1938 = vmatpush.msra.mxu0 %v1929
    %1939 = vmatpush.msra.mxu0 %v1928
    %1940 = vmatpush.msra.mxu0 %v1927
    %1941 = vmatpush.msra.mxu0 %v1926
    %1942 = vmatpush.msra.mxu0 %v1925
    %1943 = vmatpush.msra.mxu0 %v1924
    %1944 = vmatpush.msra.mxu0 %v1923
    %1945 = vmatpush.msra.mxu0 %v1922
    %1946 = vmatpush.msra.mxu0 %v1921
    %1947 = vmatpush.msra.mxu0 %v1920
    %1948 = vmatpush.msra.mxu0 %v1919
    %1949 = vmatpush.msra.mxu0 %v1918
    %1950 = vmatpush.msra.mxu0 %v1917
    %1951 = vmatpush.msra.mxu0 %v1916
    %1952 = vmatmul.f32.gmra.mxu0 %v1934
    %v1953 = vpop.f32.mrf.mxu0
    %v1954 = vadd.f32 0.0, %v1953
    %1955 = vdwg.mxu0
    %v1956 = vmax.f32 %v1823, 0.0
    %v1957 = vmax.f32 %v1824, 0.0
    %v1958 = vmax.f32 %v1825, 0.0
    %v1959 = vmax.f32 %v1826, 0.0
    %v1960 = vmax.f32 %v1827, 0.0
    %v1961 = vmax.f32 %v1828, 0.0
    %v1962 = vmax.f32 %v1829, 0.0
    %v1963 = vmax.f32 %v1830, 0.0
    %v1964 = vmax.f32 %v1831, 0.0
    %v1965 = vmax.f32 %v1832, 0.0
    %v1966 = vmax.f32 %v1833, 0.0
    %v1967 = vmax.f32 %v1834, 0.0
    %v1968 = vmax.f32 %v1835, 0.0
    %v1969 = vmax.f32 %v1836, 0.0
    %v1970 = vmax.f32 %v1837, 0.0
    %v1971 = vmax.f32 %v1838, 0.0
    %v1972 = vld [vmem:[%s1871] sm:$0xff]
    %v1973 = vld [vmem:[%s1871 + $0x8] sm:$0xff]
    %v1974 = vld [vmem:[%s1871 + $0x10] sm:$0xff]
    %v1975 = vld [vmem:[%s1871 + $0x18] sm:$0xff]
    %v1976 = vld [vmem:[%s1871 + $0x20] sm:$0xff]
    %v1977 = vld [vmem:[%s1871 + $0x28] sm:$0xff]
    %v1978 = vld [vmem:[%s1871 + $0x30] sm:$0xff]
    %v1979 = vld [vmem:[%s1871 + $0x38] sm:$0xff]
    %v1980 = vld [vmem:[%s1871 + $0x40] sm:$0xff]
    %v1981 = vld [vmem:[%s1871 + $0x48] sm:$0xff]
    %v1982 = vld [vmem:[%s1871 + $0x50] sm:$0xff]
    %v1983 = vld [vmem:[%s1871 + $0x58] sm:$0xff]
    %v1984 = vld [vmem:[%s1871 + $0x60] sm:$0xff]
    %v1985 = vld [vmem:[%s1871 + $0x68] sm:$0xff]
    %v1986 = vld [vmem:[%s1871 + $0x70] sm:$0xff]
    %v1987 = vld [vmem:[%s1871 + $0x78] sm:$0xff]
    %1988 = vmatpush.msra.mxu0 %v1987
    %1989 = vmatpush.msra.mxu0 %v1986
    %1990 = vmatpush.msra.mxu0 %v1985
    %1991 = vmatpush.msra.mxu0 %v1984
    %1992 = vmatpush.msra.mxu0 %v1983
    %1993 = vmatpush.msra.mxu0 %v1982
    %1994 = vmatpush.msra.mxu0 %v1981
    %1995 = vmatpush.msra.mxu0 %v1980
    %1996 = vmatpush.msra.mxu0 %v1979
    %1997 = vmatpush.msra.mxu0 %v1978
    %1998 = vmatpush.msra.mxu0 %v1977
    %1999 = vmatpush.msra.mxu0 %v1976
    %2000 = vmatpush.msra.mxu0 %v1975
    %2001 = vmatpush.msra.mxu0 %v1974
    %2002 = vmatpush.msra.mxu0 %v1973
    %2003 = vmatpush.msra.mxu0 %v1972
    %2004 = vmatmul.f32.gmra.mxu0 %v1956
    %v2005 = vpop.f32.mrf.mxu0
    %v2006 = vadd.f32 0.0, %v2005
    %2007 = vmatmul.f32.gmra.mxu0 %v1957
    %v2008 = vpop.f32.mrf.mxu0
    %v2009 = vadd.f32 0.0, %v2008
    %2010 = vmatmul.f32.gmra.mxu0 %v1958
    %v2011 = vpop.f32.mrf.mxu0
    %v2012 = vadd.f32 0.0, %v2011
    %2013 = vmatmul.f32.gmra.mxu0 %v1959
    %v2014 = vpop.f32.mrf.mxu0
    %v2015 = vadd.f32 0.0, %v2014
    %2016 = vmatmul.f32.gmra.mxu0 %v1960
    %v2017 = vpop.f32.mrf.mxu0
    %v2018 = vadd.f32 0.0, %v2017
    %2019 = vmatmul.f32.gmra.mxu0 %v1961
    %v2020 = vpop.f32.mrf.mxu0
    %v2021 = vadd.f32 0.0, %v2020
    %2022 = vmatmul.f32.gmra.mxu0 %v1962
    %v2023 = vpop.f32.mrf.mxu0
    %v2024 = vadd.f32 0.0, %v2023
    %2025 = vmatmul.f32.gmra.mxu0 %v1963
    %v2026 = vpop.f32.mrf.mxu0
    %v2027 = vadd.f32 0.0, %v2026
    %2028 = vmatmul.f32.gmra.mxu0 %v1964
    %v2029 = vpop.f32.mrf.mxu0
    %v2030 = vadd.f32 0.0, %v2029
    %2031 = vmatmul.f32.gmra.mxu0 %v1965
    %v2032 = vpop.f32.mrf.mxu0
    %v2033 = vadd.f32 0.0, %v2032
    %2034 = vmatmul.f32.gmra.mxu0 %v1966
    %v2035 = vpop.f32.mrf.mxu0
    %v2036 = vadd.f32 0.0, %v2035
    %2037 = vmatmul.f32.gmra.mxu0 %v1967
    %v2038 = vpop.f32.mrf.mxu0
    %v2039 = vadd.f32 0.0, %v2038
    %2040 = vmatmul.f32.gmra.mxu0 %v1968
    %v2041 = vpop.f32.mrf.mxu0
    %v2042 = vadd.f32 0.0, %v2041
    %2043 = vmatmul.f32.gmra.mxu0 %v1969
    %v2044 = vpop.f32.mrf.mxu0
    %v2045 = vadd.f32 0.0, %v2044
    %2046 = vmatmul.f32.gmra.mxu0 %v1970
    %v2047 = vpop.f32.mrf.mxu0
    %v2048 = vadd.f32 0.0, %v2047
    %2049 = vmatmul.f32.gmra.mxu0 %v1971
    %v2050 = vpop.f32.mrf.mxu0
    %v2051 = vadd.f32 0.0, %v2050
    %2052 = vdwg.mxu0
    %v2054 = vrot.slane %v1913, 1
    %v2055 = vperm.slane %v1913, 0
    %v2056 = vperm.slane %v2054, 0
    %v2059 = vadd.f32 %v2006, %v2055
    %v2060 = vadd.f32 %v2009, %v2055
    %v2061 = vadd.f32 %v2012, %v2055
    %v2062 = vadd.f32 %v2015, %v2055
    %v2063 = vadd.f32 %v2018, %v2055
    %v2064 = vadd.f32 %v2021, %v2055
    %v2065 = vadd.f32 %v2024, %v2055
    %v2066 = vadd.f32 %v2027, %v2055
    %v2067 = vadd.f32 %v2030, %v2056
    %v2068 = vadd.f32 %v2033, %v2056
    %v2069 = vadd.f32 %v2036, %v2056
    %v2070 = vadd.f32 %v2039, %v2056
    %v2071 = vadd.f32 %v2042, %v2056
    %v2072 = vadd.f32 %v2045, %v2056
    %v2073 = vadd.f32 %v2048, %v2056
    %v2074 = vadd.f32 %v2051, %v2056
    %v2075 = vld [vmem:[%s1915] sm:$0xff]
    %v2076 = vld [vmem:[%s1915 + $0x8] sm:$0xff]
    %v2077 = vld [vmem:[%s1915 + $0x10] sm:$0xff]
    %v2078 = vld [vmem:[%s1915 + $0x18] sm:$0xff]
    %v2079 = vld [vmem:[%s1915 + $0x20] sm:$0xff]
    %v2080 = vld [vmem:[%s1915 + $0x28] sm:$0xff]
    %v2081 = vld [vmem:[%s1915 + $0x30] sm:$0xff]
    %v2082 = vld [vmem:[%s1915 + $0x38] sm:$0xff]
    %v2083 = vld [vmem:[%s1915 + $0x40] sm:$0xff]
    %v2084 = vld [vmem:[%s1915 + $0x48] sm:$0xff]
    %v2085 = vld [vmem:[%s1915 + $0x50] sm:$0xff]
    %v2086 = vld [vmem:[%s1915 + $0x58] sm:$0xff]
    %v2087 = vld [vmem:[%s1915 + $0x60] sm:$0xff]
    %v2088 = vld [vmem:[%s1915 + $0x68] sm:$0xff]
    %v2089 = vld [vmem:[%s1915 + $0x70] sm:$0xff]
    %v2090 = vld [vmem:[%s1915 + $0x78] sm:$0xff]
    %2091 = vmatpush.msra.mxu0 %v2090
    %2092 = vmatpush.msra.mxu0 %v2089
    %2093 = vmatpush.msra.mxu0 %v2088
    %2094 = vmatpush.msra.mxu0 %v2087
    %2095 = vmatpush.msra.mxu0 %v2086
    %2096 = vmatpush.msra.mxu0 %v2085
    %2097 = vmatpush.msra.mxu0 %v2084
    %2098 = vmatpush.msra.mxu0 %v2083
    %2099 = vmatpush.msra.mxu0 %v2082
    %2100 = vmatpush.msra.mxu0 %v2081
    %2101 = vmatpush.msra.mxu0 %v2080
    %2102 = vmatpush.msra.mxu0 %v2079
    %2103 = vmatpush.msra.mxu0 %v2078
    %2104 = vmatpush.msra.mxu0 %v2077
    %2105 = vmatpush.msra.mxu0 %v2076
    %2106 = vmatpush.msra.mxu0 %v2075
    %2107 = vmatmul.f32.gmra.mxu0 %v1823
    %v2108 = vpop.f32.mrf.mxu0
    %v2109 = vadd.f32 0.0, %v2108
    %2110 = vmatmul.f32.gmra.mxu0 %v1824
    %v2111 = vpop.f32.mrf.mxu0
    %v2112 = vadd.f32 0.0, %v2111
    %2113 = vmatmul.f32.gmra.mxu0 %v1825
    %v2114 = vpop.f32.mrf.mxu0
    %v2115 = vadd.f32 0.0, %v2114
    %2116 = vmatmul.f32.gmra.mxu0 %v1826
    %v2117 = vpop.f32.mrf.mxu0
    %v2118 = vadd.f32 0.0, %v2117
    %2119 = vmatmul.f32.gmra.mxu0 %v1827
    %v2120 = vpop.f32.mrf.mxu0
    %v2121 = vadd.f32 0.0, %v2120
    %2122 = vmatmul.f32.gmra.mxu0 %v1828
    %v2123 = vpop.f32.mrf.mxu0
    %v2124 = vadd.f32 0.0, %v2123
    %2125 = vmatmul.f32.gmra.mxu0 %v1829
    %v2126 = vpop.f32.mrf.mxu0
    %v2127 = vadd.f32 0.0, %v2126
    %2128 = vmatmul.f32.gmra.mxu0 %v1830
    %v2129 = vpop.f32.mrf.mxu0
    %v2130 = vadd.f32 0.0, %v2129
    %2131 = vmatmul.f32.gmra.mxu0 %v1831
    %v2132 = vpop.f32.mrf.mxu0
    %v2133 = vadd.f32 0.0, %v2132
    %2134 = vmatmul.f32.gmra.mxu0 %v1832
    %v2135 = vpop.f32.mrf.mxu0
    %v2136 = vadd.f32 0.0, %v2135
    %2137 = vmatmul.f32.gmra.mxu0 %v1833
    %v2138 = vpop.f32.mrf.mxu0
    %v2139 = vadd.f32 0.0, %v2138
    %2140 = vmatmul.f32.gmra.mxu0 %v1834
    %v2141 = vpop.f32.mrf.mxu0
    %v2142 = vadd.f32 0.0, %v2141
    %2143 = vmatmul.f32.gmra.mxu0 %v1835
    %v2144 = vpop.f32.mrf.mxu0
    %v2145 = vadd.f32 0.0, %v2144
    %2146 = vmatmul.f32.gmra.mxu0 %v1836
    %v2147 = vpop.f32.mrf.mxu0
    %v2148 = vadd.f32 0.0, %v2147
    %2149 = vmatmul.f32.gmra.mxu0 %v1837
    %v2150 = vpop.f32.mrf.mxu0
    %v2151 = vadd.f32 0.0, %v2150
    %2152 = vmatmul.f32.gmra.mxu0 %v1838
    %v2153 = vpop.f32.mrf.mxu0
    %v2154 = vadd.f32 0.0, %v2153
    %2155 = vdwg.mxu0
    %v2157 = vrot.slane %v1954, 1
    %v2158 = vperm.slane %v1954, 0
    %v2159 = vperm.slane %v2157, 0
    %v2162 = vadd.f32 %v2109, %v2158
    %v2163 = vadd.f32 %v2112, %v2158
    %v2164 = vadd.f32 %v2115, %v2158
    %v2165 = vadd.f32 %v2118, %v2158
    %v2166 = vadd.f32 %v2121, %v2158
    %v2167 = vadd.f32 %v2124, %v2158
    %v2168 = vadd.f32 %v2127, %v2158
    %v2169 = vadd.f32 %v2130, %v2158
    %v2170 = vadd.f32 %v2133, %v2159
    %v2171 = vadd.f32 %v2136, %v2159
    %v2172 = vadd.f32 %v2139, %v2159
    %v2173 = vadd.f32 %v2142, %v2159
    %v2174 = vadd.f32 %v2145, %v2159
    %v2175 = vadd.f32 %v2148, %v2159
    %v2176 = vadd.f32 %v2151, %v2159
    %v2177 = vadd.f32 %v2154, %v2159
    %v2178 = vmax.f32 %v2059, 0.0
    %v2179 = vmax.f32 %v2060, 0.0
    %v2180 = vmax.f32 %v2061, 0.0
    %v2181 = vmax.f32 %v2062, 0.0
    %v2182 = vmax.f32 %v2063, 0.0
    %v2183 = vmax.f32 %v2064, 0.0
    %v2184 = vmax.f32 %v2065, 0.0
    %v2185 = vmax.f32 %v2066, 0.0
    %v2186 = vmax.f32 %v2067, 0.0
    %v2187 = vmax.f32 %v2068, 0.0
    %v2188 = vmax.f32 %v2069, 0.0
    %v2189 = vmax.f32 %v2070, 0.0
    %v2190 = vmax.f32 %v2071, 0.0
    %v2191 = vmax.f32 %v2072, 0.0
    %v2192 = vmax.f32 %v2073, 0.0
    %v2193 = vmax.f32 %v2074, 0.0
    %s2194 = scalar_lea.vmem [#allocation8], 384
    %v2195 = vld [vmem:[%s2194] sm:$0xff]
    %v2196 = vld [vmem:[%s2194 + $0x8] sm:$0xff]
    %v2197 = vld [vmem:[%s2194 + $0x10] sm:$0xff]
    %v2198 = vld [vmem:[%s2194 + $0x18] sm:$0xff]
    %v2199 = vld [vmem:[%s2194 + $0x20] sm:$0xff]
    %v2200 = vld [vmem:[%s2194 + $0x28] sm:$0xff]
    %v2201 = vld [vmem:[%s2194 + $0x30] sm:$0xff]
    %v2202 = vld [vmem:[%s2194 + $0x38] sm:$0xff]
    %v2203 = vld [vmem:[%s2194 + $0x40] sm:$0xff]
    %v2204 = vld [vmem:[%s2194 + $0x48] sm:$0xff]
    %v2205 = vld [vmem:[%s2194 + $0x50] sm:$0xff]
    %v2206 = vld [vmem:[%s2194 + $0x58] sm:$0xff]
    %v2207 = vld [vmem:[%s2194 + $0x60] sm:$0xff]
    %v2208 = vld [vmem:[%s2194 + $0x68] sm:$0xff]
    %v2209 = vld [vmem:[%s2194 + $0x70] sm:$0xff]
    %v2210 = vld [vmem:[%s2194 + $0x78] sm:$0xff]
    %2211 = vmatpush.msra.mxu0 %v2210
    %2212 = vmatpush.msra.mxu0 %v2209
    %2213 = vmatpush.msra.mxu0 %v2208
    %2214 = vmatpush.msra.mxu0 %v2207
    %2215 = vmatpush.msra.mxu0 %v2206
    %2216 = vmatpush.msra.mxu0 %v2205
    %2217 = vmatpush.msra.mxu0 %v2204
    %2218 = vmatpush.msra.mxu0 %v2203
    %2219 = vmatpush.msra.mxu0 %v2202
    %2220 = vmatpush.msra.mxu0 %v2201
    %2221 = vmatpush.msra.mxu0 %v2200
    %2222 = vmatpush.msra.mxu0 %v2199
    %2223 = vmatpush.msra.mxu0 %v2198
    %2224 = vmatpush.msra.mxu0 %v2197
    %2225 = vmatpush.msra.mxu0 %v2196
    %2226 = vmatpush.msra.mxu0 %v2195
    %2227 = vmatmul.f32.gmra.mxu0 %v2178
    %v2228 = vpop.f32.mrf.mxu0
    %v2229 = vadd.f32 0.0, %v2228
    %2230 = vmatmul.f32.gmra.mxu0 %v2179
    %v2231 = vpop.f32.mrf.mxu0
    %v2232 = vadd.f32 0.0, %v2231
    %2233 = vmatmul.f32.gmra.mxu0 %v2180
    %v2234 = vpop.f32.mrf.mxu0
    %v2235 = vadd.f32 0.0, %v2234
    %2236 = vmatmul.f32.gmra.mxu0 %v2181
    %v2237 = vpop.f32.mrf.mxu0
    %v2238 = vadd.f32 0.0, %v2237
    %2239 = vmatmul.f32.gmra.mxu0 %v2182
    %v2240 = vpop.f32.mrf.mxu0
    %v2241 = vadd.f32 0.0, %v2240
    %2242 = vmatmul.f32.gmra.mxu0 %v2183
    %v2243 = vpop.f32.mrf.mxu0
    %v2244 = vadd.f32 0.0, %v2243
    %2245 = vmatmul.f32.gmra.mxu0 %v2184
    %v2246 = vpop.f32.mrf.mxu0
    %v2247 = vadd.f32 0.0, %v2246
    %2248 = vmatmul.f32.gmra.mxu0 %v2185
    %v2249 = vpop.f32.mrf.mxu0
    %v2250 = vadd.f32 0.0, %v2249
    %2251 = vmatmul.f32.gmra.mxu0 %v2186
    %v2252 = vpop.f32.mrf.mxu0
    %v2253 = vadd.f32 0.0, %v2252
    %2254 = vmatmul.f32.gmra.mxu0 %v2187
    %v2255 = vpop.f32.mrf.mxu0
    %v2256 = vadd.f32 0.0, %v2255
    %2257 = vmatmul.f32.gmra.mxu0 %v2188
    %v2258 = vpop.f32.mrf.mxu0
    %v2259 = vadd.f32 0.0, %v2258
    %2260 = vmatmul.f32.gmra.mxu0 %v2189
    %v2261 = vpop.f32.mrf.mxu0
    %v2262 = vadd.f32 0.0, %v2261
    %2263 = vmatmul.f32.gmra.mxu0 %v2190
    %v2264 = vpop.f32.mrf.mxu0
    %v2265 = vadd.f32 0.0, %v2264
    %2266 = vmatmul.f32.gmra.mxu0 %v2191
    %v2267 = vpop.f32.mrf.mxu0
    %v2268 = vadd.f32 0.0, %v2267
    %2269 = vmatmul.f32.gmra.mxu0 %v2192
    %v2270 = vpop.f32.mrf.mxu0
    %v2271 = vadd.f32 0.0, %v2270
    %2272 = vmatmul.f32.gmra.mxu0 %v2193
    %v2273 = vpop.f32.mrf.mxu0
    %v2274 = vadd.f32 0.0, %v2273
    %2275 = vdwg.mxu0
    %v2277 = vperm.slane %v1868, 0
    %v2279 = vadd.f32 %v2229, %v2277
    %v2280 = vadd.f32 %v2232, %v2277
    %v2281 = vadd.f32 %v2235, %v2277
    %v2282 = vadd.f32 %v2238, %v2277
    %v2283 = vadd.f32 %v2241, %v2277
    %v2284 = vadd.f32 %v2244, %v2277
    %v2285 = vadd.f32 %v2247, %v2277
    %v2286 = vadd.f32 %v2250, %v2277
    %v2287 = vadd.f32 %v2253, %v2277
    %v2288 = vadd.f32 %v2256, %v2277
    %v2289 = vadd.f32 %v2259, %v2277
    %v2290 = vadd.f32 %v2262, %v2277
    %v2291 = vadd.f32 %v2265, %v2277
    %v2292 = vadd.f32 %v2268, %v2277
    %v2293 = vadd.f32 %v2271, %v2277
    %v2294 = vadd.f32 %v2274, %v2277
    %v2295 = vadd.f32 %v2162, %v2279
    %v2296 = vadd.f32 %v2163, %v2280
    %v2297 = vadd.f32 %v2164, %v2281
    %v2298 = vadd.f32 %v2165, %v2282
    %v2299 = vadd.f32 %v2166, %v2283
    %v2300 = vadd.f32 %v2167, %v2284
    %v2301 = vadd.f32 %v2168, %v2285
    %v2302 = vadd.f32 %v2169, %v2286
    %v2303 = vadd.f32 %v2170, %v2287
    %v2304 = vadd.f32 %v2171, %v2288
    %v2305 = vadd.f32 %v2172, %v2289
    %v2306 = vadd.f32 %v2173, %v2290
    %v2307 = vadd.f32 %v2174, %v2291
    %v2308 = vadd.f32 %v2175, %v2292
    %v2309 = vadd.f32 %v2176, %v2293
    %v2310 = vadd.f32 %v2177, %v2294
    %v2311 = vmax.f32 %v2295, %v2297
    %v2312 = vmax.f32 %v2296, %v2298
    %v2313 = vmax.f32 %v2311, %v2299
    %v2314 = vmax.f32 %v2312, %v2300
    %v2315 = vmax.f32 %v2313, %v2301
    %v2316 = vmax.f32 %v2314, %v2302
    %v2317 = vmax.f32 %v2315, %v2316
    %v2318 = vrot.slane %v2317, 4
    %v2319 = vmax.f32 %v2317, %v2318
    %v2320 = vrot.slane %v2319, 2
    %v2321 = vmax.f32 %v2319, %v2320
    %v2322 = vrot.slane %v2321, 1
    %v2323 = vmax.f32 %v2321, %v2322
    %v2324 = vmax.f32 %v2303, %v2305
    %v2325 = vmax.f32 %v2304, %v2306
    %v2326 = vmax.f32 %v2324, %v2307
    %v2327 = vmax.f32 %v2325, %v2308
    %v2328 = vmax.f32 %v2326, %v2309
    %v2329 = vmax.f32 %v2327, %v2310
    %v2330 = vmax.f32 %v2328, %v2329
    %v2331 = vrot.slane %v2330, 4
    %v2332 = vmax.f32 %v2330, %v2331
    %v2333 = vrot.slane %v2332, 2
    %v2334 = vmax.f32 %v2332, %v2333
    %v2335 = vrot.slane %v2334, 1
    %v2336 = vmax.f32 %v2334, %v2335
    %s2337 = scalar_lea.vmem %s5, 4
    %v2338 = vld [vmem:[%s2337] sm:$0x1]
    %s2339 = scalar_lea.vmem %s7, 4
    %v2340 = vld [vmem:[%s2339] sm:$0x1]
    %v2341 = vmax.f32 %v2323, 0.0
    %v2342 = vmax.f32 %v2336, 0.0
    %s2343 = scalar_lea.vmem [#allocation7], 1024
    %v2344 = vld [vmem:[%s2343 + $0x80] sm:$0xff]
    %v2345 = vld [vmem:[%s2343 + $0x88] sm:$0xff]
    %v2346 = vld [vmem:[%s2343 + $0x90] sm:$0xff]
    %v2347 = vld [vmem:[%s2343 + $0x98] sm:$0xff]
    %v2348 = vld [vmem:[%s2343 + $0xa0] sm:$0xff]
    %v2349 = vld [vmem:[%s2343 + $0xa8] sm:$0xff]
    %v2350 = vld [vmem:[%s2343 + $0xb0] sm:$0xff]
    %v2351 = vld [vmem:[%s2343 + $0xb8] sm:$0xff]
    %v2352 = vld [vmem:[%s2343 + $0xc0] sm:$0xff]
    %v2353 = vld [vmem:[%s2343 + $0xc8] sm:$0xff]
    %v2354 = vld [vmem:[%s2343 + $0xd0] sm:$0xff]
    %v2355 = vld [vmem:[%s2343 + $0xd8] sm:$0xff]
    %v2356 = vld [vmem:[%s2343 + $0xe0] sm:$0xff]
    %v2357 = vld [vmem:[%s2343 + $0xe8] sm:$0xff]
    %v2358 = vld [vmem:[%s2343 + $0xf0] sm:$0xff]
    %v2359 = vld [vmem:[%s2343 + $0xf8] sm:$0xff]
    %v2361 = vperm.slane %v2338, 0
    %v2365 = vsel %vm948, %v2342, %v2341
    %2367 = vmatpush.msra.mxu0 %v2359
    %2368 = vmatpush.msra.mxu0 %v2358
    %2369 = vmatpush.msra.mxu0 %v2357
    %2370 = vmatpush.msra.mxu0 %v2356
    %2371 = vmatpush.msra.mxu0 %v2355
    %2372 = vmatpush.msra.mxu0 %v2354
    %2373 = vmatpush.msra.mxu0 %v2353
    %2374 = vmatpush.msra.mxu0 %v2352
    %2375 = vmatpush.msra.mxu0 %v2351
    %2376 = vmatpush.msra.mxu0 %v2350
    %2377 = vmatpush.msra.mxu0 %v2349
    %2378 = vmatpush.msra.mxu0 %v2348
    %2379 = vmatpush.msra.mxu0 %v2347
    %2380 = vmatpush.msra.mxu0 %v2346
    %2381 = vmatpush.msra.mxu0 %v2345
    %2382 = vmatpush.msra.mxu0 %v2344
    %2383 = vmatmul.f32.gmra.mxu0 %v2365
    %v2384 = vpop.f32.mrf.mxu0
    %v2385 = vadd.f32 %v2361, %v2384
    %2386 = vdwg.mxu0
    %s2387 = scalar_lea.vmem [#allocation10], 1024
    %v2388 = vld [vmem:[%s2387 + $0x80] sm:$0xff]
    %v2389 = vld [vmem:[%s2387 + $0x88] sm:$0xff]
    %v2390 = vld [vmem:[%s2387 + $0x90] sm:$0xff]
    %v2391 = vld [vmem:[%s2387 + $0x98] sm:$0xff]
    %v2392 = vld [vmem:[%s2387 + $0xa0] sm:$0xff]
    %v2393 = vld [vmem:[%s2387 + $0xa8] sm:$0xff]
    %v2394 = vld [vmem:[%s2387 + $0xb0] sm:$0xff]
    %v2395 = vld [vmem:[%s2387 + $0xb8] sm:$0xff]
    %v2396 = vld [vmem:[%s2387 + $0xc0] sm:$0xff]
    %v2397 = vld [vmem:[%s2387 + $0xc8] sm:$0xff]
    %v2398 = vld [vmem:[%s2387 + $0xd0] sm:$0xff]
    %v2399 = vld [vmem:[%s2387 + $0xd8] sm:$0xff]
    %v2400 = vld [vmem:[%s2387 + $0xe0] sm:$0xff]
    %v2401 = vld [vmem:[%s2387 + $0xe8] sm:$0xff]
    %v2402 = vld [vmem:[%s2387 + $0xf0] sm:$0xff]
    %v2403 = vld [vmem:[%s2387 + $0xf8] sm:$0xff]
    %v2406 = vsel %vm948, %v2336, %v2323
    %2408 = vmatpush.msra.mxu0 %v2403
    %2409 = vmatpush.msra.mxu0 %v2402
    %2410 = vmatpush.msra.mxu0 %v2401
    %2411 = vmatpush.msra.mxu0 %v2400
    %2412 = vmatpush.msra.mxu0 %v2399
    %2413 = vmatpush.msra.mxu0 %v2398
    %2414 = vmatpush.msra.mxu0 %v2397
    %2415 = vmatpush.msra.mxu0 %v2396
    %2416 = vmatpush.msra.mxu0 %v2395
    %2417 = vmatpush.msra.mxu0 %v2394
    %2418 = vmatpush.msra.mxu0 %v2393
    %2419 = vmatpush.msra.mxu0 %v2392
    %2420 = vmatpush.msra.mxu0 %v2391
    %2421 = vmatpush.msra.mxu0 %v2390
    %2422 = vmatpush.msra.mxu0 %v2389
    %2423 = vmatpush.msra.mxu0 %v2388
    %2424 = vmatmul.f32.gmra.mxu0 %v2406
    %v2425 = vpop.f32.mrf.mxu0
    %v2426 = vadd.f32 0.0, %v2425
    %2427 = vdwg.mxu0
    %v2428 = vmax.f32 %v2295, 0.0
    %v2429 = vmax.f32 %v2296, 0.0
    %v2430 = vmax.f32 %v2297, 0.0
    %v2431 = vmax.f32 %v2298, 0.0
    %v2432 = vmax.f32 %v2299, 0.0
    %v2433 = vmax.f32 %v2300, 0.0
    %v2434 = vmax.f32 %v2301, 0.0
    %v2435 = vmax.f32 %v2302, 0.0
    %v2436 = vmax.f32 %v2303, 0.0
    %v2437 = vmax.f32 %v2304, 0.0
    %v2438 = vmax.f32 %v2305, 0.0
    %v2439 = vmax.f32 %v2306, 0.0
    %v2440 = vmax.f32 %v2307, 0.0
    %v2441 = vmax.f32 %v2308, 0.0
    %v2442 = vmax.f32 %v2309, 0.0
    %v2443 = vmax.f32 %v2310, 0.0
    %v2444 = vld [vmem:[%s2343] sm:$0xff]
    %v2445 = vld [vmem:[%s2343 + $0x8] sm:$0xff]
    %v2446 = vld [vmem:[%s2343 + $0x10] sm:$0xff]
    %v2447 = vld [vmem:[%s2343 + $0x18] sm:$0xff]
    %v2448 = vld [vmem:[%s2343 + $0x20] sm:$0xff]
    %v2449 = vld [vmem:[%s2343 + $0x28] sm:$0xff]
    %v2450 = vld [vmem:[%s2343 + $0x30] sm:$0xff]
    %v2451 = vld [vmem:[%s2343 + $0x38] sm:$0xff]
    %v2452 = vld [vmem:[%s2343 + $0x40] sm:$0xff]
    %v2453 = vld [vmem:[%s2343 + $0x48] sm:$0xff]
    %v2454 = vld [vmem:[%s2343 + $0x50] sm:$0xff]
    %v2455 = vld [vmem:[%s2343 + $0x58] sm:$0xff]
    %v2456 = vld [vmem:[%s2343 + $0x60] sm:$0xff]
    %v2457 = vld [vmem:[%s2343 + $0x68] sm:$0xff]
    %v2458 = vld [vmem:[%s2343 + $0x70] sm:$0xff]
    %v2459 = vld [vmem:[%s2343 + $0x78] sm:$0xff]
    %2460 = vmatpush.msra.mxu0 %v2459
    %2461 = vmatpush.msra.mxu0 %v2458
    %2462 = vmatpush.msra.mxu0 %v2457
    %2463 = vmatpush.msra.mxu0 %v2456
    %2464 = vmatpush.msra.mxu0 %v2455
    %2465 = vmatpush.msra.mxu0 %v2454
    %2466 = vmatpush.msra.mxu0 %v2453
    %2467 = vmatpush.msra.mxu0 %v2452
    %2468 = vmatpush.msra.mxu0 %v2451
    %2469 = vmatpush.msra.mxu0 %v2450
    %2470 = vmatpush.msra.mxu0 %v2449
    %2471 = vmatpush.msra.mxu0 %v2448
    %2472 = vmatpush.msra.mxu0 %v2447
    %2473 = vmatpush.msra.mxu0 %v2446
    %2474 = vmatpush.msra.mxu0 %v2445
    %2475 = vmatpush.msra.mxu0 %v2444
    %2476 = vmatmul.f32.gmra.mxu0 %v2428
    %v2477 = vpop.f32.mrf.mxu0
    %v2478 = vadd.f32 0.0, %v2477
    %2479 = vmatmul.f32.gmra.mxu0 %v2429
    %v2480 = vpop.f32.mrf.mxu0
    %v2481 = vadd.f32 0.0, %v2480
    %2482 = vmatmul.f32.gmra.mxu0 %v2430
    %v2483 = vpop.f32.mrf.mxu0
    %v2484 = vadd.f32 0.0, %v2483
    %2485 = vmatmul.f32.gmra.mxu0 %v2431
    %v2486 = vpop.f32.mrf.mxu0
    %v2487 = vadd.f32 0.0, %v2486
    %2488 = vmatmul.f32.gmra.mxu0 %v2432
    %v2489 = vpop.f32.mrf.mxu0
    %v2490 = vadd.f32 0.0, %v2489
    %2491 = vmatmul.f32.gmra.mxu0 %v2433
    %v2492 = vpop.f32.mrf.mxu0
    %v2493 = vadd.f32 0.0, %v2492
    %2494 = vmatmul.f32.gmra.mxu0 %v2434
    %v2495 = vpop.f32.mrf.mxu0
    %v2496 = vadd.f32 0.0, %v2495
    %2497 = vmatmul.f32.gmra.mxu0 %v2435
    %v2498 = vpop.f32.mrf.mxu0
    %v2499 = vadd.f32 0.0, %v2498
    %2500 = vmatmul.f32.gmra.mxu0 %v2436
    %v2501 = vpop.f32.mrf.mxu0
    %v2502 = vadd.f32 0.0, %v2501
    %2503 = vmatmul.f32.gmra.mxu0 %v2437
    %v2504 = vpop.f32.mrf.mxu0
    %v2505 = vadd.f32 0.0, %v2504
    %2506 = vmatmul.f32.gmra.mxu0 %v2438
    %v2507 = vpop.f32.mrf.mxu0
    %v2508 = vadd.f32 0.0, %v2507
    %2509 = vmatmul.f32.gmra.mxu0 %v2439
    %v2510 = vpop.f32.mrf.mxu0
    %v2511 = vadd.f32 0.0, %v2510
    %2512 = vmatmul.f32.gmra.mxu0 %v2440
    %v2513 = vpop.f32.mrf.mxu0
    %v2514 = vadd.f32 0.0, %v2513
    %2515 = vmatmul.f32.gmra.mxu0 %v2441
    %v2516 = vpop.f32.mrf.mxu0
    %v2517 = vadd.f32 0.0, %v2516
    %2518 = vmatmul.f32.gmra.mxu0 %v2442
    %v2519 = vpop.f32.mrf.mxu0
    %v2520 = vadd.f32 0.0, %v2519
    %2521 = vmatmul.f32.gmra.mxu0 %v2443
    %v2522 = vpop.f32.mrf.mxu0
    %v2523 = vadd.f32 0.0, %v2522
    %2524 = vdwg.mxu0
    %v2526 = vrot.slane %v2385, 1
    %v2527 = vperm.slane %v2385, 0
    %v2528 = vperm.slane %v2526, 0
    %v2531 = vadd.f32 %v2478, %v2527
    %v2532 = vadd.f32 %v2481, %v2527
    %v2533 = vadd.f32 %v2484, %v2527
    %v2534 = vadd.f32 %v2487, %v2527
    %v2535 = vadd.f32 %v2490, %v2527
    %v2536 = vadd.f32 %v2493, %v2527
    %v2537 = vadd.f32 %v2496, %v2527
    %v2538 = vadd.f32 %v2499, %v2527
    %v2539 = vadd.f32 %v2502, %v2528
    %v2540 = vadd.f32 %v2505, %v2528
    %v2541 = vadd.f32 %v2508, %v2528
    %v2542 = vadd.f32 %v2511, %v2528
    %v2543 = vadd.f32 %v2514, %v2528
    %v2544 = vadd.f32 %v2517, %v2528
    %v2545 = vadd.f32 %v2520, %v2528
    %v2546 = vadd.f32 %v2523, %v2528
    %v2547 = vld [vmem:[%s2387] sm:$0xff]
    %v2548 = vld [vmem:[%s2387 + $0x8] sm:$0xff]
    %v2549 = vld [vmem:[%s2387 + $0x10] sm:$0xff]
    %v2550 = vld [vmem:[%s2387 + $0x18] sm:$0xff]
    %v2551 = vld [vmem:[%s2387 + $0x20] sm:$0xff]
    %v2552 = vld [vmem:[%s2387 + $0x28] sm:$0xff]
    %v2553 = vld [vmem:[%s2387 + $0x30] sm:$0xff]
    %v2554 = vld [vmem:[%s2387 + $0x38] sm:$0xff]
    %v2555 = vld [vmem:[%s2387 + $0x40] sm:$0xff]
    %v2556 = vld [vmem:[%s2387 + $0x48] sm:$0xff]
    %v2557 = vld [vmem:[%s2387 + $0x50] sm:$0xff]
    %v2558 = vld [vmem:[%s2387 + $0x58] sm:$0xff]
    %v2559 = vld [vmem:[%s2387 + $0x60] sm:$0xff]
    %v2560 = vld [vmem:[%s2387 + $0x68] sm:$0xff]
    %v2561 = vld [vmem:[%s2387 + $0x70] sm:$0xff]
    %v2562 = vld [vmem:[%s2387 + $0x78] sm:$0xff]
    %2563 = vmatpush.msra.mxu0 %v2562
    %2564 = vmatpush.msra.mxu0 %v2561
    %2565 = vmatpush.msra.mxu0 %v2560
    %2566 = vmatpush.msra.mxu0 %v2559
    %2567 = vmatpush.msra.mxu0 %v2558
    %2568 = vmatpush.msra.mxu0 %v2557
    %2569 = vmatpush.msra.mxu0 %v2556
    %2570 = vmatpush.msra.mxu0 %v2555
    %2571 = vmatpush.msra.mxu0 %v2554
    %2572 = vmatpush.msra.mxu0 %v2553
    %2573 = vmatpush.msra.mxu0 %v2552
    %2574 = vmatpush.msra.mxu0 %v2551
    %2575 = vmatpush.msra.mxu0 %v2550
    %2576 = vmatpush.msra.mxu0 %v2549
    %2577 = vmatpush.msra.mxu0 %v2548
    %2578 = vmatpush.msra.mxu0 %v2547
    %2579 = vmatmul.f32.gmra.mxu0 %v2295
    %v2580 = vpop.f32.mrf.mxu0
    %v2581 = vadd.f32 0.0, %v2580
    %2582 = vmatmul.f32.gmra.mxu0 %v2296
    %v2583 = vpop.f32.mrf.mxu0
    %v2584 = vadd.f32 0.0, %v2583
    %2585 = vmatmul.f32.gmra.mxu0 %v2297
    %v2586 = vpop.f32.mrf.mxu0
    %v2587 = vadd.f32 0.0, %v2586
    %2588 = vmatmul.f32.gmra.mxu0 %v2298
    %v2589 = vpop.f32.mrf.mxu0
    %v2590 = vadd.f32 0.0, %v2589
    %2591 = vmatmul.f32.gmra.mxu0 %v2299
    %v2592 = vpop.f32.mrf.mxu0
    %v2593 = vadd.f32 0.0, %v2592
    %2594 = vmatmul.f32.gmra.mxu0 %v2300
    %v2595 = vpop.f32.mrf.mxu0
    %v2596 = vadd.f32 0.0, %v2595
    %2597 = vmatmul.f32.gmra.mxu0 %v2301
    %v2598 = vpop.f32.mrf.mxu0
    %v2599 = vadd.f32 0.0, %v2598
    %2600 = vmatmul.f32.gmra.mxu0 %v2302
    %v2601 = vpop.f32.mrf.mxu0
    %v2602 = vadd.f32 0.0, %v2601
    %2603 = vmatmul.f32.gmra.mxu0 %v2303
    %v2604 = vpop.f32.mrf.mxu0
    %v2605 = vadd.f32 0.0, %v2604
    %2606 = vmatmul.f32.gmra.mxu0 %v2304
    %v2607 = vpop.f32.mrf.mxu0
    %v2608 = vadd.f32 0.0, %v2607
    %2609 = vmatmul.f32.gmra.mxu0 %v2305
    %v2610 = vpop.f32.mrf.mxu0
    %v2611 = vadd.f32 0.0, %v2610
    %2612 = vmatmul.f32.gmra.mxu0 %v2306
    %v2613 = vpop.f32.mrf.mxu0
    %v2614 = vadd.f32 0.0, %v2613
    %2615 = vmatmul.f32.gmra.mxu0 %v2307
    %v2616 = vpop.f32.mrf.mxu0
    %v2617 = vadd.f32 0.0, %v2616
    %2618 = vmatmul.f32.gmra.mxu0 %v2308
    %v2619 = vpop.f32.mrf.mxu0
    %v2620 = vadd.f32 0.0, %v2619
    %2621 = vmatmul.f32.gmra.mxu0 %v2309
    %v2622 = vpop.f32.mrf.mxu0
    %v2623 = vadd.f32 0.0, %v2622
    %2624 = vmatmul.f32.gmra.mxu0 %v2310
    %v2625 = vpop.f32.mrf.mxu0
    %v2626 = vadd.f32 0.0, %v2625
    %2627 = vdwg.mxu0
    %v2629 = vrot.slane %v2426, 1
    %v2630 = vperm.slane %v2426, 0
    %v2631 = vperm.slane %v2629, 0
    %v2634 = vadd.f32 %v2581, %v2630
    %v2635 = vadd.f32 %v2584, %v2630
    %v2636 = vadd.f32 %v2587, %v2630
    %v2637 = vadd.f32 %v2590, %v2630
    %v2638 = vadd.f32 %v2593, %v2630
    %v2639 = vadd.f32 %v2596, %v2630
    %v2640 = vadd.f32 %v2599, %v2630
    %v2641 = vadd.f32 %v2602, %v2630
    %v2642 = vadd.f32 %v2605, %v2631
    %v2643 = vadd.f32 %v2608, %v2631
    %v2644 = vadd.f32 %v2611, %v2631
    %v2645 = vadd.f32 %v2614, %v2631
    %v2646 = vadd.f32 %v2617, %v2631
    %v2647 = vadd.f32 %v2620, %v2631
    %v2648 = vadd.f32 %v2623, %v2631
    %v2649 = vadd.f32 %v2626, %v2631
    %v2650 = vmax.f32 %v2531, 0.0
    %v2651 = vmax.f32 %v2532, 0.0
    %v2652 = vmax.f32 %v2533, 0.0
    %v2653 = vmax.f32 %v2534, 0.0
    %v2654 = vmax.f32 %v2535, 0.0
    %v2655 = vmax.f32 %v2536, 0.0
    %v2656 = vmax.f32 %v2537, 0.0
    %v2657 = vmax.f32 %v2538, 0.0
    %v2658 = vmax.f32 %v2539, 0.0
    %v2659 = vmax.f32 %v2540, 0.0
    %v2660 = vmax.f32 %v2541, 0.0
    %v2661 = vmax.f32 %v2542, 0.0
    %v2662 = vmax.f32 %v2543, 0.0
    %v2663 = vmax.f32 %v2544, 0.0
    %v2664 = vmax.f32 %v2545, 0.0
    %v2665 = vmax.f32 %v2546, 0.0
    %s2666 = scalar_lea.vmem [#allocation8], 512
    %v2667 = vld [vmem:[%s2666] sm:$0xff]
    %v2668 = vld [vmem:[%s2666 + $0x8] sm:$0xff]
    %v2669 = vld [vmem:[%s2666 + $0x10] sm:$0xff]
    %v2670 = vld [vmem:[%s2666 + $0x18] sm:$0xff]
    %v2671 = vld [vmem:[%s2666 + $0x20] sm:$0xff]
    %v2672 = vld [vmem:[%s2666 + $0x28] sm:$0xff]
    %v2673 = vld [vmem:[%s2666 + $0x30] sm:$0xff]
    %v2674 = vld [vmem:[%s2666 + $0x38] sm:$0xff]
    %v2675 = vld [vmem:[%s2666 + $0x40] sm:$0xff]
    %v2676 = vld [vmem:[%s2666 + $0x48] sm:$0xff]
    %v2677 = vld [vmem:[%s2666 + $0x50] sm:$0xff]
    %v2678 = vld [vmem:[%s2666 + $0x58] sm:$0xff]
    %v2679 = vld [vmem:[%s2666 + $0x60] sm:$0xff]
    %v2680 = vld [vmem:[%s2666 + $0x68] sm:$0xff]
    %v2681 = vld [vmem:[%s2666 + $0x70] sm:$0xff]
    %v2682 = vld [vmem:[%s2666 + $0x78] sm:$0xff]
    %2683 = vmatpush.msra.mxu0 %v2682
    %2684 = vmatpush.msra.mxu0 %v2681
    %2685 = vmatpush.msra.mxu0 %v2680
    %2686 = vmatpush.msra.mxu0 %v2679
    %2687 = vmatpush.msra.mxu0 %v2678
    %2688 = vmatpush.msra.mxu0 %v2677
    %2689 = vmatpush.msra.mxu0 %v2676
    %2690 = vmatpush.msra.mxu0 %v2675
    %2691 = vmatpush.msra.mxu0 %v2674
    %2692 = vmatpush.msra.mxu0 %v2673
    %2693 = vmatpush.msra.mxu0 %v2672
    %2694 = vmatpush.msra.mxu0 %v2671
    %2695 = vmatpush.msra.mxu0 %v2670
    %2696 = vmatpush.msra.mxu0 %v2669
    %2697 = vmatpush.msra.mxu0 %v2668
    %2698 = vmatpush.msra.mxu0 %v2667
    %2699 = vmatmul.f32.gmra.mxu0 %v2650
    %v2700 = vpop.f32.mrf.mxu0
    %v2701 = vadd.f32 0.0, %v2700
    %2702 = vmatmul.f32.gmra.mxu0 %v2651
    %v2703 = vpop.f32.mrf.mxu0
    %v2704 = vadd.f32 0.0, %v2703
    %2705 = vmatmul.f32.gmra.mxu0 %v2652
    %v2706 = vpop.f32.mrf.mxu0
    %v2707 = vadd.f32 0.0, %v2706
    %2708 = vmatmul.f32.gmra.mxu0 %v2653
    %v2709 = vpop.f32.mrf.mxu0
    %v2710 = vadd.f32 0.0, %v2709
    %2711 = vmatmul.f32.gmra.mxu0 %v2654
    %v2712 = vpop.f32.mrf.mxu0
    %v2713 = vadd.f32 0.0, %v2712
    %2714 = vmatmul.f32.gmra.mxu0 %v2655
    %v2715 = vpop.f32.mrf.mxu0
    %v2716 = vadd.f32 0.0, %v2715
    %2717 = vmatmul.f32.gmra.mxu0 %v2656
    %v2718 = vpop.f32.mrf.mxu0
    %v2719 = vadd.f32 0.0, %v2718
    %2720 = vmatmul.f32.gmra.mxu0 %v2657
    %v2721 = vpop.f32.mrf.mxu0
    %v2722 = vadd.f32 0.0, %v2721
    %2723 = vmatmul.f32.gmra.mxu0 %v2658
    %v2724 = vpop.f32.mrf.mxu0
    %v2725 = vadd.f32 0.0, %v2724
    %2726 = vmatmul.f32.gmra.mxu0 %v2659
    %v2727 = vpop.f32.mrf.mxu0
    %v2728 = vadd.f32 0.0, %v2727
    %2729 = vmatmul.f32.gmra.mxu0 %v2660
    %v2730 = vpop.f32.mrf.mxu0
    %v2731 = vadd.f32 0.0, %v2730
    %2732 = vmatmul.f32.gmra.mxu0 %v2661
    %v2733 = vpop.f32.mrf.mxu0
    %v2734 = vadd.f32 0.0, %v2733
    %2735 = vmatmul.f32.gmra.mxu0 %v2662
    %v2736 = vpop.f32.mrf.mxu0
    %v2737 = vadd.f32 0.0, %v2736
    %2738 = vmatmul.f32.gmra.mxu0 %v2663
    %v2739 = vpop.f32.mrf.mxu0
    %v2740 = vadd.f32 0.0, %v2739
    %2741 = vmatmul.f32.gmra.mxu0 %v2664
    %v2742 = vpop.f32.mrf.mxu0
    %v2743 = vadd.f32 0.0, %v2742
    %2744 = vmatmul.f32.gmra.mxu0 %v2665
    %v2745 = vpop.f32.mrf.mxu0
    %v2746 = vadd.f32 0.0, %v2745
    %2747 = vdwg.mxu0
    %v2749 = vperm.slane %v2340, 0
    %v2751 = vadd.f32 %v2701, %v2749
    %v2752 = vadd.f32 %v2704, %v2749
    %v2753 = vadd.f32 %v2707, %v2749
    %v2754 = vadd.f32 %v2710, %v2749
    %v2755 = vadd.f32 %v2713, %v2749
    %v2756 = vadd.f32 %v2716, %v2749
    %v2757 = vadd.f32 %v2719, %v2749
    %v2758 = vadd.f32 %v2722, %v2749
    %v2759 = vadd.f32 %v2725, %v2749
    %v2760 = vadd.f32 %v2728, %v2749
    %v2761 = vadd.f32 %v2731, %v2749
    %v2762 = vadd.f32 %v2734, %v2749
    %v2763 = vadd.f32 %v2737, %v2749
    %v2764 = vadd.f32 %v2740, %v2749
    %v2765 = vadd.f32 %v2743, %v2749
    %v2766 = vadd.f32 %v2746, %v2749
    %v2767 = vadd.f32 %v2634, %v2751
    %v2768 = vadd.f32 %v2635, %v2752
    %v2769 = vadd.f32 %v2636, %v2753
    %v2770 = vadd.f32 %v2637, %v2754
    %v2771 = vadd.f32 %v2638, %v2755
    %v2772 = vadd.f32 %v2639, %v2756
    %v2773 = vadd.f32 %v2640, %v2757
    %v2774 = vadd.f32 %v2641, %v2758
    %v2775 = vadd.f32 %v2642, %v2759
    %v2776 = vadd.f32 %v2643, %v2760
    %v2777 = vadd.f32 %v2644, %v2761
    %v2778 = vadd.f32 %v2645, %v2762
    %v2779 = vadd.f32 %v2646, %v2763
    %v2780 = vadd.f32 %v2647, %v2764
    %v2781 = vadd.f32 %v2648, %v2765
    %v2782 = vadd.f32 %v2649, %v2766
    %v2783 = vmax.f32 %v2767, %v2769
    %v2784 = vmax.f32 %v2768, %v2770
    %v2785 = vmax.f32 %v2783, %v2771
    %v2786 = vmax.f32 %v2784, %v2772
    %v2787 = vmax.f32 %v2785, %v2773
    %v2788 = vmax.f32 %v2786, %v2774
    %v2789 = vmax.f32 %v2787, %v2788
    %v2790 = vrot.slane %v2789, 4
    %v2791 = vmax.f32 %v2789, %v2790
    %v2792 = vrot.slane %v2791, 2
    %v2793 = vmax.f32 %v2791, %v2792
    %v2794 = vrot.slane %v2793, 1
    %v2795 = vmax.f32 %v2793, %v2794
    %v2796 = vmax.f32 %v2775, %v2777
    %v2797 = vmax.f32 %v2776, %v2778
    %v2798 = vmax.f32 %v2796, %v2779
    %v2799 = vmax.f32 %v2797, %v2780
    %v2800 = vmax.f32 %v2798, %v2781
    %v2801 = vmax.f32 %v2799, %v2782
    %v2802 = vmax.f32 %v2800, %v2801
    %v2803 = vrot.slane %v2802, 4
    %v2804 = vmax.f32 %v2802, %v2803
    %v2805 = vrot.slane %v2804, 2
    %v2806 = vmax.f32 %v2804, %v2805
    %v2807 = vrot.slane %v2806, 1
    %v2808 = vmax.f32 %v2806, %v2807
    %v2809 = vmax.f32 %v2795, 0.0
    %v2810 = vmax.f32 %v2808, 0.0
    %v2811 = vld [vmem:[%s9] sm:$0xff]
    %v2812 = vld [vmem:[%s9 + $0x8] sm:$0xff]
    %v2813 = vld [vmem:[%s9 + $0x10] sm:$0xff]
    %v2814 = vld [vmem:[%s9 + $0x18] sm:$0xff]
    %v2815 = vld [vmem:[%s9 + $0x20] sm:$0xff]
    %v2816 = vld [vmem:[%s9 + $0x28] sm:$0xff]
    %v2817 = vld [vmem:[%s9 + $0x30] sm:$0xff]
    %v2818 = vld [vmem:[%s9 + $0x38] sm:$0xff]
    %v2819 = vld [vmem:[%s9 + $0x40] sm:$0xff]
    %v2820 = vld [vmem:[%s9 + $0x48] sm:$0xff]
    %v2821 = vld [vmem:[%s9 + $0x50] sm:$0xff]
    %v2822 = vld [vmem:[%s9 + $0x58] sm:$0xff]
    %v2823 = vld [vmem:[%s9 + $0x60] sm:$0xff]
    %v2824 = vld [vmem:[%s9 + $0x68] sm:$0xff]
    %v2825 = vld [vmem:[%s9 + $0x70] sm:$0xff]
    %v2826 = vld [vmem:[%s9 + $0x78] sm:$0xff]
    %v2827 = vld [vmem:[%s10] sm:$0x1]
    %v2829 = vperm.slane %v2827, 0
    %v2833 = vsel %vm948, %v2810, %v2809
    %2835 = vmatpush.msra.mxu0 %v2826
    %2836 = vmatpush.msra.mxu0 %v2825
    %2837 = vmatpush.msra.mxu0 %v2824
    %2838 = vmatpush.msra.mxu0 %v2823
    %2839 = vmatpush.msra.mxu0 %v2822
    %2840 = vmatpush.msra.mxu0 %v2821
    %2841 = vmatpush.msra.mxu0 %v2820
    %2842 = vmatpush.msra.mxu0 %v2819
    %2843 = vmatpush.msra.mxu0 %v2818
    %2844 = vmatpush.msra.mxu0 %v2817
    %2845 = vmatpush.msra.mxu0 %v2816
    %2846 = vmatpush.msra.mxu0 %v2815
    %2847 = vmatpush.msra.mxu0 %v2814
    %2848 = vmatpush.msra.mxu0 %v2813
    %2849 = vmatpush.msra.mxu0 %v2812
    %2850 = vmatpush.msra.mxu0 %v2811
    %2851 = vmatmul.f32.gmra.mxu0 %v2833
    %v2852 = vpop.f32.mrf.mxu0
    %v2853 = vadd.f32 %v2829, %v2852
    %2854 = vdwg.mxu0
    %v2856 = vrot.slane %v2853, 1
    %2858 = vst [vmem:[#allocation11] sm:$0x1] %v2853
    %2859 = vst [vmem:[#allocation11 + $0x1] sm:$0x1] %v2856
    // Predicated region
    $region66: #{tpu_custom_call.1} parent=1 // pred_check
      _
    $region67: #{tpu_custom_call.1} parent=1 // pred_check_branch
      %2861 = sbr.rel (0) target = $region69
    $region68: #{tpu_custom_call.1} parent=1 // pred_region
      %2863 = vsyncadd [#allocation4], 0
      %s2864 = sshll.u32 [#allocation11], 4
      %s2865 = int_to_ptr.vmem [resolvable:$true] %s2864
      %s2866 = sshll.u32 %s11, 4
      %s2867 = int_to_ptr.hbm [resolvable:$true] %s2866
      %2872 = dma.vmem_to_hbm [thread:$0]  %s2865, 32, %s2867, [#allocation4], 16, 16, 1
    $region69: #{tpu_custom_call.1} parent=1 // pred_fallthru
      _
    // Predicated region
    $region70: #{tpu_custom_call.1} parent=1 // pred_check
      _
    $region71: #{tpu_custom_call.1} parent=1 // pred_check_branch
      %2874 = sbr.rel (0) target = $region73
    $region72: #{tpu_custom_call.1} parent=1 // pred_region
      %2876 = dma.done [#allocation4], 32
    $region73: #{tpu_custom_call.1} parent=1 // pred_fallthru
      _
    %2877 = vsyncpa [#allocation3], 1
    %2878 = vsyncpa [#allocation6], 1
    %2879 = vsyncpa [#allocation9], 1
    %2880 = vsyncpa [#allocation4], 1

</llo_original>
